<compile_context>
chip_gen: v6e
topology: v6e:2x2x1
jax: 0.10.0
libtpu: 0.0.40
codegen_flags: <defaults>
</compile_context>

<pallas_src>
import jax
import jax.numpy as jnp
from jax.experimental import pallas as pl
from jax.experimental.pallas import tpu as pltpu

D_MODEL = 64
NHEAD = 4
NUM_LAYERS = 3
DIM_FF = 128
REG_HID = 32
LN_EPS = 1e-5
MAX_POS = 500

# v6e/v7x option: tanh-GELU moves most GELU VALU work to the (idle) EUP slot,
# at ~1e-3 deviation from torch's exact erf GELU.  Off by default for fidelity.
USE_TANH_GELU = False

# ---- f32 parameter-slab row layout (one (1, 3*D) row per parameter vector) ----
ROW_B_IN = 0
ROW_QKV_B = 1                              # NUM_LAYERS rows
ROW_OUT_B = ROW_QKV_B + NUM_LAYERS         # NUM_LAYERS rows
ROW_ALN_W = ROW_OUT_B + NUM_LAYERS         # NUM_LAYERS rows
ROW_ALN_B = ROW_ALN_W + NUM_LAYERS         # NUM_LAYERS rows
ROW_FF_B1 = ROW_ALN_B + NUM_LAYERS
ROW_FF_B2 = ROW_FF_B1 + 1
ROW_LN_W = ROW_FF_B2 + 1
ROW_LN_B = ROW_LN_W + 1
ROW_REG_B1 = ROW_LN_B + 1
ROW_REG_W2 = ROW_REG_B1 + 1
ROW_REG_B2 = ROW_REG_W2 + 1
N_PROWS = ROW_REG_B2 + 1
P_W = 3 * D_MODEL


def _erf(x):
    # TODO(synk): lax.erf has no guaranteed Mosaic lowering; use the
    # Abramowitz-Stegun 7.1.26 polynomial (<=1.5e-7 abs error, ~f32 precision).
    a1, a2, a3, a4, a5 = 0.254829592, -0.284496736, 1.421413741, -1.453152027, 1.061405429
    p = 0.3275911
    ax = jnp.abs(x)
    t = 1.0 / (1.0 + p * ax)
    poly = ((((a5 * t + a4) * t + a3) * t + a2) * t + a1) * t
    y = 1.0 - poly * jnp.exp(-ax * ax)
    return jnp.where(x >= 0, y, -y)


def _gelu(x):
    if USE_TANH_GELU:
        return 0.5 * x * (1.0 + jnp.tanh(0.7978845608028654 * (x + 0.044715 * x * x * x)))
    # exact (erf-based) GELU, matching torch.nn.GELU() default
    return 0.5 * x * (1.0 + _erf(x * 0.7071067811865476))


def _layer_norm(v, w, b):
    mean = jnp.mean(v, axis=-1, keepdims=True)
    var = jnp.mean((v - mean) ** 2, axis=-1, keepdims=True)
    return (v - mean) * jax.lax.rsqrt(var + LN_EPS) * w + b


def _mm(a_f32, w_bf16):
    # MXU matmul: bf16 operands, f32 accumulation. Weights arrive pre-cast.
    return jnp.dot(a_f32.astype(jnp.bfloat16), w_bf16,
                   preferred_element_type=jnp.float32)


def transformer_kernel(x_ref, pos_ref, w_in_ref, attn_w_ref, wslab_ref, pslab_ref,
                       out_ref):
    x = x_ref[...]                                   # (Bt, S, F) f32
    Bt, S, F = x.shape
    D, H, DF, RH = D_MODEL, NHEAD, DIM_FF, REG_HID
    Dh = D // H
    N = Bt * S

    def prow(idx, width):
        # (1, width) f32 slice of the packed bias/LN/small-weight slab
        return pslab_ref[idx][:, :width]

    # Hoist loop-invariant shared weights/biases above the unrolled layer loop.
    pos = pos_ref[...]                               # (S, D) f32
    b_in = prow(ROW_B_IN, D)
    ff_w1 = wslab_ref[0:D, :]                        # (D, DF)  bf16
    ff_w2 = wslab_ref[D:D + DF, 0:D]                 # (DF, D)  bf16
    reg_w1 = wslab_ref[D + DF:2 * D + DF, 0:RH]      # (D, RH)  bf16
    ff_b1 = prow(ROW_FF_B1, DF)
    ff_b2 = prow(ROW_FF_B2, D)
    ln_w = prow(ROW_LN_W, D)
    ln_b = prow(ROW_LN_B, D)
    reg_b1 = prow(ROW_REG_B1, RH)
    reg_w2 = prow(ROW_REG_W2, RH)                    # torch (1,32) weight row, f32
    reg_b2 = prow(ROW_REG_B2, 1)

    # input_linear (weights are (in,out)) + positional embedding; dropout = identity.
    h = _mm(x.reshape(N, F), w_in_ref[...]) + b_in
    h = (h.reshape(Bt, S, D) + pos).reshape(N, D)

    for l in range(NUM_LAYERS):
        aw = attn_w_ref[l]                           # (2D, 3D) bf16 per-layer slab
        qkv_w = aw[0:D, :]                           # (D, 3D), 1/sqrt(Dh) folded into Q
        out_w = aw[D:2 * D, 0:D]                     # (D, D)
        qkv_b = prow(ROW_QKV_B + l, 3 * D)           # (1, 3D) f32, Q portion pre-scaled
        out_b = prow(ROW_OUT_B + l, D)
        aln_w = prow(ROW_ALN_W + l, D)
        aln_b = prow(ROW_ALN_B + l, D)

        # Fused QKV projection: one (N,64)x(64,192) MXU matmul per layer.
        qkv = (_mm(h, qkv_w) + qkv_b).reshape(Bt, S, 3 * D)

        # TODO(synk): heads stay in a Python loop (not one 'bhqd,bhkd->bhqk' einsum)
        # because the (B,S,H,Dh)->(B,H,S,Dh) relayout / 4-D batched dot_general has
        # no guaranteed Mosaic lowering; only the tiny (S,S) matmuls are per-head.
        scores = []
        for hh in range(H):
            qh = qkv[:, :, hh * Dh:(hh + 1) * Dh]
            kh = qkv[:, :, D + hh * Dh:D + (hh + 1) * Dh]
            scores.append(jnp.einsum(
                'bqd,bkd->bqk', qh.astype(jnp.bfloat16), kh.astype(jnp.bfloat16),
                preferred_element_type=jnp.float32))
        # ONE batched softmax over all heads: (Bt, H*S, S).
        s_all = jnp.concatenate(scores, axis=1)
        s_all = s_all - jnp.max(s_all, axis=-1, keepdims=True)
        e = jnp.exp(s_all)
        p_all = e * pl.reciprocal(jnp.sum(e, axis=-1, keepdims=True), approx=True)

        ctx_heads = []
        for hh in range(H):
            ph = p_all[:, hh * S:(hh + 1) * S, :]
            vh = qkv[:, :, 2 * D + hh * Dh:2 * D + (hh + 1) * Dh]
            ctx_heads.append(jnp.einsum(
                'bqk,bkd->bqd', ph.astype(jnp.bfloat16), vh.astype(jnp.bfloat16),
                preferred_element_type=jnp.float32))
        # Single concat(heads) @ W_out (contraction-64) instead of H partial matmuls.
        ctx = jnp.concatenate(ctx_heads, axis=-1).reshape(N, D)
        attn = _mm(ctx, out_w) + out_b

        # SelfAttention block: LayerNorm(x + attn_output)   (per-layer LN)
        h = _layer_norm(h + attn, aln_w, aln_b)

        if l == NUM_LAYERS - 1:
            # Only the last timestep feeds the regressor, and FF/residual/LN are
            # per-token: shrink to (Bt, D) rows before the heaviest block.
            h = h.reshape(Bt, S, D)[:, S - 1, :]

        # shared feedforward: Linear -> GELU -> (Dropout) -> Linear -> (Dropout)
        ff = _mm(h, ff_w1) + ff_b1
        ff = _gelu(ff)
        ff = _mm(ff, ff_w2) + ff_b2
        # residual + shared outer layer norm
        h = _layer_norm(h + ff, ln_w, ln_b)

    # regressor: Linear(64,32) -> GELU -> Linear(32,1); second Linear kept in f32
    # as a multiply + lane-reduce (negligible FLOPs, better fidelity).
    r = _gelu(_mm(h, reg_w1) + reg_b1)               # (Bt, RH)
    out = jnp.sum(r * reg_w2, axis=-1, keepdims=True) + reg_b2   # (Bt, 1) f32
    out_ref[...] = out.reshape(1, Bt, 1)


def _prepare_params(params):
    """PyTorch-layout params -> packed kernel slabs: Linear weights transposed to
    (in, out) and cast to bf16 for the MXU; 1/sqrt(Dh) folded into the Q projection;
    biases/LN/small weights packed into one f32 row slab."""
    D, DF, RH, L = D_MODEL, DIM_FF, REG_HID, NUM_LAYERS
    scale = 1.0 / float(D // NHEAD) ** 0.5

    # --- per-layer attention weight slab: rows [0,D)=qkv_w (D,3D), rows [D,2D)=out_w
    qkv_w = jnp.transpose(params['attn_in_w'], (0, 2, 1))              # (L, D, 3D)
    qkv_w = qkv_w.at[:, :, :D].multiply(scale)
    out_w = jnp.transpose(params['attn_out_w'], (0, 2, 1))             # (L, D, D)
    out_w = jnp.pad(out_w, ((0, 0), (0, 0), (0, 2 * D)))               # (L, D, 3D)
    attn_w = jnp.concatenate([qkv_w, out_w], axis=1).astype(jnp.bfloat16)  # (L, 2D, 3D)

    # --- shared bf16 weight slab (rows: ff_w1 | ff_w2 | reg_w1), lane width DF
    ff_w1 = jnp.transpose(params['ff_w1'])                             # (D, DF)
    ff_w2 = jnp.pad(jnp.transpose(params['ff_w2']), ((0, 0), (0, DF - D)))      # (DF, DF)
    reg_w1 = jnp.pad(jnp.transpose(params['reg_w1']), ((0, 0), (0, DF - RH)))   # (D, DF)
    wslab = jnp.concatenate([ff_w1, ff_w2, reg_w1], axis=0).astype(jnp.bfloat16)

    # --- f32 bias / LN / small-weight slab: one (1, 3D) row per parameter vector
    def row(v):
        v = jnp.reshape(v, (1, -1)).astype(jnp.float32)
        return jnp.pad(v, ((0, 0), (0, P_W - v.shape[1])))

    qkv_b = params['attn_in_b'].at[:, :, :D].multiply(scale)           # scale folded into Q

    rows = [None] * N_PROWS
    rows[ROW_B_IN] = row(params['b_in'])
    for l in range(L):
        rows[ROW_QKV_B + l] = row(qkv_b[l])
        rows[ROW_OUT_B + l] = row(params['attn_out_b'][l])
        rows[ROW_ALN_W + l] = row(params['attn_ln_w'][l])
        rows[ROW_ALN_B + l] = row(params['attn_ln_b'][l])
    rows[ROW_FF_B1] = row(params['ff_b1'])
    rows[ROW_FF_B2] = row(params['ff_b2'])
    rows[ROW_LN_W] = row(params['ln_w'])
    rows[ROW_LN_B] = row(params['ln_b'])
    rows[ROW_REG_B1] = row(params['reg_b1'])
    rows[ROW_REG_W2] = row(params['reg_w2'])     # (1, RH) torch layout used directly
    rows[ROW_REG_B2] = row(params['reg_b2'])
    pslab = jnp.concatenate(rows, axis=0).reshape(N_PROWS, 1, P_W)

    return dict(
        w_in=jnp.transpose(params['w_in']).astype(jnp.bfloat16),       # (F, D)
        attn_w=attn_w, wslab=wslab, pslab=pslab,
    )


def _vmem_limit_bytes():
    # ~3/4 of physical VMEM: 96 MiB on 128 MiB parts (v5e/v6e), 48 MiB on v7x.
    try:
        phys = int(pltpu.get_tpu_info().vmem_capacity_bytes)
    except Exception:
        phys = 64 << 20
    return int(min(96 << 20, (phys * 3) // 4))


def _pick_b_tile(B, S, vmem_limit):
    # Rough f32 live-activation bytes per batch row: qkv + h/ctx/attn + two
    # (H*S, S) score/prob tensors + ff.  Keep well under ~1/3 of the VMEM budget.
    per_row = 4 * S * (7 * D_MODEL + DIM_FF + 2 * NHEAD * S)
    cap = max(1, min(B, (vmem_limit // 3) // max(per_row, 1), 64))
    bt = 1
    for d in range(1, min(B, cap) + 1):
        if B % d == 0:
            bt = d
    return bt


def enhanced_transformer_regressor(src, params, b_tile=None):
    B, S, F = src.shape
    assert S <= MAX_POS, f"sequence length {S} exceeds positional table size {MAX_POS}"
    vmem_limit = _vmem_limit_bytes()
    if b_tile is None:
        b_tile = _pick_b_tile(B, S, vmem_limit)
    assert B % b_tile == 0, "batch must be divisible by b_tile"
    G = B // b_tile

    kp = _prepare_params(params)
    pos = params['pos_emb'][:S]

    args = (src.astype(jnp.float32), pos, kp['w_in'], kp['attn_w'], kp['wslab'],
            kp['pslab'])

    def rep_spec(a):
        # weights: full array resident in VMEM, same block for every grid step
        nd = a.ndim
        return pl.BlockSpec(a.shape, lambda g: (0,) * nd)

    in_specs = [pl.BlockSpec((b_tile, S, F), lambda g: (g, 0, 0))]      # src: batch tile
    in_specs += [rep_spec(a) for a in args[1:]]

    # Advisory cost estimate (MXU structurally under-filled at D=64; kernel is
    # overhead/VPU-bound, so this mainly helps XLA's surrounding schedule).
    N = B * S
    D, DF, RH, L, H = D_MODEL, DIM_FF, REG_HID, NUM_LAYERS, NHEAD
    flops = (2 * N * F * D
             + L * N * (8 * D * D + 4 * S * D)
             + ((L - 1) * N + B) * 4 * D * DF
             + B * 2 * D * RH)
    transcend = L * N * H * S + ((L - 1) * N + B) * DF + B * RH
    bytes_acc = sum(int(a.size) * a.dtype.itemsize for a in args) + B * 4

    # TODO(synk): on v7x, if an xprof trace shows one idle TensorCore, switch the
    # batch axis to pltpu.CORE_PARALLEL (keeping G a multiple of 2).
    out = pl.pallas_call(
        transformer_kernel,
        out_shape=jax.ShapeDtypeStruct((G, b_tile, 1), jnp.float32),
        grid=(G,),
        in_specs=in_specs,
        out_specs=pl.BlockSpec((1, b_tile, 1), lambda g: (g, 0, 0)),
        compiler_params=pltpu.CompilerParams(
            dimension_semantics=("parallel",),
            vmem_limit_bytes=vmem_limit),
        cost_estimate=pl.CostEstimate(
            flops=int(flops), transcendentals=int(transcend),
            bytes_accessed=int(bytes_acc)),
    )(*args)
    return out.reshape(B)                             # out.squeeze(1) -> (B,)


def init_params(key, feature_size):
    # PyTorch Linear convention: weight is (out_features, in_features).
    D, L, F, DF = D_MODEL, NUM_LAYERS, feature_size, DIM_FF
    ks = jax.random.split(key, 12)

    def nrm(k, shape, scale=0.05):
        return scale * jax.random.normal(k, shape, dtype=jnp.float32)

    return dict(
        w_in=nrm(ks[0], (D, F)),
        b_in=jnp.zeros((1, D), jnp.float32),
        pos_emb=nrm(ks[1], (MAX_POS, D)),
        attn_in_w=nrm(ks[2], (L, 3 * D, D)),
        attn_in_b=nrm(ks[3], (L, 1, 3 * D), 0.01),
        attn_out_w=nrm(ks[4], (L, D, D)),
        attn_out_b=nrm(ks[5], (L, 1, D), 0.01),
        attn_ln_w=jnp.ones((L, 1, D), jnp.float32),
        attn_ln_b=jnp.zeros((L, 1, D), jnp.float32),
        ff_w1=nrm(ks[6], (DF, D)),
        ff_b1=nrm(ks[7], (1, DF), 0.01),
        ff_w2=nrm(ks[8], (D, DF)),
        ff_b2=nrm(ks[9], (1, D), 0.01),
        ln_w=jnp.ones((1, D), jnp.float32),
        ln_b=jnp.zeros((1, D), jnp.float32),
        reg_w1=nrm(ks[10], (REG_HID, D)),
        reg_b1=jnp.zeros((1, REG_HID), jnp.float32),
        reg_w2=nrm(ks[11], (1, REG_HID)),
        reg_b2=jnp.zeros((1, 1), jnp.float32),
    )


if __name__ == "__main__":
    key = jax.random.PRNGKey(0)
    k_x, k_p = jax.random.split(key)
    B, S, F = 4, 8, 16
    src = jax.random.normal(k_x, (B, S, F), dtype=jnp.float32)
    params = init_params(k_p, F)
    # explicit b_tile=2 exercises the batch grid (G=2, "parallel" -> megacore-shardable)
    out = enhanced_transformer_regressor(src, params, b_tile=2)
    jax.block_until_ready(out)
    assert out.shape == (B,) and out.dtype == jnp.float32
    assert bool(jnp.all(jnp.isfinite(out)))
    print("KERNEL_OK")
</pallas_src>

<mosaic_0001>
module attributes {stable_mosaic.version = 11 : i64} {
  func.func @transformer_kernel(%arg0: i32, %arg1: memref<2x8x16xf32, #tpu.memory_space<vmem>>, %arg2: memref<8x64xf32, #tpu.memory_space<vmem>>, %arg3: memref<16x64xbf16, #tpu.memory_space<vmem>>, %arg4: memref<3x128x192xbf16, #tpu.memory_space<vmem>>, %arg5: memref<256x128xbf16, #tpu.memory_space<vmem>>, %arg6: memref<20x1x192xf32, #tpu.memory_space<vmem>>, %arg7: memref<1x2x1xf32, #tpu.memory_space<vmem>>) attributes {dimension_semantics = [#tpu.dimension_semantics<parallel>], iteration_bounds = array<i64: 2>, scalar_prefetch = 0 : i64, scratch_operands = 0 : i64, tpu.core_type = #tpu.core_type<tc>, window_params = [{transform_indices = @transform_0, window_bounds = array<i64: 2, 8, 16>}, {pipeline_mode = #tpu.pipeline_mode<synchronous>, transform_indices = @transform_1, window_bounds = array<i64: 8, 64>}, {pipeline_mode = #tpu.pipeline_mode<synchronous>, transform_indices = @transform_2, window_bounds = array<i64: 16, 64>}, {pipeline_mode = #tpu.pipeline_mode<synchronous>, transform_indices = @transform_3, window_bounds = array<i64: 3, 128, 192>}, {pipeline_mode = #tpu.pipeline_mode<synchronous>, transform_indices = @transform_4, window_bounds = array<i64: 256, 128>}, {pipeline_mode = #tpu.pipeline_mode<synchronous>, transform_indices = @transform_5, window_bounds = array<i64: 20, 1, 192>}, {transform_indices = @transform_6, window_bounds = array<i64: 1, 2, 1>}]} {
    %c0 = arith.constant 0 : index
    %c0_0 = arith.constant 0 : index
    %c0_1 = arith.constant 0 : index
    %0 = vector.load %arg1[%c0, %c0_0, %c0_1] : memref<2x8x16xf32, #tpu.memory_space<vmem>>, vector<2x8x16xf32>
    %c0_2 = arith.constant 0 : index
    %c0_3 = arith.constant 0 : index
    %1 = vector.load %arg2[%c0_2, %c0_3] : memref<8x64xf32, #tpu.memory_space<vmem>>, vector<8x64xf32>
    %c0_4 = arith.constant 0 : index
    %c0_5 = arith.constant 0 : index
    %c0_6 = arith.constant 0 : index
    %2 = vector.load %arg6[%c0_4, %c0_5, %c0_6] : memref<20x1x192xf32, #tpu.memory_space<vmem>>, vector<1x1x192xf32>
    %3 = vector.shape_cast %2 : vector<1x1x192xf32> to vector<1x192xf32>
    %4 = vector.extract_strided_slice %3 {offsets = [0, 0], sizes = [1, 64], strides = [1, 1]} : vector<1x192xf32> to vector<1x64xf32>
    %c0_7 = arith.constant 0 : index
    %c0_8 = arith.constant 0 : index
    %5 = vector.load %arg5[%c0_7, %c0_8] : memref<256x128xbf16, #tpu.memory_space<vmem>>, vector<64x128xbf16>
    %c64 = arith.constant 64 : index
    %c0_9 = arith.constant 0 : index
    %6 = vector.load %arg5[%c64, %c0_9] : memref<256x128xbf16, #tpu.memory_space<vmem>>, vector<128x64xbf16>
    %c192 = arith.constant 192 : index
    %c0_10 = arith.constant 0 : index
    %7 = vector.load %arg5[%c192, %c0_10] : memref<256x128xbf16, #tpu.memory_space<vmem>>, vector<64x32xbf16>
    %c13 = arith.constant 13 : index
    %c0_11 = arith.constant 0 : index
    %c0_12 = arith.constant 0 : index
    %8 = vector.load %arg6[%c13, %c0_11, %c0_12] : memref<20x1x192xf32, #tpu.memory_space<vmem>>, vector<1x1x192xf32>
    %9 = vector.shape_cast %8 : vector<1x1x192xf32> to vector<1x192xf32>
    %10 = vector.extract_strided_slice %9 {offsets = [0, 0], sizes = [1, 128], strides = [1, 1]} : vector<1x192xf32> to vector<1x128xf32>
    %c14 = arith.constant 14 : index
    %c0_13 = arith.constant 0 : index
    %c0_14 = arith.constant 0 : index
    %11 = vector.load %arg6[%c14, %c0_13, %c0_14] : memref<20x1x192xf32, #tpu.memory_space<vmem>>, vector<1x1x192xf32>
    %12 = vector.shape_cast %11 : vector<1x1x192xf32> to vector<1x192xf32>
    %13 = vector.extract_strided_slice %12 {offsets = [0, 0], sizes = [1, 64], strides = [1, 1]} : vector<1x192xf32> to vector<1x64xf32>
    %c15 = arith.constant 15 : index
    %c0_15 = arith.constant 0 : index
    %c0_16 = arith.constant 0 : index
    %14 = vector.load %arg6[%c15, %c0_15, %c0_16] : memref<20x1x192xf32, #tpu.memory_space<vmem>>, vector<1x1x192xf32>
    %15 = vector.shape_cast %14 : vector<1x1x192xf32> to vector<1x192xf32>
    %16 = vector.extract_strided_slice %15 {offsets = [0, 0], sizes = [1, 64], strides = [1, 1]} : vector<1x192xf32> to vector<1x64xf32>
    %c16 = arith.constant 16 : index
    %c0_17 = arith.constant 0 : index
    %c0_18 = arith.constant 0 : index
    %17 = vector.load %arg6[%c16, %c0_17, %c0_18] : memref<20x1x192xf32, #tpu.memory_space<vmem>>, vector<1x1x192xf32>
    %18 = vector.shape_cast %17 : vector<1x1x192xf32> to vector<1x192xf32>
    %19 = vector.extract_strided_slice %18 {offsets = [0, 0], sizes = [1, 64], strides = [1, 1]} : vector<1x192xf32> to vector<1x64xf32>
    %c17 = arith.constant 17 : index
    %c0_19 = arith.constant 0 : index
    %c0_20 = arith.constant 0 : index
    %20 = vector.load %arg6[%c17, %c0_19, %c0_20] : memref<20x1x192xf32, #tpu.memory_space<vmem>>, vector<1x1x192xf32>
    %21 = vector.shape_cast %20 : vector<1x1x192xf32> to vector<1x192xf32>
    %22 = vector.extract_strided_slice %21 {offsets = [0, 0], sizes = [1, 32], strides = [1, 1]} : vector<1x192xf32> to vector<1x32xf32>
    %c18 = arith.constant 18 : index
    %c0_21 = arith.constant 0 : index
    %c0_22 = arith.constant 0 : index
    %23 = vector.load %arg6[%c18, %c0_21, %c0_22] : memref<20x1x192xf32, #tpu.memory_space<vmem>>, vector<1x1x192xf32>
    %24 = vector.shape_cast %23 : vector<1x1x192xf32> to vector<1x192xf32>
    %25 = vector.extract_strided_slice %24 {offsets = [0, 0], sizes = [1, 32], strides = [1, 1]} : vector<1x192xf32> to vector<1x32xf32>
    %c19 = arith.constant 19 : index
    %c0_23 = arith.constant 0 : index
    %c0_24 = arith.constant 0 : index
    %26 = vector.load %arg6[%c19, %c0_23, %c0_24] : memref<20x1x192xf32, #tpu.memory_space<vmem>>, vector<1x1x192xf32>
    %27 = vector.shape_cast %26 : vector<1x1x192xf32> to vector<1x192xf32>
    %28 = vector.extract_strided_slice %27 {offsets = [0, 0], sizes = [1, 1], strides = [1, 1]} : vector<1x192xf32> to vector<1x1xf32>
    %29 = vector.shape_cast %0 : vector<2x8x16xf32> to vector<16x16xf32>
    %c0_25 = arith.constant 0 : index
    %c0_26 = arith.constant 0 : index
    %30 = vector.load %arg3[%c0_25, %c0_26] : memref<16x64xbf16, #tpu.memory_space<vmem>>, vector<16x64xbf16>
    %31 = arith.truncf %29 : vector<16x16xf32> to vector<16x16xbf16>
    %cst = arith.constant dense<0.000000e+00> : vector<16x64xf32>
    %32 = tpu.matmul %31, %30, %cst {dimension_numbers = #tpu.dot_dimension_numbers<[1], [0], [0], [1], [0, 0, 1, 1], [], []>} : vector<16x16xbf16>, vector<16x64xbf16>, vector<16x64xf32> -> vector<16x64xf32>
    %33 = vector.broadcast %4 : vector<1x64xf32> to vector<16x64xf32>
    %34 = arith.addf %32, %33 : vector<16x64xf32>
    %35 = vector.shape_cast %34 : vector<16x64xf32> to vector<2x8x64xf32>
    %36 = vector.shape_cast %1 : vector<8x64xf32> to vector<1x8x64xf32>
    %37 = vector.broadcast %36 : vector<1x8x64xf32> to vector<2x8x64xf32>
    %38 = arith.addf %35, %37 : vector<2x8x64xf32>
    %39 = vector.shape_cast %38 : vector<2x8x64xf32> to vector<16x64xf32>
    %c0_27 = arith.constant 0 : index
    %c0_28 = arith.constant 0 : index
    %c0_29 = arith.constant 0 : index
    %40 = vector.load %arg4[%c0_27, %c0_28, %c0_29] : memref<3x128x192xbf16, #tpu.memory_space<vmem>>, vector<1x128x192xbf16>
    %41 = vector.shape_cast %40 : vector<1x128x192xbf16> to vector<128x192xbf16>
    %42 = vector.extract_strided_slice %41 {offsets = [0, 0], sizes = [64, 192], strides = [1, 1]} : vector<128x192xbf16> to vector<64x192xbf16>
    %43 = vector.extract_strided_slice %41 {offsets = [64, 0], sizes = [64, 64], strides = [1, 1]} : vector<128x192xbf16> to vector<64x64xbf16>
    %c1 = arith.constant 1 : index
    %c0_30 = arith.constant 0 : index
    %c0_31 = arith.constant 0 : index
    %44 = vector.load %arg6[%c1, %c0_30, %c0_31] : memref<20x1x192xf32, #tpu.memory_space<vmem>>, vector<1x1x192xf32>
    %45 = vector.shape_cast %44 : vector<1x1x192xf32> to vector<1x192xf32>
    %c4 = arith.constant 4 : index
    %c0_32 = arith.constant 0 : index
    %c0_33 = arith.constant 0 : index
    %46 = vector.load %arg6[%c4, %c0_32, %c0_33] : memref<20x1x192xf32, #tpu.memory_space<vmem>>, vector<1x1x192xf32>
    %47 = vector.shape_cast %46 : vector<1x1x192xf32> to vector<1x192xf32>
    %48 = vector.extract_strided_slice %47 {offsets = [0, 0], sizes = [1, 64], strides = [1, 1]} : vector<1x192xf32> to vector<1x64xf32>
    %c7 = arith.constant 7 : index
    %c0_34 = arith.constant 0 : index
    %c0_35 = arith.constant 0 : index
    %49 = vector.load %arg6[%c7, %c0_34, %c0_35] : memref<20x1x192xf32, #tpu.memory_space<vmem>>, vector<1x1x192xf32>
    %50 = vector.shape_cast %49 : vector<1x1x192xf32> to vector<1x192xf32>
    %51 = vector.extract_strided_slice %50 {offsets = [0, 0], sizes = [1, 64], strides = [1, 1]} : vector<1x192xf32> to vector<1x64xf32>
    %c10 = arith.constant 10 : index
    %c0_36 = arith.constant 0 : index
    %c0_37 = arith.constant 0 : index
    %52 = vector.load %arg6[%c10, %c0_36, %c0_37] : memref<20x1x192xf32, #tpu.memory_space<vmem>>, vector<1x1x192xf32>
    %53 = vector.shape_cast %52 : vector<1x1x192xf32> to vector<1x192xf32>
    %54 = vector.extract_strided_slice %53 {offsets = [0, 0], sizes = [1, 64], strides = [1, 1]} : vector<1x192xf32> to vector<1x64xf32>
    %55 = arith.truncf %39 : vector<16x64xf32> to vector<16x64xbf16>
    %cst_38 = arith.constant dense<0.000000e+00> : vector<16x192xf32>
    %56 = tpu.matmul %55, %42, %cst_38 {dimension_numbers = #tpu.dot_dimension_numbers<[1], [0], [0], [1], [0, 0, 1, 1], [], []>} : vector<16x64xbf16>, vector<64x192xbf16>, vector<16x192xf32> -> vector<16x192xf32>
    %57 = vector.broadcast %45 : vector<1x192xf32> to vector<16x192xf32>
    %58 = arith.addf %56, %57 : vector<16x192xf32>
    %59 = vector.shape_cast %58 : vector<16x192xf32> to vector<2x8x192xf32>
    %60 = vector.extract_strided_slice %59 {offsets = [0, 0, 0], sizes = [2, 8, 16], strides = [1, 1, 1]} : vector<2x8x192xf32> to vector<2x8x16xf32>
    %61 = vector.extract_strided_slice %59 {offsets = [0, 0, 64], sizes = [2, 8, 16], strides = [1, 1, 1]} : vector<2x8x192xf32> to vector<2x8x16xf32>
    %62 = arith.truncf %60 : vector<2x8x16xf32> to vector<2x8x16xbf16>
    %63 = arith.truncf %61 : vector<2x8x16xf32> to vector<2x8x16xbf16>
    "tpu.trace_start"() <{level = 10 : i32, message = "bqd,bkd->bqk"}> : () -> ()
    %cst_39 = arith.constant dense<0.000000e+00> : vector<2x8x8xf32>
    %64 = tpu.matmul %62, %63, %cst_39 {dimension_numbers = #tpu.dot_dimension_numbers<[2], [2], [1], [1], [0, 0, 0, 1, 1, 1], [0], [0]>} : vector<2x8x16xbf16>, vector<2x8x16xbf16>, vector<2x8x8xf32> -> vector<2x8x8xf32>
    "tpu.trace_stop"() : () -> ()
    %65 = vector.extract_strided_slice %59 {offsets = [0, 0, 16], sizes = [2, 8, 16], strides = [1, 1, 1]} : vector<2x8x192xf32> to vector<2x8x16xf32>
    %66 = vector.extract_strided_slice %59 {offsets = [0, 0, 80], sizes = [2, 8, 16], strides = [1, 1, 1]} : vector<2x8x192xf32> to vector<2x8x16xf32>
    %67 = arith.truncf %65 : vector<2x8x16xf32> to vector<2x8x16xbf16>
    %68 = arith.truncf %66 : vector<2x8x16xf32> to vector<2x8x16xbf16>
    "tpu.trace_start"() <{level = 10 : i32, message = "bqd,bkd->bqk"}> : () -> ()
    %cst_40 = arith.constant dense<0.000000e+00> : vector<2x8x8xf32>
    %69 = tpu.matmul %67, %68, %cst_40 {dimension_numbers = #tpu.dot_dimension_numbers<[2], [2], [1], [1], [0, 0, 0, 1, 1, 1], [0], [0]>} : vector<2x8x16xbf16>, vector<2x8x16xbf16>, vector<2x8x8xf32> -> vector<2x8x8xf32>
    "tpu.trace_stop"() : () -> ()
    %70 = vector.extract_strided_slice %59 {offsets = [0, 0, 32], sizes = [2, 8, 16], strides = [1, 1, 1]} : vector<2x8x192xf32> to vector<2x8x16xf32>
    %71 = vector.extract_strided_slice %59 {offsets = [0, 0, 96], sizes = [2, 8, 16], strides = [1, 1, 1]} : vector<2x8x192xf32> to vector<2x8x16xf32>
    %72 = arith.truncf %70 : vector<2x8x16xf32> to vector<2x8x16xbf16>
    %73 = arith.truncf %71 : vector<2x8x16xf32> to vector<2x8x16xbf16>
    "tpu.trace_start"() <{level = 10 : i32, message = "bqd,bkd->bqk"}> : () -> ()
    %cst_41 = arith.constant dense<0.000000e+00> : vector<2x8x8xf32>
    %74 = tpu.matmul %72, %73, %cst_41 {dimension_numbers = #tpu.dot_dimension_numbers<[2], [2], [1], [1], [0, 0, 0, 1, 1, 1], [0], [0]>} : vector<2x8x16xbf16>, vector<2x8x16xbf16>, vector<2x8x8xf32> -> vector<2x8x8xf32>
    "tpu.trace_stop"() : () -> ()
    %75 = vector.extract_strided_slice %59 {offsets = [0, 0, 48], sizes = [2, 8, 16], strides = [1, 1, 1]} : vector<2x8x192xf32> to vector<2x8x16xf32>
    %76 = vector.extract_strided_slice %59 {offsets = [0, 0, 112], sizes = [2, 8, 16], strides = [1, 1, 1]} : vector<2x8x192xf32> to vector<2x8x16xf32>
    %77 = arith.truncf %75 : vector<2x8x16xf32> to vector<2x8x16xbf16>
    %78 = arith.truncf %76 : vector<2x8x16xf32> to vector<2x8x16xbf16>
    "tpu.trace_start"() <{level = 10 : i32, message = "bqd,bkd->bqk"}> : () -> ()
    %cst_42 = arith.constant dense<0.000000e+00> : vector<2x8x8xf32>
    %79 = tpu.matmul %77, %78, %cst_42 {dimension_numbers = #tpu.dot_dimension_numbers<[2], [2], [1], [1], [0, 0, 0, 1, 1, 1], [0], [0]>} : vector<2x8x16xbf16>, vector<2x8x16xbf16>, vector<2x8x8xf32> -> vector<2x8x8xf32>
    "tpu.trace_stop"() : () -> ()
    %80 = tpu.concatenate %64, %69, %74, %79 in 1 : vector<2x8x8xf32>, vector<2x8x8xf32>, vector<2x8x8xf32>, vector<2x8x8xf32> -> vector<2x32x8xf32>
    %cst_43 = arith.constant dense<0xFF800000> : vector<2x32xf32>
    %81 = vector.multi_reduction <maximumf>, %80, %cst_43 [2] : vector<2x32x8xf32> to vector<2x32xf32>
    %82 = vector.shape_cast %81 : vector<2x32xf32> to vector<2x32x1xf32>
    %83 = vector.broadcast %82 : vector<2x32x1xf32> to vector<2x32x8xf32>
    %84 = arith.subf %80, %83 : vector<2x32x8xf32>
    %85 = math.exp %84 : vector<2x32x8xf32>
    %cst_44 = arith.constant dense<0.000000e+00> : vector<2x32xf32>
    %86 = vector.multi_reduction <add>, %85, %cst_44 [2] : vector<2x32x8xf32> to vector<2x32xf32>
    %87 = vector.shape_cast %86 : vector<2x32xf32> to vector<2x32x1xf32>
    %88 = tpu.reciprocal %87 {approx = true} : vector<2x32x1xf32> -> vector<2x32x1xf32>
    %89 = vector.broadcast %88 : vector<2x32x1xf32> to vector<2x32x8xf32>
    %90 = arith.mulf %85, %89 : vector<2x32x8xf32>
    %91 = vector.extract_strided_slice %90 {offsets = [0, 0, 0], sizes = [2, 8, 8], strides = [1, 1, 1]} : vector<2x32x8xf32> to vector<2x8x8xf32>
    %92 = vector.extract_strided_slice %59 {offsets = [0, 0, 128], sizes = [2, 8, 16], strides = [1, 1, 1]} : vector<2x8x192xf32> to vector<2x8x16xf32>
    %93 = arith.truncf %91 : vector<2x8x8xf32> to vector<2x8x8xbf16>
    %94 = arith.truncf %92 : vector<2x8x16xf32> to vector<2x8x16xbf16>
    "tpu.trace_start"() <{level = 10 : i32, message = "bqk,bkd->bqd"}> : () -> ()
    %cst_45 = arith.constant dense<0.000000e+00> : vector<2x8x16xf32>
    %95 = tpu.matmul %93, %94, %cst_45 {dimension_numbers = #tpu.dot_dimension_numbers<[2], [1], [1], [2], [0, 0, 0, 1, 1, 2], [0], [0]>} : vector<2x8x8xbf16>, vector<2x8x16xbf16>, vector<2x8x16xf32> -> vector<2x8x16xf32>
    "tpu.trace_stop"() : () -> ()
    %96 = vector.extract_strided_slice %90 {offsets = [0, 8, 0], sizes = [2, 8, 8], strides = [1, 1, 1]} : vector<2x32x8xf32> to vector<2x8x8xf32>
    %97 = vector.extract_strided_slice %59 {offsets = [0, 0, 144], sizes = [2, 8, 16], strides = [1, 1, 1]} : vector<2x8x192xf32> to vector<2x8x16xf32>
    %98 = arith.truncf %96 : vector<2x8x8xf32> to vector<2x8x8xbf16>
    %99 = arith.truncf %97 : vector<2x8x16xf32> to vector<2x8x16xbf16>
    "tpu.trace_start"() <{level = 10 : i32, message = "bqk,bkd->bqd"}> : () -> ()
    %cst_46 = arith.constant dense<0.000000e+00> : vector<2x8x16xf32>
    %100 = tpu.matmul %98, %99, %cst_46 {dimension_numbers = #tpu.dot_dimension_numbers<[2], [1], [1], [2], [0, 0, 0, 1, 1, 2], [0], [0]>} : vector<2x8x8xbf16>, vector<2x8x16xbf16>, vector<2x8x16xf32> -> vector<2x8x16xf32>
    "tpu.trace_stop"() : () -> ()
    %101 = vector.extract_strided_slice %90 {offsets = [0, 16, 0], sizes = [2, 8, 8], strides = [1, 1, 1]} : vector<2x32x8xf32> to vector<2x8x8xf32>
    %102 = vector.extract_strided_slice %59 {offsets = [0, 0, 160], sizes = [2, 8, 16], strides = [1, 1, 1]} : vector<2x8x192xf32> to vector<2x8x16xf32>
    %103 = arith.truncf %101 : vector<2x8x8xf32> to vector<2x8x8xbf16>
    %104 = arith.truncf %102 : vector<2x8x16xf32> to vector<2x8x16xbf16>
    "tpu.trace_start"() <{level = 10 : i32, message = "bqk,bkd->bqd"}> : () -> ()
    %cst_47 = arith.constant dense<0.000000e+00> : vector<2x8x16xf32>
    %105 = tpu.matmul %103, %104, %cst_47 {dimension_numbers = #tpu.dot_dimension_numbers<[2], [1], [1], [2], [0, 0, 0, 1, 1, 2], [0], [0]>} : vector<2x8x8xbf16>, vector<2x8x16xbf16>, vector<2x8x16xf32> -> vector<2x8x16xf32>
    "tpu.trace_stop"() : () -> ()
    %106 = vector.extract_strided_slice %90 {offsets = [0, 24, 0], sizes = [2, 8, 8], strides = [1, 1, 1]} : vector<2x32x8xf32> to vector<2x8x8xf32>
    %107 = vector.extract_strided_slice %59 {offsets = [0, 0, 176], sizes = [2, 8, 16], strides = [1, 1, 1]} : vector<2x8x192xf32> to vector<2x8x16xf32>
    %108 = arith.truncf %106 : vector<2x8x8xf32> to vector<2x8x8xbf16>
    %109 = arith.truncf %107 : vector<2x8x16xf32> to vector<2x8x16xbf16>
    "tpu.trace_start"() <{level = 10 : i32, message = "bqk,bkd->bqd"}> : () -> ()
    %cst_48 = arith.constant dense<0.000000e+00> : vector<2x8x16xf32>
    %110 = tpu.matmul %108, %109, %cst_48 {dimension_numbers = #tpu.dot_dimension_numbers<[2], [1], [1], [2], [0, 0, 0, 1, 1, 2], [0], [0]>} : vector<2x8x8xbf16>, vector<2x8x16xbf16>, vector<2x8x16xf32> -> vector<2x8x16xf32>
    "tpu.trace_stop"() : () -> ()
    %111 = tpu.concatenate %95, %100, %105, %110 in 2 : vector<2x8x16xf32>, vector<2x8x16xf32>, vector<2x8x16xf32>, vector<2x8x16xf32> -> vector<2x8x64xf32>
    %112 = vector.shape_cast %111 : vector<2x8x64xf32> to vector<16x64xf32>
    %113 = arith.truncf %112 : vector<16x64xf32> to vector<16x64xbf16>
    %cst_49 = arith.constant dense<0.000000e+00> : vector<16x64xf32>
    %114 = tpu.matmul %113, %43, %cst_49 {dimension_numbers = #tpu.dot_dimension_numbers<[1], [0], [0], [1], [0, 0, 1, 1], [], []>} : vector<16x64xbf16>, vector<64x64xbf16>, vector<16x64xf32> -> vector<16x64xf32>
    %115 = vector.broadcast %48 : vector<1x64xf32> to vector<16x64xf32>
    %116 = arith.addf %114, %115 : vector<16x64xf32>
    %117 = arith.addf %39, %116 : vector<16x64xf32>
    %cst_50 = arith.constant dense<0.000000e+00> : vector<16xf32>
    %118 = vector.multi_reduction <add>, %117, %cst_50 [1] : vector<16x64xf32> to vector<16xf32>
    %119 = vector.shape_cast %118 : vector<16xf32> to vector<16x1xf32>
    %cst_51 = arith.constant 6.400000e+01 : f32
    %120 = vector.broadcast %cst_51 : f32 to vector<16x1xf32>
    %121 = arith.divf %119, %120 : vector<16x1xf32>
    %122 = vector.broadcast %121 : vector<16x1xf32> to vector<16x64xf32>
    %123 = arith.subf %117, %122 : vector<16x64xf32>
    %124 = arith.mulf %123, %123 : vector<16x64xf32>
    %cst_52 = arith.constant dense<0.000000e+00> : vector<16xf32>
    %125 = vector.multi_reduction <add>, %124, %cst_52 [1] : vector<16x64xf32> to vector<16xf32>
    %126 = vector.shape_cast %125 : vector<16xf32> to vector<16x1xf32>
    %cst_53 = arith.constant 6.400000e+01 : f32
    %127 = vector.broadcast %cst_53 : f32 to vector<16x1xf32>
    %128 = arith.divf %126, %127 : vector<16x1xf32>
    %129 = vector.broadcast %121 : vector<16x1xf32> to vector<16x64xf32>
    %130 = arith.subf %117, %129 : vector<16x64xf32>
    %cst_54 = arith.constant 9.99999974E-6 : f32
    %131 = vector.broadcast %cst_54 : f32 to vector<16x1xf32>
    %132 = arith.addf %128, %131 : vector<16x1xf32>
    %133 = math.rsqrt %132 : vector<16x1xf32>
    %134 = vector.broadcast %133 : vector<16x1xf32> to vector<16x64xf32>
    %135 = arith.mulf %130, %134 : vector<16x64xf32>
    %136 = vector.broadcast %51 : vector<1x64xf32> to vector<16x64xf32>
    %137 = arith.mulf %135, %136 : vector<16x64xf32>
    %138 = vector.broadcast %54 : vector<1x64xf32> to vector<16x64xf32>
    %139 = arith.addf %137, %138 : vector<16x64xf32>
    %140 = arith.truncf %139 : vector<16x64xf32> to vector<16x64xbf16>
    %cst_55 = arith.constant dense<0.000000e+00> : vector<16x128xf32>
    %141 = tpu.matmul %140, %5, %cst_55 {dimension_numbers = #tpu.dot_dimension_numbers<[1], [0], [0], [1], [0, 0, 1, 1], [], []>} : vector<16x64xbf16>, vector<64x128xbf16>, vector<16x128xf32> -> vector<16x128xf32>
    %142 = vector.broadcast %10 : vector<1x128xf32> to vector<16x128xf32>
    %143 = arith.addf %141, %142 : vector<16x128xf32>
    %cst_56 = arith.constant 5.000000e-01 : f32
    %144 = vector.broadcast %cst_56 : f32 to vector<16x128xf32>
    %145 = arith.mulf %144, %143 : vector<16x128xf32>
    %cst_57 = arith.constant 0.707106769 : f32
    %146 = vector.broadcast %cst_57 : f32 to vector<16x128xf32>
    %147 = arith.mulf %143, %146 : vector<16x128xf32>
    %148 = math.absf %147 : vector<16x128xf32>
    %cst_58 = arith.constant 0.327591091 : f32
    %149 = vector.broadcast %cst_58 : f32 to vector<16x128xf32>
    %150 = arith.mulf %149, %148 : vector<16x128xf32>
    %cst_59 = arith.constant 1.000000e+00 : f32
    %151 = vector.broadcast %cst_59 : f32 to vector<16x128xf32>
    %152 = arith.addf %151, %150 : vector<16x128xf32>
    %cst_60 = arith.constant 1.000000e+00 : f32
    %153 = vector.broadcast %cst_60 : f32 to vector<16x128xf32>
    %154 = arith.divf %153, %152 : vector<16x128xf32>
    %cst_61 = arith.constant 1.06140542 : f32
    %155 = vector.broadcast %cst_61 : f32 to vector<16x128xf32>
    %156 = arith.mulf %155, %154 : vector<16x128xf32>
    %cst_62 = arith.constant -1.45315206 : f32
    %157 = vector.broadcast %cst_62 : f32 to vector<16x128xf32>
    %158 = arith.addf %156, %157 : vector<16x128xf32>
    %159 = arith.mulf %158, %154 : vector<16x128xf32>
    %cst_63 = arith.constant 1.42141378 : f32
    %160 = vector.broadcast %cst_63 : f32 to vector<16x128xf32>
    %161 = arith.addf %159, %160 : vector<16x128xf32>
    %162 = arith.mulf %161, %154 : vector<16x128xf32>
    %cst_64 = arith.constant -0.284496725 : f32
    %163 = vector.broadcast %cst_64 : f32 to vector<16x128xf32>
    %164 = arith.addf %162, %163 : vector<16x128xf32>
    %165 = arith.mulf %164, %154 : vector<16x128xf32>
    %cst_65 = arith.constant 0.254829586 : f32
    %166 = vector.broadcast %cst_65 : f32 to vector<16x128xf32>
    %167 = arith.addf %165, %166 : vector<16x128xf32>
    %168 = arith.mulf %167, %154 : vector<16x128xf32>
    %cst_66 = arith.constant 0.000000e+00 : f32
    %169 = vector.broadcast %cst_66 : f32 to vector<16x128xf32>
    %170 = arith.subf %169, %148 : vector<16x128xf32>
    %171 = arith.mulf %170, %148 : vector<16x128xf32>
    %172 = math.exp %171 : vector<16x128xf32>
    %173 = arith.mulf %168, %172 : vector<16x128xf32>
    %cst_67 = arith.constant 1.000000e+00 : f32
    %174 = vector.broadcast %cst_67 : f32 to vector<16x128xf32>
    %175 = arith.subf %174, %173 : vector<16x128xf32>
    %cst_68 = arith.constant 0.000000e+00 : f32
    %176 = vector.broadcast %cst_68 : f32 to vector<16x128xf32>
    %177 = arith.cmpf oge, %147, %176 : vector<16x128xf32>
    %cst_69 = arith.constant 0.000000e+00 : f32
    %178 = vector.broadcast %cst_69 : f32 to vector<16x128xf32>
    %179 = arith.subf %178, %175 : vector<16x128xf32>
    %180 = arith.select %177, %175, %179 : vector<16x128xi1>, vector<16x128xf32>
    %cst_70 = arith.constant 1.000000e+00 : f32
    %181 = vector.broadcast %cst_70 : f32 to vector<16x128xf32>
    %182 = arith.addf %181, %180 : vector<16x128xf32>
    %183 = arith.mulf %145, %182 : vector<16x128xf32>
    %184 = arith.truncf %183 : vector<16x128xf32> to vector<16x128xbf16>
    %cst_71 = arith.constant dense<0.000000e+00> : vector<16x64xf32>
    %185 = tpu.matmul %184, %6, %cst_71 {dimension_numbers = #tpu.dot_dimension_numbers<[1], [0], [0], [1], [0, 0, 1, 1], [], []>} : vector<16x128xbf16>, vector<128x64xbf16>, vector<16x64xf32> -> vector<16x64xf32>
    %186 = vector.broadcast %13 : vector<1x64xf32> to vector<16x64xf32>
    %187 = arith.addf %185, %186 : vector<16x64xf32>
    %188 = arith.addf %139, %187 : vector<16x64xf32>
    %cst_72 = arith.constant dense<0.000000e+00> : vector<16xf32>
    %189 = vector.multi_reduction <add>, %188, %cst_72 [1] : vector<16x64xf32> to vector<16xf32>
    %190 = vector.shape_cast %189 : vector<16xf32> to vector<16x1xf32>
    %cst_73 = arith.constant 6.400000e+01 : f32
    %191 = vector.broadcast %cst_73 : f32 to vector<16x1xf32>
    %192 = arith.divf %190, %191 : vector<16x1xf32>
    %193 = vector.broadcast %192 : vector<16x1xf32> to vector<16x64xf32>
    %194 = arith.subf %188, %193 : vector<16x64xf32>
    %195 = arith.mulf %194, %194 : vector<16x64xf32>
    %cst_74 = arith.constant dense<0.000000e+00> : vector<16xf32>
    %196 = vector.multi_reduction <add>, %195, %cst_74 [1] : vector<16x64xf32> to vector<16xf32>
    %197 = vector.shape_cast %196 : vector<16xf32> to vector<16x1xf32>
    %cst_75 = arith.constant 6.400000e+01 : f32
    %198 = vector.broadcast %cst_75 : f32 to vector<16x1xf32>
    %199 = arith.divf %197, %198 : vector<16x1xf32>
    %200 = vector.broadcast %192 : vector<16x1xf32> to vector<16x64xf32>
    %201 = arith.subf %188, %200 : vector<16x64xf32>
    %cst_76 = arith.constant 9.99999974E-6 : f32
    %202 = vector.broadcast %cst_76 : f32 to vector<16x1xf32>
    %203 = arith.addf %199, %202 : vector<16x1xf32>
    %204 = math.rsqrt %203 : vector<16x1xf32>
    %205 = vector.broadcast %204 : vector<16x1xf32> to vector<16x64xf32>
    %206 = arith.mulf %201, %205 : vector<16x64xf32>
    %207 = vector.broadcast %16 : vector<1x64xf32> to vector<16x64xf32>
    %208 = arith.mulf %206, %207 : vector<16x64xf32>
    %209 = vector.broadcast %19 : vector<1x64xf32> to vector<16x64xf32>
    %210 = arith.addf %208, %209 : vector<16x64xf32>
    %c1_77 = arith.constant 1 : index
    %c0_78 = arith.constant 0 : index
    %c0_79 = arith.constant 0 : index
    %211 = vector.load %arg4[%c1_77, %c0_78, %c0_79] : memref<3x128x192xbf16, #tpu.memory_space<vmem>>, vector<1x128x192xbf16>
    %212 = vector.shape_cast %211 : vector<1x128x192xbf16> to vector<128x192xbf16>
    %213 = vector.extract_strided_slice %212 {offsets = [0, 0], sizes = [64, 192], strides = [1, 1]} : vector<128x192xbf16> to vector<64x192xbf16>
    %214 = vector.extract_strided_slice %212 {offsets = [64, 0], sizes = [64, 64], strides = [1, 1]} : vector<128x192xbf16> to vector<64x64xbf16>
    %c2 = arith.constant 2 : index
    %c0_80 = arith.constant 0 : index
    %c0_81 = arith.constant 0 : index
    %215 = vector.load %arg6[%c2, %c0_80, %c0_81] : memref<20x1x192xf32, #tpu.memory_space<vmem>>, vector<1x1x192xf32>
    %216 = vector.shape_cast %215 : vector<1x1x192xf32> to vector<1x192xf32>
    %c5 = arith.constant 5 : index
    %c0_82 = arith.constant 0 : index
    %c0_83 = arith.constant 0 : index
    %217 = vector.load %arg6[%c5, %c0_82, %c0_83] : memref<20x1x192xf32, #tpu.memory_space<vmem>>, vector<1x1x192xf32>
    %218 = vector.shape_cast %217 : vector<1x1x192xf32> to vector<1x192xf32>
    %219 = vector.extract_strided_slice %218 {offsets = [0, 0], sizes = [1, 64], strides = [1, 1]} : vector<1x192xf32> to vector<1x64xf32>
    %c8 = arith.constant 8 : index
    %c0_84 = arith.constant 0 : index
    %c0_85 = arith.constant 0 : index
    %220 = vector.load %arg6[%c8, %c0_84, %c0_85] : memref<20x1x192xf32, #tpu.memory_space<vmem>>, vector<1x1x192xf32>
    %221 = vector.shape_cast %220 : vector<1x1x192xf32> to vector<1x192xf32>
    %222 = vector.extract_strided_slice %221 {offsets = [0, 0], sizes = [1, 64], strides = [1, 1]} : vector<1x192xf32> to vector<1x64xf32>
    %c11 = arith.constant 11 : index
    %c0_86 = arith.constant 0 : index
    %c0_87 = arith.constant 0 : index
    %223 = vector.load %arg6[%c11, %c0_86, %c0_87] : memref<20x1x192xf32, #tpu.memory_space<vmem>>, vector<1x1x192xf32>
    %224 = vector.shape_cast %223 : vector<1x1x192xf32> to vector<1x192xf32>
    %225 = vector.extract_strided_slice %224 {offsets = [0, 0], sizes = [1, 64], strides = [1, 1]} : vector<1x192xf32> to vector<1x64xf32>
    %226 = arith.truncf %210 : vector<16x64xf32> to vector<16x64xbf16>
    %cst_88 = arith.constant dense<0.000000e+00> : vector<16x192xf32>
    %227 = tpu.matmul %226, %213, %cst_88 {dimension_numbers = #tpu.dot_dimension_numbers<[1], [0], [0], [1], [0, 0, 1, 1], [], []>} : vector<16x64xbf16>, vector<64x192xbf16>, vector<16x192xf32> -> vector<16x192xf32>
    %228 = vector.broadcast %216 : vector<1x192xf32> to vector<16x192xf32>
    %229 = arith.addf %227, %228 : vector<16x192xf32>
    %230 = vector.shape_cast %229 : vector<16x192xf32> to vector<2x8x192xf32>
    %231 = vector.extract_strided_slice %230 {offsets = [0, 0, 0], sizes = [2, 8, 16], strides = [1, 1, 1]} : vector<2x8x192xf32> to vector<2x8x16xf32>
    %232 = vector.extract_strided_slice %230 {offsets = [0, 0, 64], sizes = [2, 8, 16], strides = [1, 1, 1]} : vector<2x8x192xf32> to vector<2x8x16xf32>
    %233 = arith.truncf %231 : vector<2x8x16xf32> to vector<2x8x16xbf16>
    %234 = arith.truncf %232 : vector<2x8x16xf32> to vector<2x8x16xbf16>
    "tpu.trace_start"() <{level = 10 : i32, message = "bqd,bkd->bqk"}> : () -> ()
    %cst_89 = arith.constant dense<0.000000e+00> : vector<2x8x8xf32>
    %235 = tpu.matmul %233, %234, %cst_89 {dimension_numbers = #tpu.dot_dimension_numbers<[2], [2], [1], [1], [0, 0, 0, 1, 1, 1], [0], [0]>} : vector<2x8x16xbf16>, vector<2x8x16xbf16>, vector<2x8x8xf32> -> vector<2x8x8xf32>
    "tpu.trace_stop"() : () -> ()
    %236 = vector.extract_strided_slice %230 {offsets = [0, 0, 16], sizes = [2, 8, 16], strides = [1, 1, 1]} : vector<2x8x192xf32> to vector<2x8x16xf32>
    %237 = vector.extract_strided_slice %230 {offsets = [0, 0, 80], sizes = [2, 8, 16], strides = [1, 1, 1]} : vector<2x8x192xf32> to vector<2x8x16xf32>
    %238 = arith.truncf %236 : vector<2x8x16xf32> to vector<2x8x16xbf16>
    %239 = arith.truncf %237 : vector<2x8x16xf32> to vector<2x8x16xbf16>
    "tpu.trace_start"() <{level = 10 : i32, message = "bqd,bkd->bqk"}> : () -> ()
    %cst_90 = arith.constant dense<0.000000e+00> : vector<2x8x8xf32>
    %240 = tpu.matmul %238, %239, %cst_90 {dimension_numbers = #tpu.dot_dimension_numbers<[2], [2], [1], [1], [0, 0, 0, 1, 1, 1], [0], [0]>} : vector<2x8x16xbf16>, vector<2x8x16xbf16>, vector<2x8x8xf32> -> vector<2x8x8xf32>
    "tpu.trace_stop"() : () -> ()
    %241 = vector.extract_strided_slice %230 {offsets = [0, 0, 32], sizes = [2, 8, 16], strides = [1, 1, 1]} : vector<2x8x192xf32> to vector<2x8x16xf32>
    %242 = vector.extract_strided_slice %230 {offsets = [0, 0, 96], sizes = [2, 8, 16], strides = [1, 1, 1]} : vector<2x8x192xf32> to vector<2x8x16xf32>
    %243 = arith.truncf %241 : vector<2x8x16xf32> to vector<2x8x16xbf16>
    %244 = arith.truncf %242 : vector<2x8x16xf32> to vector<2x8x16xbf16>
    "tpu.trace_start"() <{level = 10 : i32, message = "bqd,bkd->bqk"}> : () -> ()
    %cst_91 = arith.constant dense<0.000000e+00> : vector<2x8x8xf32>
    %245 = tpu.matmul %243, %244, %cst_91 {dimension_numbers = #tpu.dot_dimension_numbers<[2], [2], [1], [1], [0, 0, 0, 1, 1, 1], [0], [0]>} : vector<2x8x16xbf16>, vector<2x8x16xbf16>, vector<2x8x8xf32> -> vector<2x8x8xf32>
    "tpu.trace_stop"() : () -> ()
    %246 = vector.extract_strided_slice %230 {offsets = [0, 0, 48], sizes = [2, 8, 16], strides = [1, 1, 1]} : vector<2x8x192xf32> to vector<2x8x16xf32>
    %247 = vector.extract_strided_slice %230 {offsets = [0, 0, 112], sizes = [2, 8, 16], strides = [1, 1, 1]} : vector<2x8x192xf32> to vector<2x8x16xf32>
    %248 = arith.truncf %246 : vector<2x8x16xf32> to vector<2x8x16xbf16>
    %249 = arith.truncf %247 : vector<2x8x16xf32> to vector<2x8x16xbf16>
    "tpu.trace_start"() <{level = 10 : i32, message = "bqd,bkd->bqk"}> : () -> ()
    %cst_92 = arith.constant dense<0.000000e+00> : vector<2x8x8xf32>
    %250 = tpu.matmul %248, %249, %cst_92 {dimension_numbers = #tpu.dot_dimension_numbers<[2], [2], [1], [1], [0, 0, 0, 1, 1, 1], [0], [0]>} : vector<2x8x16xbf16>, vector<2x8x16xbf16>, vector<2x8x8xf32> -> vector<2x8x8xf32>
    "tpu.trace_stop"() : () -> ()
    %251 = tpu.concatenate %235, %240, %245, %250 in 1 : vector<2x8x8xf32>, vector<2x8x8xf32>, vector<2x8x8xf32>, vector<2x8x8xf32> -> vector<2x32x8xf32>
    %cst_93 = arith.constant dense<0xFF800000> : vector<2x32xf32>
    %252 = vector.multi_reduction <maximumf>, %251, %cst_93 [2] : vector<2x32x8xf32> to vector<2x32xf32>
    %253 = vector.shape_cast %252 : vector<2x32xf32> to vector<2x32x1xf32>
    %254 = vector.broadcast %253 : vector<2x32x1xf32> to vector<2x32x8xf32>
    %255 = arith.subf %251, %254 : vector<2x32x8xf32>
    %256 = math.exp %255 : vector<2x32x8xf32>
    %cst_94 = arith.constant dense<0.000000e+00> : vector<2x32xf32>
    %257 = vector.multi_reduction <add>, %256, %cst_94 [2] : vector<2x32x8xf32> to vector<2x32xf32>
    %258 = vector.shape_cast %257 : vector<2x32xf32> to vector<2x32x1xf32>
    %259 = tpu.reciprocal %258 {approx = true} : vector<2x32x1xf32> -> vector<2x32x1xf32>
    %260 = vector.broadcast %259 : vector<2x32x1xf32> to vector<2x32x8xf32>
    %261 = arith.mulf %256, %260 : vector<2x32x8xf32>
    %262 = vector.extract_strided_slice %261 {offsets = [0, 0, 0], sizes = [2, 8, 8], strides = [1, 1, 1]} : vector<2x32x8xf32> to vector<2x8x8xf32>
    %263 = vector.extract_strided_slice %230 {offsets = [0, 0, 128], sizes = [2, 8, 16], strides = [1, 1, 1]} : vector<2x8x192xf32> to vector<2x8x16xf32>
    %264 = arith.truncf %262 : vector<2x8x8xf32> to vector<2x8x8xbf16>
    %265 = arith.truncf %263 : vector<2x8x16xf32> to vector<2x8x16xbf16>
    "tpu.trace_start"() <{level = 10 : i32, message = "bqk,bkd->bqd"}> : () -> ()
    %cst_95 = arith.constant dense<0.000000e+00> : vector<2x8x16xf32>
    %266 = tpu.matmul %264, %265, %cst_95 {dimension_numbers = #tpu.dot_dimension_numbers<[2], [1], [1], [2], [0, 0, 0, 1, 1, 2], [0], [0]>} : vector<2x8x8xbf16>, vector<2x8x16xbf16>, vector<2x8x16xf32> -> vector<2x8x16xf32>
    "tpu.trace_stop"() : () -> ()
    %267 = vector.extract_strided_slice %261 {offsets = [0, 8, 0], sizes = [2, 8, 8], strides = [1, 1, 1]} : vector<2x32x8xf32> to vector<2x8x8xf32>
    %268 = vector.extract_strided_slice %230 {offsets = [0, 0, 144], sizes = [2, 8, 16], strides = [1, 1, 1]} : vector<2x8x192xf32> to vector<2x8x16xf32>
    %269 = arith.truncf %267 : vector<2x8x8xf32> to vector<2x8x8xbf16>
    %270 = arith.truncf %268 : vector<2x8x16xf32> to vector<2x8x16xbf16>
    "tpu.trace_start"() <{level = 10 : i32, message = "bqk,bkd->bqd"}> : () -> ()
    %cst_96 = arith.constant dense<0.000000e+00> : vector<2x8x16xf32>
    %271 = tpu.matmul %269, %270, %cst_96 {dimension_numbers = #tpu.dot_dimension_numbers<[2], [1], [1], [2], [0, 0, 0, 1, 1, 2], [0], [0]>} : vector<2x8x8xbf16>, vector<2x8x16xbf16>, vector<2x8x16xf32> -> vector<2x8x16xf32>
    "tpu.trace_stop"() : () -> ()
    %272 = vector.extract_strided_slice %261 {offsets = [0, 16, 0], sizes = [2, 8, 8], strides = [1, 1, 1]} : vector<2x32x8xf32> to vector<2x8x8xf32>
    %273 = vector.extract_strided_slice %230 {offsets = [0, 0, 160], sizes = [2, 8, 16], strides = [1, 1, 1]} : vector<2x8x192xf32> to vector<2x8x16xf32>
    %274 = arith.truncf %272 : vector<2x8x8xf32> to vector<2x8x8xbf16>
    %275 = arith.truncf %273 : vector<2x8x16xf32> to vector<2x8x16xbf16>
    "tpu.trace_start"() <{level = 10 : i32, message = "bqk,bkd->bqd"}> : () -> ()
    %cst_97 = arith.constant dense<0.000000e+00> : vector<2x8x16xf32>
    %276 = tpu.matmul %274, %275, %cst_97 {dimension_numbers = #tpu.dot_dimension_numbers<[2], [1], [1], [2], [0, 0, 0, 1, 1, 2], [0], [0]>} : vector<2x8x8xbf16>, vector<2x8x16xbf16>, vector<2x8x16xf32> -> vector<2x8x16xf32>
    "tpu.trace_stop"() : () -> ()
    %277 = vector.extract_strided_slice %261 {offsets = [0, 24, 0], sizes = [2, 8, 8], strides = [1, 1, 1]} : vector<2x32x8xf32> to vector<2x8x8xf32>
    %278 = vector.extract_strided_slice %230 {offsets = [0, 0, 176], sizes = [2, 8, 16], strides = [1, 1, 1]} : vector<2x8x192xf32> to vector<2x8x16xf32>
    %279 = arith.truncf %277 : vector<2x8x8xf32> to vector<2x8x8xbf16>
    %280 = arith.truncf %278 : vector<2x8x16xf32> to vector<2x8x16xbf16>
    "tpu.trace_start"() <{level = 10 : i32, message = "bqk,bkd->bqd"}> : () -> ()
    %cst_98 = arith.constant dense<0.000000e+00> : vector<2x8x16xf32>
    %281 = tpu.matmul %279, %280, %cst_98 {dimension_numbers = #tpu.dot_dimension_numbers<[2], [1], [1], [2], [0, 0, 0, 1, 1, 2], [0], [0]>} : vector<2x8x8xbf16>, vector<2x8x16xbf16>, vector<2x8x16xf32> -> vector<2x8x16xf32>
    "tpu.trace_stop"() : () -> ()
    %282 = tpu.concatenate %266, %271, %276, %281 in 2 : vector<2x8x16xf32>, vector<2x8x16xf32>, vector<2x8x16xf32>, vector<2x8x16xf32> -> vector<2x8x64xf32>
    %283 = vector.shape_cast %282 : vector<2x8x64xf32> to vector<16x64xf32>
    %284 = arith.truncf %283 : vector<16x64xf32> to vector<16x64xbf16>
    %cst_99 = arith.constant dense<0.000000e+00> : vector<16x64xf32>
    %285 = tpu.matmul %284, %214, %cst_99 {dimension_numbers = #tpu.dot_dimension_numbers<[1], [0], [0], [1], [0, 0, 1, 1], [], []>} : vector<16x64xbf16>, vector<64x64xbf16>, vector<16x64xf32> -> vector<16x64xf32>
    %286 = vector.broadcast %219 : vector<1x64xf32> to vector<16x64xf32>
    %287 = arith.addf %285, %286 : vector<16x64xf32>
    %288 = arith.addf %210, %287 : vector<16x64xf32>
    %cst_100 = arith.constant dense<0.000000e+00> : vector<16xf32>
    %289 = vector.multi_reduction <add>, %288, %cst_100 [1] : vector<16x64xf32> to vector<16xf32>
    %290 = vector.shape_cast %289 : vector<16xf32> to vector<16x1xf32>
    %cst_101 = arith.constant 6.400000e+01 : f32
    %291 = vector.broadcast %cst_101 : f32 to vector<16x1xf32>
    %292 = arith.divf %290, %291 : vector<16x1xf32>
    %293 = vector.broadcast %292 : vector<16x1xf32> to vector<16x64xf32>
    %294 = arith.subf %288, %293 : vector<16x64xf32>
    %295 = arith.mulf %294, %294 : vector<16x64xf32>
    %cst_102 = arith.constant dense<0.000000e+00> : vector<16xf32>
    %296 = vector.multi_reduction <add>, %295, %cst_102 [1] : vector<16x64xf32> to vector<16xf32>
    %297 = vector.shape_cast %296 : vector<16xf32> to vector<16x1xf32>
    %cst_103 = arith.constant 6.400000e+01 : f32
    %298 = vector.broadcast %cst_103 : f32 to vector<16x1xf32>
    %299 = arith.divf %297, %298 : vector<16x1xf32>
    %300 = vector.broadcast %292 : vector<16x1xf32> to vector<16x64xf32>
    %301 = arith.subf %288, %300 : vector<16x64xf32>
    %cst_104 = arith.constant 9.99999974E-6 : f32
    %302 = vector.broadcast %cst_104 : f32 to vector<16x1xf32>
    %303 = arith.addf %299, %302 : vector<16x1xf32>
    %304 = math.rsqrt %303 : vector<16x1xf32>
    %305 = vector.broadcast %304 : vector<16x1xf32> to vector<16x64xf32>
    %306 = arith.mulf %301, %305 : vector<16x64xf32>
    %307 = vector.broadcast %222 : vector<1x64xf32> to vector<16x64xf32>
    %308 = arith.mulf %306, %307 : vector<16x64xf32>
    %309 = vector.broadcast %225 : vector<1x64xf32> to vector<16x64xf32>
    %310 = arith.addf %308, %309 : vector<16x64xf32>
    %311 = arith.truncf %310 : vector<16x64xf32> to vector<16x64xbf16>
    %cst_105 = arith.constant dense<0.000000e+00> : vector<16x128xf32>
    %312 = tpu.matmul %311, %5, %cst_105 {dimension_numbers = #tpu.dot_dimension_numbers<[1], [0], [0], [1], [0, 0, 1, 1], [], []>} : vector<16x64xbf16>, vector<64x128xbf16>, vector<16x128xf32> -> vector<16x128xf32>
    %313 = vector.broadcast %10 : vector<1x128xf32> to vector<16x128xf32>
    %314 = arith.addf %312, %313 : vector<16x128xf32>
    %cst_106 = arith.constant 5.000000e-01 : f32
    %315 = vector.broadcast %cst_106 : f32 to vector<16x128xf32>
    %316 = arith.mulf %315, %314 : vector<16x128xf32>
    %cst_107 = arith.constant 0.707106769 : f32
    %317 = vector.broadcast %cst_107 : f32 to vector<16x128xf32>
    %318 = arith.mulf %314, %317 : vector<16x128xf32>
    %319 = math.absf %318 : vector<16x128xf32>
    %cst_108 = arith.constant 0.327591091 : f32
    %320 = vector.broadcast %cst_108 : f32 to vector<16x128xf32>
    %321 = arith.mulf %320, %319 : vector<16x128xf32>
    %cst_109 = arith.constant 1.000000e+00 : f32
    %322 = vector.broadcast %cst_109 : f32 to vector<16x128xf32>
    %323 = arith.addf %322, %321 : vector<16x128xf32>
    %cst_110 = arith.constant 1.000000e+00 : f32
    %324 = vector.broadcast %cst_110 : f32 to vector<16x128xf32>
    %325 = arith.divf %324, %323 : vector<16x128xf32>
    %cst_111 = arith.constant 1.06140542 : f32
    %326 = vector.broadcast %cst_111 : f32 to vector<16x128xf32>
    %327 = arith.mulf %326, %325 : vector<16x128xf32>
    %cst_112 = arith.constant -1.45315206 : f32
    %328 = vector.broadcast %cst_112 : f32 to vector<16x128xf32>
    %329 = arith.addf %327, %328 : vector<16x128xf32>
    %330 = arith.mulf %329, %325 : vector<16x128xf32>
    %cst_113 = arith.constant 1.42141378 : f32
    %331 = vector.broadcast %cst_113 : f32 to vector<16x128xf32>
    %332 = arith.addf %330, %331 : vector<16x128xf32>
    %333 = arith.mulf %332, %325 : vector<16x128xf32>
    %cst_114 = arith.constant -0.284496725 : f32
    %334 = vector.broadcast %cst_114 : f32 to vector<16x128xf32>
    %335 = arith.addf %333, %334 : vector<16x128xf32>
    %336 = arith.mulf %335, %325 : vector<16x128xf32>
    %cst_115 = arith.constant 0.254829586 : f32
    %337 = vector.broadcast %cst_115 : f32 to vector<16x128xf32>
    %338 = arith.addf %336, %337 : vector<16x128xf32>
    %339 = arith.mulf %338, %325 : vector<16x128xf32>
    %cst_116 = arith.constant 0.000000e+00 : f32
    %340 = vector.broadcast %cst_116 : f32 to vector<16x128xf32>
    %341 = arith.subf %340, %319 : vector<16x128xf32>
    %342 = arith.mulf %341, %319 : vector<16x128xf32>
    %343 = math.exp %342 : vector<16x128xf32>
    %344 = arith.mulf %339, %343 : vector<16x128xf32>
    %cst_117 = arith.constant 1.000000e+00 : f32
    %345 = vector.broadcast %cst_117 : f32 to vector<16x128xf32>
    %346 = arith.subf %345, %344 : vector<16x128xf32>
    %cst_118 = arith.constant 0.000000e+00 : f32
    %347 = vector.broadcast %cst_118 : f32 to vector<16x128xf32>
    %348 = arith.cmpf oge, %318, %347 : vector<16x128xf32>
    %cst_119 = arith.constant 0.000000e+00 : f32
    %349 = vector.broadcast %cst_119 : f32 to vector<16x128xf32>
    %350 = arith.subf %349, %346 : vector<16x128xf32>
    %351 = arith.select %348, %346, %350 : vector<16x128xi1>, vector<16x128xf32>
    %cst_120 = arith.constant 1.000000e+00 : f32
    %352 = vector.broadcast %cst_120 : f32 to vector<16x128xf32>
    %353 = arith.addf %352, %351 : vector<16x128xf32>
    %354 = arith.mulf %316, %353 : vector<16x128xf32>
    %355 = arith.truncf %354 : vector<16x128xf32> to vector<16x128xbf16>
    %cst_121 = arith.constant dense<0.000000e+00> : vector<16x64xf32>
    %356 = tpu.matmul %355, %6, %cst_121 {dimension_numbers = #tpu.dot_dimension_numbers<[1], [0], [0], [1], [0, 0, 1, 1], [], []>} : vector<16x128xbf16>, vector<128x64xbf16>, vector<16x64xf32> -> vector<16x64xf32>
    %357 = vector.broadcast %13 : vector<1x64xf32> to vector<16x64xf32>
    %358 = arith.addf %356, %357 : vector<16x64xf32>
    %359 = arith.addf %310, %358 : vector<16x64xf32>
    %cst_122 = arith.constant dense<0.000000e+00> : vector<16xf32>
    %360 = vector.multi_reduction <add>, %359, %cst_122 [1] : vector<16x64xf32> to vector<16xf32>
    %361 = vector.shape_cast %360 : vector<16xf32> to vector<16x1xf32>
    %cst_123 = arith.constant 6.400000e+01 : f32
    %362 = vector.broadcast %cst_123 : f32 to vector<16x1xf32>
    %363 = arith.divf %361, %362 : vector<16x1xf32>
    %364 = vector.broadcast %363 : vector<16x1xf32> to vector<16x64xf32>
    %365 = arith.subf %359, %364 : vector<16x64xf32>
    %366 = arith.mulf %365, %365 : vector<16x64xf32>
    %cst_124 = arith.constant dense<0.000000e+00> : vector<16xf32>
    %367 = vector.multi_reduction <add>, %366, %cst_124 [1] : vector<16x64xf32> to vector<16xf32>
    %368 = vector.shape_cast %367 : vector<16xf32> to vector<16x1xf32>
    %cst_125 = arith.constant 6.400000e+01 : f32
    %369 = vector.broadcast %cst_125 : f32 to vector<16x1xf32>
    %370 = arith.divf %368, %369 : vector<16x1xf32>
    %371 = vector.broadcast %363 : vector<16x1xf32> to vector<16x64xf32>
    %372 = arith.subf %359, %371 : vector<16x64xf32>
    %cst_126 = arith.constant 9.99999974E-6 : f32
    %373 = vector.broadcast %cst_126 : f32 to vector<16x1xf32>
    %374 = arith.addf %370, %373 : vector<16x1xf32>
    %375 = math.rsqrt %374 : vector<16x1xf32>
    %376 = vector.broadcast %375 : vector<16x1xf32> to vector<16x64xf32>
    %377 = arith.mulf %372, %376 : vector<16x64xf32>
    %378 = vector.broadcast %16 : vector<1x64xf32> to vector<16x64xf32>
    %379 = arith.mulf %377, %378 : vector<16x64xf32>
    %380 = vector.broadcast %19 : vector<1x64xf32> to vector<16x64xf32>
    %381 = arith.addf %379, %380 : vector<16x64xf32>
    %c2_127 = arith.constant 2 : index
    %c0_128 = arith.constant 0 : index
    %c0_129 = arith.constant 0 : index
    %382 = vector.load %arg4[%c2_127, %c0_128, %c0_129] : memref<3x128x192xbf16, #tpu.memory_space<vmem>>, vector<1x128x192xbf16>
    %383 = vector.shape_cast %382 : vector<1x128x192xbf16> to vector<128x192xbf16>
    %384 = vector.extract_strided_slice %383 {offsets = [0, 0], sizes = [64, 192], strides = [1, 1]} : vector<128x192xbf16> to vector<64x192xbf16>
    %385 = vector.extract_strided_slice %383 {offsets = [64, 0], sizes = [64, 64], strides = [1, 1]} : vector<128x192xbf16> to vector<64x64xbf16>
    %c3 = arith.constant 3 : index
    %c0_130 = arith.constant 0 : index
    %c0_131 = arith.constant 0 : index
    %386 = vector.load %arg6[%c3, %c0_130, %c0_131] : memref<20x1x192xf32, #tpu.memory_space<vmem>>, vector<1x1x192xf32>
    %387 = vector.shape_cast %386 : vector<1x1x192xf32> to vector<1x192xf32>
    %c6 = arith.constant 6 : index
    %c0_132 = arith.constant 0 : index
    %c0_133 = arith.constant 0 : index
    %388 = vector.load %arg6[%c6, %c0_132, %c0_133] : memref<20x1x192xf32, #tpu.memory_space<vmem>>, vector<1x1x192xf32>
    %389 = vector.shape_cast %388 : vector<1x1x192xf32> to vector<1x192xf32>
    %390 = vector.extract_strided_slice %389 {offsets = [0, 0], sizes = [1, 64], strides = [1, 1]} : vector<1x192xf32> to vector<1x64xf32>
    %c9 = arith.constant 9 : index
    %c0_134 = arith.constant 0 : index
    %c0_135 = arith.constant 0 : index
    %391 = vector.load %arg6[%c9, %c0_134, %c0_135] : memref<20x1x192xf32, #tpu.memory_space<vmem>>, vector<1x1x192xf32>
    %392 = vector.shape_cast %391 : vector<1x1x192xf32> to vector<1x192xf32>
    %393 = vector.extract_strided_slice %392 {offsets = [0, 0], sizes = [1, 64], strides = [1, 1]} : vector<1x192xf32> to vector<1x64xf32>
    %c12 = arith.constant 12 : index
    %c0_136 = arith.constant 0 : index
    %c0_137 = arith.constant 0 : index
    %394 = vector.load %arg6[%c12, %c0_136, %c0_137] : memref<20x1x192xf32, #tpu.memory_space<vmem>>, vector<1x1x192xf32>
    %395 = vector.shape_cast %394 : vector<1x1x192xf32> to vector<1x192xf32>
    %396 = vector.extract_strided_slice %395 {offsets = [0, 0], sizes = [1, 64], strides = [1, 1]} : vector<1x192xf32> to vector<1x64xf32>
    %397 = arith.truncf %381 : vector<16x64xf32> to vector<16x64xbf16>
    %cst_138 = arith.constant dense<0.000000e+00> : vector<16x192xf32>
    %398 = tpu.matmul %397, %384, %cst_138 {dimension_numbers = #tpu.dot_dimension_numbers<[1], [0], [0], [1], [0, 0, 1, 1], [], []>} : vector<16x64xbf16>, vector<64x192xbf16>, vector<16x192xf32> -> vector<16x192xf32>
    %399 = vector.broadcast %387 : vector<1x192xf32> to vector<16x192xf32>
    %400 = arith.addf %398, %399 : vector<16x192xf32>
    %401 = vector.shape_cast %400 : vector<16x192xf32> to vector<2x8x192xf32>
    %402 = vector.extract_strided_slice %401 {offsets = [0, 0, 0], sizes = [2, 8, 16], strides = [1, 1, 1]} : vector<2x8x192xf32> to vector<2x8x16xf32>
    %403 = vector.extract_strided_slice %401 {offsets = [0, 0, 64], sizes = [2, 8, 16], strides = [1, 1, 1]} : vector<2x8x192xf32> to vector<2x8x16xf32>
    %404 = arith.truncf %402 : vector<2x8x16xf32> to vector<2x8x16xbf16>
    %405 = arith.truncf %403 : vector<2x8x16xf32> to vector<2x8x16xbf16>
    "tpu.trace_start"() <{level = 10 : i32, message = "bqd,bkd->bqk"}> : () -> ()
    %cst_139 = arith.constant dense<0.000000e+00> : vector<2x8x8xf32>
    %406 = tpu.matmul %404, %405, %cst_139 {dimension_numbers = #tpu.dot_dimension_numbers<[2], [2], [1], [1], [0, 0, 0, 1, 1, 1], [0], [0]>} : vector<2x8x16xbf16>, vector<2x8x16xbf16>, vector<2x8x8xf32> -> vector<2x8x8xf32>
    "tpu.trace_stop"() : () -> ()
    %407 = vector.extract_strided_slice %401 {offsets = [0, 0, 16], sizes = [2, 8, 16], strides = [1, 1, 1]} : vector<2x8x192xf32> to vector<2x8x16xf32>
    %408 = vector.extract_strided_slice %401 {offsets = [0, 0, 80], sizes = [2, 8, 16], strides = [1, 1, 1]} : vector<2x8x192xf32> to vector<2x8x16xf32>
    %409 = arith.truncf %407 : vector<2x8x16xf32> to vector<2x8x16xbf16>
    %410 = arith.truncf %408 : vector<2x8x16xf32> to vector<2x8x16xbf16>
    "tpu.trace_start"() <{level = 10 : i32, message = "bqd,bkd->bqk"}> : () -> ()
    %cst_140 = arith.constant dense<0.000000e+00> : vector<2x8x8xf32>
    %411 = tpu.matmul %409, %410, %cst_140 {dimension_numbers = #tpu.dot_dimension_numbers<[2], [2], [1], [1], [0, 0, 0, 1, 1, 1], [0], [0]>} : vector<2x8x16xbf16>, vector<2x8x16xbf16>, vector<2x8x8xf32> -> vector<2x8x8xf32>
    "tpu.trace_stop"() : () -> ()
    %412 = vector.extract_strided_slice %401 {offsets = [0, 0, 32], sizes = [2, 8, 16], strides = [1, 1, 1]} : vector<2x8x192xf32> to vector<2x8x16xf32>
    %413 = vector.extract_strided_slice %401 {offsets = [0, 0, 96], sizes = [2, 8, 16], strides = [1, 1, 1]} : vector<2x8x192xf32> to vector<2x8x16xf32>
    %414 = arith.truncf %412 : vector<2x8x16xf32> to vector<2x8x16xbf16>
    %415 = arith.truncf %413 : vector<2x8x16xf32> to vector<2x8x16xbf16>
    "tpu.trace_start"() <{level = 10 : i32, message = "bqd,bkd->bqk"}> : () -> ()
    %cst_141 = arith.constant dense<0.000000e+00> : vector<2x8x8xf32>
    %416 = tpu.matmul %414, %415, %cst_141 {dimension_numbers = #tpu.dot_dimension_numbers<[2], [2], [1], [1], [0, 0, 0, 1, 1, 1], [0], [0]>} : vector<2x8x16xbf16>, vector<2x8x16xbf16>, vector<2x8x8xf32> -> vector<2x8x8xf32>
    "tpu.trace_stop"() : () -> ()
    %417 = vector.extract_strided_slice %401 {offsets = [0, 0, 48], sizes = [2, 8, 16], strides = [1, 1, 1]} : vector<2x8x192xf32> to vector<2x8x16xf32>
    %418 = vector.extract_strided_slice %401 {offsets = [0, 0, 112], sizes = [2, 8, 16], strides = [1, 1, 1]} : vector<2x8x192xf32> to vector<2x8x16xf32>
    %419 = arith.truncf %417 : vector<2x8x16xf32> to vector<2x8x16xbf16>
    %420 = arith.truncf %418 : vector<2x8x16xf32> to vector<2x8x16xbf16>
    "tpu.trace_start"() <{level = 10 : i32, message = "bqd,bkd->bqk"}> : () -> ()
    %cst_142 = arith.constant dense<0.000000e+00> : vector<2x8x8xf32>
    %421 = tpu.matmul %419, %420, %cst_142 {dimension_numbers = #tpu.dot_dimension_numbers<[2], [2], [1], [1], [0, 0, 0, 1, 1, 1], [0], [0]>} : vector<2x8x16xbf16>, vector<2x8x16xbf16>, vector<2x8x8xf32> -> vector<2x8x8xf32>
    "tpu.trace_stop"() : () -> ()
    %422 = tpu.concatenate %406, %411, %416, %421 in 1 : vector<2x8x8xf32>, vector<2x8x8xf32>, vector<2x8x8xf32>, vector<2x8x8xf32> -> vector<2x32x8xf32>
    %cst_143 = arith.constant dense<0xFF800000> : vector<2x32xf32>
    %423 = vector.multi_reduction <maximumf>, %422, %cst_143 [2] : vector<2x32x8xf32> to vector<2x32xf32>
    %424 = vector.shape_cast %423 : vector<2x32xf32> to vector<2x32x1xf32>
    %425 = vector.broadcast %424 : vector<2x32x1xf32> to vector<2x32x8xf32>
    %426 = arith.subf %422, %425 : vector<2x32x8xf32>
    %427 = math.exp %426 : vector<2x32x8xf32>
    %cst_144 = arith.constant dense<0.000000e+00> : vector<2x32xf32>
    %428 = vector.multi_reduction <add>, %427, %cst_144 [2] : vector<2x32x8xf32> to vector<2x32xf32>
    %429 = vector.shape_cast %428 : vector<2x32xf32> to vector<2x32x1xf32>
    %430 = tpu.reciprocal %429 {approx = true} : vector<2x32x1xf32> -> vector<2x32x1xf32>
    %431 = vector.broadcast %430 : vector<2x32x1xf32> to vector<2x32x8xf32>
    %432 = arith.mulf %427, %431 : vector<2x32x8xf32>
    %433 = vector.extract_strided_slice %432 {offsets = [0, 0, 0], sizes = [2, 8, 8], strides = [1, 1, 1]} : vector<2x32x8xf32> to vector<2x8x8xf32>
    %434 = vector.extract_strided_slice %401 {offsets = [0, 0, 128], sizes = [2, 8, 16], strides = [1, 1, 1]} : vector<2x8x192xf32> to vector<2x8x16xf32>
    %435 = arith.truncf %433 : vector<2x8x8xf32> to vector<2x8x8xbf16>
    %436 = arith.truncf %434 : vector<2x8x16xf32> to vector<2x8x16xbf16>
    "tpu.trace_start"() <{level = 10 : i32, message = "bqk,bkd->bqd"}> : () -> ()
    %cst_145 = arith.constant dense<0.000000e+00> : vector<2x8x16xf32>
    %437 = tpu.matmul %435, %436, %cst_145 {dimension_numbers = #tpu.dot_dimension_numbers<[2], [1], [1], [2], [0, 0, 0, 1, 1, 2], [0], [0]>} : vector<2x8x8xbf16>, vector<2x8x16xbf16>, vector<2x8x16xf32> -> vector<2x8x16xf32>
    "tpu.trace_stop"() : () -> ()
    %438 = vector.extract_strided_slice %432 {offsets = [0, 8, 0], sizes = [2, 8, 8], strides = [1, 1, 1]} : vector<2x32x8xf32> to vector<2x8x8xf32>
    %439 = vector.extract_strided_slice %401 {offsets = [0, 0, 144], sizes = [2, 8, 16], strides = [1, 1, 1]} : vector<2x8x192xf32> to vector<2x8x16xf32>
    %440 = arith.truncf %438 : vector<2x8x8xf32> to vector<2x8x8xbf16>
    %441 = arith.truncf %439 : vector<2x8x16xf32> to vector<2x8x16xbf16>
    "tpu.trace_start"() <{level = 10 : i32, message = "bqk,bkd->bqd"}> : () -> ()
    %cst_146 = arith.constant dense<0.000000e+00> : vector<2x8x16xf32>
    %442 = tpu.matmul %440, %441, %cst_146 {dimension_numbers = #tpu.dot_dimension_numbers<[2], [1], [1], [2], [0, 0, 0, 1, 1, 2], [0], [0]>} : vector<2x8x8xbf16>, vector<2x8x16xbf16>, vector<2x8x16xf32> -> vector<2x8x16xf32>
    "tpu.trace_stop"() : () -> ()
    %443 = vector.extract_strided_slice %432 {offsets = [0, 16, 0], sizes = [2, 8, 8], strides = [1, 1, 1]} : vector<2x32x8xf32> to vector<2x8x8xf32>
    %444 = vector.extract_strided_slice %401 {offsets = [0, 0, 160], sizes = [2, 8, 16], strides = [1, 1, 1]} : vector<2x8x192xf32> to vector<2x8x16xf32>
    %445 = arith.truncf %443 : vector<2x8x8xf32> to vector<2x8x8xbf16>
    %446 = arith.truncf %444 : vector<2x8x16xf32> to vector<2x8x16xbf16>
    "tpu.trace_start"() <{level = 10 : i32, message = "bqk,bkd->bqd"}> : () -> ()
    %cst_147 = arith.constant dense<0.000000e+00> : vector<2x8x16xf32>
    %447 = tpu.matmul %445, %446, %cst_147 {dimension_numbers = #tpu.dot_dimension_numbers<[2], [1], [1], [2], [0, 0, 0, 1, 1, 2], [0], [0]>} : vector<2x8x8xbf16>, vector<2x8x16xbf16>, vector<2x8x16xf32> -> vector<2x8x16xf32>
    "tpu.trace_stop"() : () -> ()
    %448 = vector.extract_strided_slice %432 {offsets = [0, 24, 0], sizes = [2, 8, 8], strides = [1, 1, 1]} : vector<2x32x8xf32> to vector<2x8x8xf32>
    %449 = vector.extract_strided_slice %401 {offsets = [0, 0, 176], sizes = [2, 8, 16], strides = [1, 1, 1]} : vector<2x8x192xf32> to vector<2x8x16xf32>
    %450 = arith.truncf %448 : vector<2x8x8xf32> to vector<2x8x8xbf16>
    %451 = arith.truncf %449 : vector<2x8x16xf32> to vector<2x8x16xbf16>
    "tpu.trace_start"() <{level = 10 : i32, message = "bqk,bkd->bqd"}> : () -> ()
    %cst_148 = arith.constant dense<0.000000e+00> : vector<2x8x16xf32>
    %452 = tpu.matmul %450, %451, %cst_148 {dimension_numbers = #tpu.dot_dimension_numbers<[2], [1], [1], [2], [0, 0, 0, 1, 1, 2], [0], [0]>} : vector<2x8x8xbf16>, vector<2x8x16xbf16>, vector<2x8x16xf32> -> vector<2x8x16xf32>
    "tpu.trace_stop"() : () -> ()
    %453 = tpu.concatenate %437, %442, %447, %452 in 2 : vector<2x8x16xf32>, vector<2x8x16xf32>, vector<2x8x16xf32>, vector<2x8x16xf32> -> vector<2x8x64xf32>
    %454 = vector.shape_cast %453 : vector<2x8x64xf32> to vector<16x64xf32>
    %455 = arith.truncf %454 : vector<16x64xf32> to vector<16x64xbf16>
    %cst_149 = arith.constant dense<0.000000e+00> : vector<16x64xf32>
    %456 = tpu.matmul %455, %385, %cst_149 {dimension_numbers = #tpu.dot_dimension_numbers<[1], [0], [0], [1], [0, 0, 1, 1], [], []>} : vector<16x64xbf16>, vector<64x64xbf16>, vector<16x64xf32> -> vector<16x64xf32>
    %457 = vector.broadcast %390 : vector<1x64xf32> to vector<16x64xf32>
    %458 = arith.addf %456, %457 : vector<16x64xf32>
    %459 = arith.addf %381, %458 : vector<16x64xf32>
    %cst_150 = arith.constant dense<0.000000e+00> : vector<16xf32>
    %460 = vector.multi_reduction <add>, %459, %cst_150 [1] : vector<16x64xf32> to vector<16xf32>
    %461 = vector.shape_cast %460 : vector<16xf32> to vector<16x1xf32>
    %cst_151 = arith.constant 6.400000e+01 : f32
    %462 = vector.broadcast %cst_151 : f32 to vector<16x1xf32>
    %463 = arith.divf %461, %462 : vector<16x1xf32>
    %464 = vector.broadcast %463 : vector<16x1xf32> to vector<16x64xf32>
    %465 = arith.subf %459, %464 : vector<16x64xf32>
    %466 = arith.mulf %465, %465 : vector<16x64xf32>
    %cst_152 = arith.constant dense<0.000000e+00> : vector<16xf32>
    %467 = vector.multi_reduction <add>, %466, %cst_152 [1] : vector<16x64xf32> to vector<16xf32>
    %468 = vector.shape_cast %467 : vector<16xf32> to vector<16x1xf32>
    %cst_153 = arith.constant 6.400000e+01 : f32
    %469 = vector.broadcast %cst_153 : f32 to vector<16x1xf32>
    %470 = arith.divf %468, %469 : vector<16x1xf32>
    %471 = vector.broadcast %463 : vector<16x1xf32> to vector<16x64xf32>
    %472 = arith.subf %459, %471 : vector<16x64xf32>
    %cst_154 = arith.constant 9.99999974E-6 : f32
    %473 = vector.broadcast %cst_154 : f32 to vector<16x1xf32>
    %474 = arith.addf %470, %473 : vector<16x1xf32>
    %475 = math.rsqrt %474 : vector<16x1xf32>
    %476 = vector.broadcast %475 : vector<16x1xf32> to vector<16x64xf32>
    %477 = arith.mulf %472, %476 : vector<16x64xf32>
    %478 = vector.broadcast %393 : vector<1x64xf32> to vector<16x64xf32>
    %479 = arith.mulf %477, %478 : vector<16x64xf32>
    %480 = vector.broadcast %396 : vector<1x64xf32> to vector<16x64xf32>
    %481 = arith.addf %479, %480 : vector<16x64xf32>
    %482 = vector.shape_cast %481 : vector<16x64xf32> to vector<2x8x64xf32>
    %483 = vector.extract_strided_slice %482 {offsets = [0, 7, 0], sizes = [2, 1, 64], strides = [1, 1, 1]} : vector<2x8x64xf32> to vector<2x1x64xf32>
    %484 = vector.shape_cast %483 : vector<2x1x64xf32> to vector<2x64xf32>
    %485 = arith.truncf %484 : vector<2x64xf32> to vector<2x64xbf16>
    %cst_155 = arith.constant dense<0.000000e+00> : vector<2x128xf32>
    %486 = tpu.matmul %485, %5, %cst_155 {dimension_numbers = #tpu.dot_dimension_numbers<[1], [0], [0], [1], [0, 0, 1, 1], [], []>} : vector<2x64xbf16>, vector<64x128xbf16>, vector<2x128xf32> -> vector<2x128xf32>
    %487 = vector.broadcast %10 : vector<1x128xf32> to vector<2x128xf32>
    %488 = arith.addf %486, %487 : vector<2x128xf32>
    %cst_156 = arith.constant 5.000000e-01 : f32
    %489 = vector.broadcast %cst_156 : f32 to vector<2x128xf32>
    %490 = arith.mulf %489, %488 : vector<2x128xf32>
    %cst_157 = arith.constant 0.707106769 : f32
    %491 = vector.broadcast %cst_157 : f32 to vector<2x128xf32>
    %492 = arith.mulf %488, %491 : vector<2x128xf32>
    %493 = math.absf %492 : vector<2x128xf32>
    %cst_158 = arith.constant 0.327591091 : f32
    %494 = vector.broadcast %cst_158 : f32 to vector<2x128xf32>
    %495 = arith.mulf %494, %493 : vector<2x128xf32>
    %cst_159 = arith.constant 1.000000e+00 : f32
    %496 = vector.broadcast %cst_159 : f32 to vector<2x128xf32>
    %497 = arith.addf %496, %495 : vector<2x128xf32>
    %cst_160 = arith.constant 1.000000e+00 : f32
    %498 = vector.broadcast %cst_160 : f32 to vector<2x128xf32>
    %499 = arith.divf %498, %497 : vector<2x128xf32>
    %cst_161 = arith.constant 1.06140542 : f32
    %500 = vector.broadcast %cst_161 : f32 to vector<2x128xf32>
    %501 = arith.mulf %500, %499 : vector<2x128xf32>
    %cst_162 = arith.constant -1.45315206 : f32
    %502 = vector.broadcast %cst_162 : f32 to vector<2x128xf32>
    %503 = arith.addf %501, %502 : vector<2x128xf32>
    %504 = arith.mulf %503, %499 : vector<2x128xf32>
    %cst_163 = arith.constant 1.42141378 : f32
    %505 = vector.broadcast %cst_163 : f32 to vector<2x128xf32>
    %506 = arith.addf %504, %505 : vector<2x128xf32>
    %507 = arith.mulf %506, %499 : vector<2x128xf32>
    %cst_164 = arith.constant -0.284496725 : f32
    %508 = vector.broadcast %cst_164 : f32 to vector<2x128xf32>
    %509 = arith.addf %507, %508 : vector<2x128xf32>
    %510 = arith.mulf %509, %499 : vector<2x128xf32>
    %cst_165 = arith.constant 0.254829586 : f32
    %511 = vector.broadcast %cst_165 : f32 to vector<2x128xf32>
    %512 = arith.addf %510, %511 : vector<2x128xf32>
    %513 = arith.mulf %512, %499 : vector<2x128xf32>
    %cst_166 = arith.constant 0.000000e+00 : f32
    %514 = vector.broadcast %cst_166 : f32 to vector<2x128xf32>
    %515 = arith.subf %514, %493 : vector<2x128xf32>
    %516 = arith.mulf %515, %493 : vector<2x128xf32>
    %517 = math.exp %516 : vector<2x128xf32>
    %518 = arith.mulf %513, %517 : vector<2x128xf32>
    %cst_167 = arith.constant 1.000000e+00 : f32
    %519 = vector.broadcast %cst_167 : f32 to vector<2x128xf32>
    %520 = arith.subf %519, %518 : vector<2x128xf32>
    %cst_168 = arith.constant 0.000000e+00 : f32
    %521 = vector.broadcast %cst_168 : f32 to vector<2x128xf32>
    %522 = arith.cmpf oge, %492, %521 : vector<2x128xf32>
    %cst_169 = arith.constant 0.000000e+00 : f32
    %523 = vector.broadcast %cst_169 : f32 to vector<2x128xf32>
    %524 = arith.subf %523, %520 : vector<2x128xf32>
    %525 = arith.select %522, %520, %524 : vector<2x128xi1>, vector<2x128xf32>
    %cst_170 = arith.constant 1.000000e+00 : f32
    %526 = vector.broadcast %cst_170 : f32 to vector<2x128xf32>
    %527 = arith.addf %526, %525 : vector<2x128xf32>
    %528 = arith.mulf %490, %527 : vector<2x128xf32>
    %529 = arith.truncf %528 : vector<2x128xf32> to vector<2x128xbf16>
    %cst_171 = arith.constant dense<0.000000e+00> : vector<2x64xf32>
    %530 = tpu.matmul %529, %6, %cst_171 {dimension_numbers = #tpu.dot_dimension_numbers<[1], [0], [0], [1], [0, 0, 1, 1], [], []>} : vector<2x128xbf16>, vector<128x64xbf16>, vector<2x64xf32> -> vector<2x64xf32>
    %531 = vector.broadcast %13 : vector<1x64xf32> to vector<2x64xf32>
    %532 = arith.addf %530, %531 : vector<2x64xf32>
    %533 = arith.addf %484, %532 : vector<2x64xf32>
    %cst_172 = arith.constant dense<0.000000e+00> : vector<2xf32>
    %534 = vector.multi_reduction <add>, %533, %cst_172 [1] : vector<2x64xf32> to vector<2xf32>
    %535 = vector.shape_cast %534 : vector<2xf32> to vector<2x1xf32>
    %cst_173 = arith.constant 6.400000e+01 : f32
    %536 = vector.broadcast %cst_173 : f32 to vector<2x1xf32>
    %537 = arith.divf %535, %536 : vector<2x1xf32>
    %538 = vector.broadcast %537 : vector<2x1xf32> to vector<2x64xf32>
    %539 = arith.subf %533, %538 : vector<2x64xf32>
    %540 = arith.mulf %539, %539 : vector<2x64xf32>
    %cst_174 = arith.constant dense<0.000000e+00> : vector<2xf32>
    %541 = vector.multi_reduction <add>, %540, %cst_174 [1] : vector<2x64xf32> to vector<2xf32>
    %542 = vector.shape_cast %541 : vector<2xf32> to vector<2x1xf32>
    %cst_175 = arith.constant 6.400000e+01 : f32
    %543 = vector.broadcast %cst_175 : f32 to vector<2x1xf32>
    %544 = arith.divf %542, %543 : vector<2x1xf32>
    %545 = vector.broadcast %537 : vector<2x1xf32> to vector<2x64xf32>
    %546 = arith.subf %533, %545 : vector<2x64xf32>
    %cst_176 = arith.constant 9.99999974E-6 : f32
    %547 = vector.broadcast %cst_176 : f32 to vector<2x1xf32>
    %548 = arith.addf %544, %547 : vector<2x1xf32>
    %549 = math.rsqrt %548 : vector<2x1xf32>
    %550 = vector.broadcast %549 : vector<2x1xf32> to vector<2x64xf32>
    %551 = arith.mulf %546, %550 : vector<2x64xf32>
    %552 = vector.broadcast %16 : vector<1x64xf32> to vector<2x64xf32>
    %553 = arith.mulf %551, %552 : vector<2x64xf32>
    %554 = vector.broadcast %19 : vector<1x64xf32> to vector<2x64xf32>
    %555 = arith.addf %553, %554 : vector<2x64xf32>
    %556 = arith.truncf %555 : vector<2x64xf32> to vector<2x64xbf16>
    %cst_177 = arith.constant dense<0.000000e+00> : vector<2x32xf32>
    %557 = tpu.matmul %556, %7, %cst_177 {dimension_numbers = #tpu.dot_dimension_numbers<[1], [0], [0], [1], [0, 0, 1, 1], [], []>} : vector<2x64xbf16>, vector<64x32xbf16>, vector<2x32xf32> -> vector<2x32xf32>
    %558 = vector.broadcast %22 : vector<1x32xf32> to vector<2x32xf32>
    %559 = arith.addf %557, %558 : vector<2x32xf32>
    %cst_178 = arith.constant 5.000000e-01 : f32
    %560 = vector.broadcast %cst_178 : f32 to vector<2x32xf32>
    %561 = arith.mulf %560, %559 : vector<2x32xf32>
    %cst_179 = arith.constant 0.707106769 : f32
    %562 = vector.broadcast %cst_179 : f32 to vector<2x32xf32>
    %563 = arith.mulf %559, %562 : vector<2x32xf32>
    %564 = math.absf %563 : vector<2x32xf32>
    %cst_180 = arith.constant 0.327591091 : f32
    %565 = vector.broadcast %cst_180 : f32 to vector<2x32xf32>
    %566 = arith.mulf %565, %564 : vector<2x32xf32>
    %cst_181 = arith.constant 1.000000e+00 : f32
    %567 = vector.broadcast %cst_181 : f32 to vector<2x32xf32>
    %568 = arith.addf %567, %566 : vector<2x32xf32>
    %cst_182 = arith.constant 1.000000e+00 : f32
    %569 = vector.broadcast %cst_182 : f32 to vector<2x32xf32>
    %570 = arith.divf %569, %568 : vector<2x32xf32>
    %cst_183 = arith.constant 1.06140542 : f32
    %571 = vector.broadcast %cst_183 : f32 to vector<2x32xf32>
    %572 = arith.mulf %571, %570 : vector<2x32xf32>
    %cst_184 = arith.constant -1.45315206 : f32
    %573 = vector.broadcast %cst_184 : f32 to vector<2x32xf32>
    %574 = arith.addf %572, %573 : vector<2x32xf32>
    %575 = arith.mulf %574, %570 : vector<2x32xf32>
    %cst_185 = arith.constant 1.42141378 : f32
    %576 = vector.broadcast %cst_185 : f32 to vector<2x32xf32>
    %577 = arith.addf %575, %576 : vector<2x32xf32>
    %578 = arith.mulf %577, %570 : vector<2x32xf32>
    %cst_186 = arith.constant -0.284496725 : f32
    %579 = vector.broadcast %cst_186 : f32 to vector<2x32xf32>
    %580 = arith.addf %578, %579 : vector<2x32xf32>
    %581 = arith.mulf %580, %570 : vector<2x32xf32>
    %cst_187 = arith.constant 0.254829586 : f32
    %582 = vector.broadcast %cst_187 : f32 to vector<2x32xf32>
    %583 = arith.addf %581, %582 : vector<2x32xf32>
    %584 = arith.mulf %583, %570 : vector<2x32xf32>
    %cst_188 = arith.constant 0.000000e+00 : f32
    %585 = vector.broadcast %cst_188 : f32 to vector<2x32xf32>
    %586 = arith.subf %585, %564 : vector<2x32xf32>
    %587 = arith.mulf %586, %564 : vector<2x32xf32>
    %588 = math.exp %587 : vector<2x32xf32>
    %589 = arith.mulf %584, %588 : vector<2x32xf32>
    %cst_189 = arith.constant 1.000000e+00 : f32
    %590 = vector.broadcast %cst_189 : f32 to vector<2x32xf32>
    %591 = arith.subf %590, %589 : vector<2x32xf32>
    %cst_190 = arith.constant 0.000000e+00 : f32
    %592 = vector.broadcast %cst_190 : f32 to vector<2x32xf32>
    %593 = arith.cmpf oge, %563, %592 : vector<2x32xf32>
    %cst_191 = arith.constant 0.000000e+00 : f32
    %594 = vector.broadcast %cst_191 : f32 to vector<2x32xf32>
    %595 = arith.subf %594, %591 : vector<2x32xf32>
    %596 = arith.select %593, %591, %595 : vector<2x32xi1>, vector<2x32xf32>
    %cst_192 = arith.constant 1.000000e+00 : f32
    %597 = vector.broadcast %cst_192 : f32 to vector<2x32xf32>
    %598 = arith.addf %597, %596 : vector<2x32xf32>
    %599 = arith.mulf %561, %598 : vector<2x32xf32>
    %600 = vector.broadcast %25 : vector<1x32xf32> to vector<2x32xf32>
    %601 = arith.mulf %599, %600 : vector<2x32xf32>
    %cst_193 = arith.constant dense<0.000000e+00> : vector<2xf32>
    %602 = vector.multi_reduction <add>, %601, %cst_193 [1] : vector<2x32xf32> to vector<2xf32>
    %603 = vector.shape_cast %602 : vector<2xf32> to vector<2x1xf32>
    %604 = vector.broadcast %28 : vector<1x1xf32> to vector<2x1xf32>
    %605 = arith.addf %603, %604 : vector<2x1xf32>
    %606 = vector.shape_cast %605 : vector<2x1xf32> to vector<1x2x1xf32>
    %c0_194 = arith.constant 0 : index
    %c0_195 = arith.constant 0 : index
    %c0_196 = arith.constant 0 : index
    %607 = vector.load %arg7[%c0_194, %c0_195, %c0_196] : memref<1x2x1xf32, #tpu.memory_space<vmem>>, vector<1x2x1xf32>
    tpu.vector_store %arg7[%c0_194, %c0_195, %c0_196], %606 {strides = array<i32>} : memref<1x2x1xf32, #tpu.memory_space<vmem>>, vector<1x2x1xf32>,
    return
  }
  func.func @transform_0(%arg0: i32) -> (i32, i32, i32) {
    %c0_i32 = arith.constant 0 : i32
    %c0_i32_0 = arith.constant 0 : i32
    %c0_i32_1 = arith.constant 0 : i32
    return %arg0, %c0_i32, %c0_i32_0 : i32, i32, i32
  }
  func.func @transform_1(%arg0: i32) -> (i32, i32) {
    %c0_i32 = arith.constant 0 : i32
    %c0_i32_0 = arith.constant 0 : i32
    %c0_i32_1 = arith.constant 0 : i32
    return %c0_i32, %c0_i32_0 : i32, i32
  }
  func.func @transform_2(%arg0: i32) -> (i32, i32) {
    %c0_i32 = arith.constant 0 : i32
    %c0_i32_0 = arith.constant 0 : i32
    %c0_i32_1 = arith.constant 0 : i32
    return %c0_i32, %c0_i32_0 : i32, i32
  }
  func.func @transform_3(%arg0: i32) -> (i32, i32, i32) {
    %c0_i32 = arith.constant 0 : i32
    %c0_i32_0 = arith.constant 0 : i32
    %c0_i32_1 = arith.constant 0 : i32
    %c0_i32_2 = arith.constant 0 : i32
    return %c0_i32, %c0_i32_0, %c0_i32_1 : i32, i32, i32
  }
  func.func @transform_4(%arg0: i32) -> (i32, i32) {
    %c0_i32 = arith.constant 0 : i32
    %c0_i32_0 = arith.constant 0 : i32
    %c0_i32_1 = arith.constant 0 : i32
    return %c0_i32, %c0_i32_0 : i32, i32
  }
  func.func @transform_5(%arg0: i32) -> (i32, i32, i32) {
    %c0_i32 = arith.constant 0 : i32
    %c0_i32_0 = arith.constant 0 : i32
    %c0_i32_1 = arith.constant 0 : i32
    %c0_i32_2 = arith.constant 0 : i32
    return %c0_i32, %c0_i32_0, %c0_i32_1 : i32, i32, i32
  }
  func.func @transform_6(%arg0: i32) -> (i32, i32, i32) {
    %c0_i32 = arith.constant 0 : i32
    %c0_i32_0 = arith.constant 0 : i32
    %c0_i32_1 = arith.constant 0 : i32
    return %arg0, %c0_i32, %c0_i32_0 : i32, i32, i32
  }
}

</mosaic_0001>

<llo_original>
// kernel: tpu_custom_call.1
$region0: #{tpu_custom_call.1}
  #allocation0 [shape = 'u32[]', space=smem, size = 0x4, offset = 0x4, fixed_abs, tag = 'smem constant byte address 0x4 - core index']
  #allocation1 [shape = 'u32[144,128]{1,0:T(1,128)}', space=vmem, size = 0x12000, scoped, tag = 'internal scratch']
  %s0 = inlined_call_operand.vmem [shape: f32[4,8,16], index: 0, kind: input, shape index: {}]
  %s1 = inlined_call_operand.vmem [shape: f32[8,64], index: 1, kind: input, shape index: {}]
  %s2 = inlined_call_operand.vmem [shape: bf16[16,64], index: 2, kind: input, shape index: {}]
  %s3 = inlined_call_operand.vmem [shape: bf16[3,128,192], index: 3, kind: input, shape index: {}]
  %s4 = inlined_call_operand.vmem [shape: bf16[256,128], index: 4, kind: input, shape index: {}]
  %s5 = inlined_call_operand.vmem [shape: f32[20,1,192], index: 5, kind: input, shape index: {}]
  %s6 = inlined_call_operand.vmem [shape: f32[2,2,1], index: 6, kind: output, shape index: {}]
  %s7 = sld [smem:[#allocation0]]
  $region57: #{tpu_custom_call.1} parent=0
    _
  %s9 = ssub.s32 1, %s7
  %s10 = scalar_select 0, %s9, %s7
  loop: start=0, step=1, limit=4
  $region2: #{tpu_custom_call.1} parent=0 // loop_pre_header
    _
  $region3: #{tpu_custom_call.1} parent=0 // loop_header
    %s12 = sphi 0, %s16
    %p13 = scmp.ge.s32.totalorder %s12, 4
    %s22 = sphi 0, %s24
    %s25 = sphi 0, %s22
    %s26 = sphi 0, %s25
    %s42 = sphi 0, %s26
    %s46 = sphi 0, %s46
    %s48 = sphi 0, %s46
    %s49 = sphi 0, %s48
    %s63 = sphi 0, %s49
    %s67 = sphi 0, %s67
    %s69 = sphi 0, %s67
    %s70 = sphi 0, %s69
    %s84 = sphi 0, %s70
    %s88 = sphi 0, %s88
    %s90 = sphi 0, %s88
    %s91 = sphi 0, %s90
    %s105 = sphi 0, %s91
    %s109 = sphi 0, %s109
    %s111 = sphi 0, %s109
    %s112 = sphi 0, %s111
    %s126 = sphi 0, %s112
    %s130 = sphi 0, %s130
    %s132 = sphi 0, %s130
    %s133 = sphi 0, %s132
    %s147 = sphi 0, %s133
    %s153 = sphi 0, %s155
    %s156 = sphi 0, %s153
    %s157 = sphi 0, %s156
    %s173 = sphi 0, %s157
  $region4: #{tpu_custom_call.1} parent=0 // loop_header_branch
    %15 = sbr.rel (%p13) target = $region8
  $region5: #{tpu_custom_call.1} parent=0 // loop_body
    %s17 = ssub.s32 %s12, 1
    %s18 = ssub.s32 %s12, 2
    %s19 = sadd.s32 %s12, 1
    %s20 = ssub.s32 %s12, %s19
    %p21 = scmp.eq.s32.totalorder %s20, 0
    %s23 = sadd.s32 %s22, 1
    %s24 = scalar_select %p21, %s22, %s23
    %p27 = pneg %p21
    %p28 = scmp.eq.s32.totalorder %s12, 1
    %p29 = por %p27, %p28
    %p30 = scmp.ne.s32.totalorder %s22, %s25
    %p31 = scmp.eq.s32.totalorder %s12, 0
    %p32 = por %p30, %p31
    %p33 = scmp.ne.s32.totalorder %s22, %s25
    %p34 = scmp.eq.s32.totalorder %s17, 1
    %p35 = por %p33, %p34
    %p36 = scmp.ne.s32.totalorder %s25, %s26
    %p37 = scmp.eq.s32.totalorder %s17, 0
    %p38 = por %p36, %p37
    %p39 = scmp.ne.s32.totalorder %s25, %s26
    %p40 = scmp.eq.s32.totalorder %s18, 1
    %p41 = por %p39, %p40
    %p43 = scmp.ne.s32.totalorder %s26, %s42
    %p44 = scmp.eq.s32.totalorder %s18, 0
    %p45 = por %p43, %p44
    %s47 = sadd.s32 %s46, 1
    %p50 = scmp.eq.s32.totalorder %s12, 1
    %p51 = scmp.ne.s32.totalorder %s46, %s48
    %p52 = scmp.eq.s32.totalorder %s12, 0
    %p53 = por %p51, %p52
    %p54 = scmp.ne.s32.totalorder %s46, %s48
    %p55 = scmp.eq.s32.totalorder %s17, 1
    %p56 = por %p54, %p55
    %p57 = scmp.ne.s32.totalorder %s48, %s49
    %p58 = scmp.eq.s32.totalorder %s17, 0
    %p59 = por %p57, %p58
    %p60 = scmp.ne.s32.totalorder %s48, %s49
    %p61 = scmp.eq.s32.totalorder %s18, 1
    %p62 = por %p60, %p61
    %p64 = scmp.ne.s32.totalorder %s49, %s63
    %p65 = scmp.eq.s32.totalorder %s18, 0
    %p66 = por %p64, %p65
    %s68 = sadd.s32 %s67, 1
    %p71 = scmp.eq.s32.totalorder %s12, 1
    %p72 = scmp.ne.s32.totalorder %s67, %s69
    %p73 = scmp.eq.s32.totalorder %s12, 0
    %p74 = por %p72, %p73
    %p75 = scmp.ne.s32.totalorder %s67, %s69
    %p76 = scmp.eq.s32.totalorder %s17, 1
    %p77 = por %p75, %p76
    %p78 = scmp.ne.s32.totalorder %s69, %s70
    %p79 = scmp.eq.s32.totalorder %s17, 0
    %p80 = por %p78, %p79
    %p81 = scmp.ne.s32.totalorder %s69, %s70
    %p82 = scmp.eq.s32.totalorder %s18, 1
    %p83 = por %p81, %p82
    %p85 = scmp.ne.s32.totalorder %s70, %s84
    %p86 = scmp.eq.s32.totalorder %s18, 0
    %p87 = por %p85, %p86
    %s89 = sadd.s32 %s88, 1
    %p92 = scmp.eq.s32.totalorder %s12, 1
    %p93 = scmp.ne.s32.totalorder %s88, %s90
    %p94 = scmp.eq.s32.totalorder %s12, 0
    %p95 = por %p93, %p94
    %p96 = scmp.ne.s32.totalorder %s88, %s90
    %p97 = scmp.eq.s32.totalorder %s17, 1
    %p98 = por %p96, %p97
    %p99 = scmp.ne.s32.totalorder %s90, %s91
    %p100 = scmp.eq.s32.totalorder %s17, 0
    %p101 = por %p99, %p100
    %p102 = scmp.ne.s32.totalorder %s90, %s91
    %p103 = scmp.eq.s32.totalorder %s18, 1
    %p104 = por %p102, %p103
    %p106 = scmp.ne.s32.totalorder %s91, %s105
    %p107 = scmp.eq.s32.totalorder %s18, 0
    %p108 = por %p106, %p107
    %s110 = sadd.s32 %s109, 1
    %p113 = scmp.eq.s32.totalorder %s12, 1
    %p114 = scmp.ne.s32.totalorder %s109, %s111
    %p115 = scmp.eq.s32.totalorder %s12, 0
    %p116 = por %p114, %p115
    %p117 = scmp.ne.s32.totalorder %s109, %s111
    %p118 = scmp.eq.s32.totalorder %s17, 1
    %p119 = por %p117, %p118
    %p120 = scmp.ne.s32.totalorder %s111, %s112
    %p121 = scmp.eq.s32.totalorder %s17, 0
    %p122 = por %p120, %p121
    %p123 = scmp.ne.s32.totalorder %s111, %s112
    %p124 = scmp.eq.s32.totalorder %s18, 1
    %p125 = por %p123, %p124
    %p127 = scmp.ne.s32.totalorder %s112, %s126
    %p128 = scmp.eq.s32.totalorder %s18, 0
    %p129 = por %p127, %p128
    %s131 = sadd.s32 %s130, 1
    %p134 = scmp.eq.s32.totalorder %s12, 1
    %p135 = scmp.ne.s32.totalorder %s130, %s132
    %p136 = scmp.eq.s32.totalorder %s12, 0
    %p137 = por %p135, %p136
    %p138 = scmp.ne.s32.totalorder %s130, %s132
    %p139 = scmp.eq.s32.totalorder %s17, 1
    %p140 = por %p138, %p139
    %p141 = scmp.ne.s32.totalorder %s132, %s133
    %p142 = scmp.eq.s32.totalorder %s17, 0
    %p143 = por %p141, %p142
    %p144 = scmp.ne.s32.totalorder %s132, %s133
    %p145 = scmp.eq.s32.totalorder %s18, 1
    %p146 = por %p144, %p145
    %p148 = scmp.ne.s32.totalorder %s133, %s147
    %p149 = scmp.eq.s32.totalorder %s18, 0
    %p150 = por %p148, %p149
    %s151 = ssub.s32 %s12, %s19
    %p152 = scmp.eq.s32.totalorder %s151, 0
    %s154 = sadd.s32 %s153, 1
    %s155 = scalar_select %p152, %s153, %s154
    %p158 = pneg %p152
    %p159 = scmp.eq.s32.totalorder %s12, 1
    %p160 = por %p158, %p159
    %p161 = scmp.ne.s32.totalorder %s153, %s156
    %p162 = scmp.eq.s32.totalorder %s12, 0
    %p163 = por %p161, %p162
    %p164 = scmp.ne.s32.totalorder %s153, %s156
    %p165 = scmp.eq.s32.totalorder %s17, 1
    %p166 = por %p164, %p165
    %p167 = scmp.ne.s32.totalorder %s156, %s157
    %p168 = scmp.eq.s32.totalorder %s17, 0
    %p169 = por %p167, %p168
    %p170 = scmp.ne.s32.totalorder %s156, %s157
    %p171 = scmp.eq.s32.totalorder %s18, 1
    %p172 = por %p170, %p171
    %p174 = scmp.ne.s32.totalorder %s157, %s173
    %p175 = scmp.eq.s32.totalorder %s18, 0
    %p176 = por %p174, %p175
    %p177 = scmp.le.s32.totalorder 1, %s12
    %p178 = scmp.lt.s32.totalorder %s12, 3
    %p179 = pnand %p177, %p178
    %p180 = pneg %p179
    // Predicated region
    $region9: #{tpu_custom_call.1} parent=5 // pred_check
      _
    $region10: #{tpu_custom_call.1} parent=5 // pred_check_branch
      %182 = sbr.rel (%p179) target = $region12
    $region11: #{tpu_custom_call.1} parent=5 // pred_region
      %s183 = ssub.s32 %s12, 1
      // Predicated region
      $region13: #{tpu_custom_call.1} parent=11 // pred_check
        %p184 = pneg %p59
      $region14: #{tpu_custom_call.1} parent=11 // pred_check_branch
        %186 = sbr.rel (%p184) target = $region16
      $region15: #{tpu_custom_call.1} parent=11 // pred_region
        _
      $region16: #{tpu_custom_call.1} parent=11 // pred_fallthru
        _
      // Predicated region
      $region17: #{tpu_custom_call.1} parent=11 // pred_check
        %p187 = pneg %p80
      $region18: #{tpu_custom_call.1} parent=11 // pred_check_branch
        %189 = sbr.rel (%p187) target = $region20
      $region19: #{tpu_custom_call.1} parent=11 // pred_region
        _
      $region20: #{tpu_custom_call.1} parent=11 // pred_fallthru
        _
      // Predicated region
      $region21: #{tpu_custom_call.1} parent=11 // pred_check
        %p190 = pneg %p101
      $region22: #{tpu_custom_call.1} parent=11 // pred_check_branch
        %192 = sbr.rel (%p190) target = $region24
      $region23: #{tpu_custom_call.1} parent=11 // pred_region
        _
      $region24: #{tpu_custom_call.1} parent=11 // pred_fallthru
        _
      // Predicated region
      $region25: #{tpu_custom_call.1} parent=11 // pred_check
        %p193 = pneg %p122
      $region26: #{tpu_custom_call.1} parent=11 // pred_check_branch
        %195 = sbr.rel (%p193) target = $region28
      $region27: #{tpu_custom_call.1} parent=11 // pred_region
        _
      $region28: #{tpu_custom_call.1} parent=11 // pred_fallthru
        _
      // Predicated region
      $region29: #{tpu_custom_call.1} parent=11 // pred_check
        %p196 = pneg %p143
      $region30: #{tpu_custom_call.1} parent=11 // pred_check_branch
        %198 = sbr.rel (%p196) target = $region32
      $region31: #{tpu_custom_call.1} parent=11 // pred_region
        _
      $region32: #{tpu_custom_call.1} parent=11 // pred_fallthru
        _
    $region12: #{tpu_custom_call.1} parent=5 // pred_fallthru
      _
    %p199 = scmp.lt.s32.totalorder %s12, 2
    // Predicated region
    $region33: #{tpu_custom_call.1} parent=5 // pred_check
      %p200 = pneg %p199
    $region34: #{tpu_custom_call.1} parent=5 // pred_check_branch
      %202 = sbr.rel (%p200) target = $region36
    $region35: #{tpu_custom_call.1} parent=5 // pred_region
      // Predicated region
      $region37: #{tpu_custom_call.1} parent=35 // pred_check
        %p203 = pneg %p32
      $region38: #{tpu_custom_call.1} parent=35 // pred_check_branch
        %205 = sbr.rel (%p203) target = $region40
      $region39: #{tpu_custom_call.1} parent=35 // pred_region
        %s206 = smul.u32 2, %s12
        %p207 = scmp.lt.s32.totalorder %s206, 3
        %s208 = scalar_select %p207, %s206, 3
        %s209 = smul.addr %s208, 8
        %s210 = scalar_lea.vmem %s0, %s209
        %s211 = smul.u32 2, %s12
      $region40: #{tpu_custom_call.1} parent=35 // pred_fallthru
        _
    $region36: #{tpu_custom_call.1} parent=5 // pred_fallthru
      _
    %p212 = scmp.le.s32.totalorder 1, %s12
    %p213 = scmp.lt.s32.totalorder %s12, 3
    %p214 = pnand %p212, %p213
    %p215 = pneg %p214
    // Predicated region
    $region41: #{tpu_custom_call.1} parent=5 // pred_check
      _
    $region42: #{tpu_custom_call.1} parent=5 // pred_check_branch
      %217 = sbr.rel (%p214) target = $region44
    $region43: #{tpu_custom_call.1} parent=5 // pred_region
      %s218 = ssub.s32 %s12, 1
      %s219 = smul.u32 2, %s17
      %p220 = scmp.lt.s32.totalorder %s219, 3
      %s221 = scalar_select %p220, %s219, 3
      %s222 = smul.addr %s221, 8
      %s223 = scalar_lea.vmem %s0, %s222
      %p224 = pneg %p38
      %p225 = pneg %p35
      %p226 = pneg %p59
      %p227 = pneg %p56
      %p228 = pneg %p80
      %p229 = pneg %p77
      %p230 = pneg %p101
      %p231 = pneg %p98
      %p232 = pneg %p122
      %p233 = pneg %p119
      %p234 = pneg %p143
      %p235 = pneg %p140
      %p236 = pneg %p169
      %p237 = pneg %p166
      %p238 = scmp.lt.s32.totalorder %s17, 1
      %s239 = scalar_select %p238, %s17, 1
      %s240 = smul.addr %s239, 2
      %s241 = scalar_lea.vmem %s6, %s240
      %s242 = smul.u32 2, %s17
      %p243 = scmp.lt.s32.totalorder %s242, 3
      %s244 = scalar_select %p243, %s242, 3
      %s245 = smul.addr %s244, 8
      %s246 = scalar_lea.vmem %s0, %s245
      %s247 = smul.u32 2, %s17
      %p248 = scmp.lt.s32.totalorder %s17, 1
      %s249 = scalar_select %p248, %s17, 1
      %s250 = smul.addr %s249, 2
      %s251 = scalar_lea.vmem %s6, %s250
      %v253 = vld [vmem:[%s246] sm:$0xff]
      %v254 = vld [vmem:[%s246 + $0x8] sm:$0xff]
      %v255 = vld [vmem:[%s1] sm:$0xff]
      %v256 = vld [vmem:[%s5] sm:$0x3]
      %v257 = vld [vmem:[%s4] sm:$0xf]
      %v258 = vld [vmem:[%s4 + $0x4] sm:$0xf]
      %v259 = vld [vmem:[%s4 + $0x8] sm:$0xf]
      %v260 = vld [vmem:[%s4 + $0xc] sm:$0xf]
      %v261 = vld [vmem:[%s4 + $0x10] sm:$0xf]
      %v262 = vld [vmem:[%s4 + $0x14] sm:$0xf]
      %v263 = vld [vmem:[%s4 + $0x18] sm:$0xf]
      %v264 = vld [vmem:[%s4 + $0x1c] sm:$0xf]
      %v265 = vld [vmem:[%s4 + $0x20] sm:$0xf]
      %v266 = vld [vmem:[%s4 + $0x24] sm:$0xf]
      %v267 = vld [vmem:[%s4 + $0x28] sm:$0xf]
      %v268 = vld [vmem:[%s4 + $0x2c] sm:$0xf]
      %v269 = vld [vmem:[%s4 + $0x30] sm:$0xf]
      %v270 = vld [vmem:[%s4 + $0x34] sm:$0xf]
      %v271 = vld [vmem:[%s4 + $0x38] sm:$0xf]
      %v272 = vld [vmem:[%s4 + $0x3c] sm:$0xf]
      %v273 = vld [vmem:[%s4 + $0x40] sm:$0xf]
      %v274 = vld [vmem:[%s4 + $0x44] sm:$0xf]
      %v275 = vld [vmem:[%s4 + $0x48] sm:$0xf]
      %v276 = vld [vmem:[%s4 + $0x4c] sm:$0xf]
      %v277 = vld [vmem:[%s4 + $0x50] sm:$0xf]
      %v278 = vld [vmem:[%s4 + $0x54] sm:$0xf]
      %v279 = vld [vmem:[%s4 + $0x58] sm:$0xf]
      %v280 = vld [vmem:[%s4 + $0x5c] sm:$0xf]
      %v281 = vld [vmem:[%s4 + $0x60] sm:$0xf]
      %v282 = vld [vmem:[%s4 + $0x64] sm:$0xf]
      %v283 = vld [vmem:[%s4 + $0x68] sm:$0xf]
      %v284 = vld [vmem:[%s4 + $0x6c] sm:$0xf]
      %v285 = vld [vmem:[%s4 + $0x70] sm:$0xf]
      %v286 = vld [vmem:[%s4 + $0x74] sm:$0xf]
      %v287 = vld [vmem:[%s4 + $0x78] sm:$0xf]
      %v288 = vld [vmem:[%s4 + $0x7c] sm:$0xf]
      %s289 = scalar_lea.vmem %s5, 26
      %v290 = vld [vmem:[%s289] sm:$0x3]
      %s291 = scalar_lea.vmem %s5, 28
      %v292 = vld [vmem:[%s291] sm:$0x3]
      %s293 = scalar_lea.vmem %s5, 30
      %v294 = vld [vmem:[%s293] sm:$0x3]
      %s295 = scalar_lea.vmem %s5, 32
      %v296 = vld [vmem:[%s295] sm:$0x3]
      %s297 = scalar_lea.vmem %s5, 34
      %v298 = vld [vmem:[%s297] sm:$0x3]
      %s299 = scalar_lea.vmem %s5, 36
      %v300 = vld [vmem:[%s299] sm:$0x3]
      %s301 = scalar_lea.vmem %s5, 38
      %v302 = vld [vmem:[%s301] sm:$0x3]
      %v303 = vld [vmem:[%s2] sm:$0xf]
      %v304 = vld [vmem:[%s2 + $0x4] sm:$0xf]
      %v305 = vpack.c.bf16 %v254, %v253
      %v307 = vlaneseq
      %v308 = vshrl.u32 %v307, 7
      %v309 = vsub.s32 0, %v308
      %v310 = vrot.slane %v256, %v309
      %v314 = vunpack.c.l.b16 %v303
      %v315 = vunpack.c.l.b16 %v304
      %v316 = vpack.c.b16 %v315, %v314
      %vm318 = vcmask 130048
      %v320 = vsel %vm318, %v305, 0
      %322 = vmatprep.subr.bf16.mxu0 0
      %323 = vmatpush1.bf16.msra.mxu0 0
      %324 = vmatprep.subr.bf16.mxu0 0
      %325 = vmatpush1.bf16.msra.mxu0 0
      %326 = vmatprep.subr.bf16.mxu0 0
      %327 = vmatpush1.bf16.msra.mxu0 0
      %328 = vmatprep.subr.bf16.mxu0 0
      %329 = vmatpush1.bf16.msra.mxu0 0
      %330 = vmatprep.subr.bf16.mxu0 0
      %331 = vmatpush1.bf16.msra.mxu0 0
      %332 = vmatprep.subr.bf16.mxu0 0
      %333 = vmatpush1.bf16.msra.mxu0 0
      %334 = vmatprep.subr.bf16.mxu0 0
      %335 = vmatpush1.bf16.msra.mxu0 0
      %336 = vmatprep.subr.bf16.mxu0 0
      %337 = vmatpush1.bf16.msra.mxu0 %v316
      %338 = vmatprep.subr.bf16.mxu0 0
      %339 = vmatpush2.bf16.msra.mxu0 0
      %340 = vmatprep.subr.bf16.mxu0 0
      %341 = vmatpush2.bf16.msra.mxu0 0
      %342 = vmatprep.subr.bf16.mxu0 0
      %343 = vmatpush2.bf16.msra.mxu0 0
      %344 = vmatprep.subr.bf16.mxu0 0
      %345 = vmatpush2.bf16.msra.mxu0 0
      %346 = vmatprep.subr.bf16.mxu0 0
      %347 = vmatpush2.bf16.msra.mxu0 0
      %348 = vmatprep.subr.bf16.mxu0 0
      %349 = vmatpush2.bf16.msra.mxu0 0
      %350 = vmatprep.subr.bf16.mxu0 0
      %351 = vmatpush2.bf16.msra.mxu0 0
      %352 = vmatprep.subr.bf16.mxu0 0
      %353 = vmatpush2.bf16.msra.mxu0 0
      %354 = vmatprep.mubr.bf16.mxu0 0
      %355 = vmatmul.mubr.bf16.gmra.mxu0 %v320
      %v356 = vpop.f32.mrf.mxu0
      %v357 = vadd.f32 %v310, %v356
      %v358 = vpop.f32.mrf.mxu0
      %v359 = vpop.f32.mrf.mxu0
      %v360 = vadd.f32 %v310, %v359
      %v361 = vpop.f32.mrf.mxu0
      %362 = vdwg.mxu0
      %v363 = vadd.f32 %v357, %v255
      %v364 = vadd.f32 %v360, %v255
      %v365 = vld [vmem:[%s3] sm:$0xff]
      %v366 = vld [vmem:[%s3 + $0x8] sm:$0xff]
      %v367 = vld [vmem:[%s3 + $0x10] sm:$0xff]
      %v368 = vld [vmem:[%s3 + $0x18] sm:$0xff]
      %v369 = vld [vmem:[%s3 + $0x20] sm:$0xff]
      %v370 = vld [vmem:[%s3 + $0x28] sm:$0xff]
      %v371 = vld [vmem:[%s3 + $0x30] sm:$0xff]
      %v372 = vld [vmem:[%s3 + $0x38] sm:$0xff]
      %v373 = vld [vmem:[%s3 + $0x40] sm:$0xff]
      %v374 = vld [vmem:[%s3 + $0x48] sm:$0xff]
      %v375 = vld [vmem:[%s3 + $0x50] sm:$0xff]
      %v376 = vld [vmem:[%s3 + $0x58] sm:$0xff]
      %v377 = vld [vmem:[%s3 + $0x60] sm:$0xff]
      %v378 = vld [vmem:[%s3 + $0x68] sm:$0xff]
      %v379 = vld [vmem:[%s3 + $0x70] sm:$0xff]
      %v380 = vld [vmem:[%s3 + $0x78] sm:$0xff]
      %s381 = scalar_lea.vmem %s5, 2
      %v382 = vld [vmem:[%s381] sm:$0x3]
      %s383 = scalar_lea.vmem %s5, 8
      %v384 = vld [vmem:[%s383] sm:$0x3]
      %s385 = scalar_lea.vmem %s5, 14
      %v386 = vld [vmem:[%s385] sm:$0x3]
      %s387 = scalar_lea.vmem %s5, 20
      %v388 = vld [vmem:[%s387] sm:$0x3]
      %v389 = vpack.c.bf16 %v364, %v363
      %v391 = vlaneseq
      %v392 = vshrl.u32 %v391, 7
      %v393 = vsub.s32 0, %v392
      %v394 = vrot.slane %v382, %v393
      %v395 = vlaneseq
      %v396 = vshrl.u32 %v395, 7
      %v397 = vsub.s32 1, %v396
      %v398 = vrot.slane %v382, %v397
      %v409 = vunpack.c.l.b16 %v365
      %v410 = vunpack.c.h.b16 %v365
      %v411 = vunpack.c.l.b16 %v366
      %v412 = vunpack.c.h.b16 %v366
      %v413 = vunpack.c.l.b16 %v367
      %v414 = vunpack.c.h.b16 %v367
      %v415 = vunpack.c.l.b16 %v368
      %v416 = vunpack.c.h.b16 %v368
      %v417 = vunpack.c.l.b16 %v369
      %v418 = vunpack.c.h.b16 %v369
      %v419 = vunpack.c.l.b16 %v370
      %v420 = vunpack.c.h.b16 %v370
      %v421 = vunpack.c.l.b16 %v371
      %v422 = vunpack.c.h.b16 %v371
      %v423 = vunpack.c.l.b16 %v372
      %v424 = vunpack.c.h.b16 %v372
      %v425 = vpack.c.b16 %v411, %v409
      %v426 = vpack.c.b16 %v412, %v410
      %v427 = vpack.c.b16 %v415, %v413
      %v428 = vpack.c.b16 %v416, %v414
      %v429 = vpack.c.b16 %v419, %v417
      %v430 = vpack.c.b16 %v420, %v418
      %v431 = vpack.c.b16 %v423, %v421
      %v432 = vpack.c.b16 %v424, %v422
      %vm441 = vcmask 523264
      %v443 = vsel %vm441, %v389, 0
      %445 = vmatprep.subr.bf16.mxu0 0
      %446 = vmatpush1.bf16.msra.mxu0 0
      %447 = vmatprep.subr.bf16.mxu0 0
      %448 = vmatpush1.bf16.msra.mxu0 0
      %449 = vmatprep.subr.bf16.mxu0 0
      %450 = vmatpush1.bf16.msra.mxu0 0
      %451 = vmatprep.subr.bf16.mxu0 0
      %452 = vmatpush1.bf16.msra.mxu0 0
      %453 = vmatprep.subr.bf16.mxu0 %v432
      %454 = vmatpush1.bf16.msra.mxu0 %v431
      %455 = vmatprep.subr.bf16.mxu0 %v430
      %456 = vmatpush1.bf16.msra.mxu0 %v429
      %457 = vmatprep.subr.bf16.mxu0 %v428
      %458 = vmatpush1.bf16.msra.mxu0 %v427
      %459 = vmatprep.subr.bf16.mxu0 %v426
      %460 = vmatpush1.bf16.msra.mxu0 %v425
      %461 = vmatprep.subr.bf16.mxu0 0
      %462 = vmatpush2.bf16.msra.mxu0 0
      %463 = vmatprep.subr.bf16.mxu0 0
      %464 = vmatpush2.bf16.msra.mxu0 0
      %465 = vmatprep.subr.bf16.mxu0 0
      %466 = vmatpush2.bf16.msra.mxu0 0
      %467 = vmatprep.subr.bf16.mxu0 0
      %468 = vmatpush2.bf16.msra.mxu0 0
      %469 = vmatprep.subr.bf16.mxu0 0
      %470 = vmatpush2.bf16.msra.mxu0 0
      %471 = vmatprep.subr.bf16.mxu0 0
      %472 = vmatpush2.bf16.msra.mxu0 0
      %473 = vmatprep.subr.bf16.mxu0 0
      %474 = vmatpush2.bf16.msra.mxu0 0
      %475 = vmatprep.subr.bf16.mxu0 0
      %476 = vmatpush2.bf16.msra.mxu0 0
      %477 = vmatprep.mubr.bf16.mxu0 0
      %478 = vmatmul.mubr.bf16.gmra.mxu0 %v443
      %v479 = vpop.f32.mrf.mxu0
      %v480 = vadd.f32 %v394, %v479
      %v481 = vpop.f32.mrf.mxu0
      %v482 = vadd.f32 %v398, %v481
      %v483 = vpop.f32.mrf.mxu0
      %v484 = vadd.f32 %v394, %v483
      %v485 = vpop.f32.mrf.mxu0
      %v486 = vadd.f32 %v398, %v485
      %487 = vdwg.mxu0
      %v488 = vpack.c.bf16 %v480, %v480
      %v489 = vpack.c.bf16 %v484, %v484
      %491 = vrot.lane.b32.xlu0 %v488, 64
      %v492 = vpop.permute.xlu0 %491
      %v494 = vsel %vm318, %v488, 0
      %v497 = vsel %vm318, %v492, 0
      %499 = vmatprep.subr.bf16.mxu0 0
      %500 = vmatpush1.bf16.xpose.msra.mxu0 0
      %501 = vmatprep.subr.bf16.mxu0 0
      %502 = vmatpush1.bf16.xpose.msra.mxu0 0
      %503 = vmatprep.subr.bf16.mxu0 0
      %504 = vmatpush1.bf16.xpose.msra.mxu0 0
      %505 = vmatprep.subr.bf16.mxu0 0
      %506 = vmatpush1.bf16.xpose.msra.mxu0 0
      %507 = vmatprep.subr.bf16.mxu0 0
      %508 = vmatpush1.bf16.xpose.msra.mxu0 0
      %509 = vmatprep.subr.bf16.mxu0 0
      %510 = vmatpush1.bf16.xpose.msra.mxu0 0
      %511 = vmatprep.subr.bf16.mxu0 0
      %512 = vmatpush1.bf16.xpose.msra.mxu0 0
      %513 = vmatprep.subr.bf16.mxu0 0
      %514 = vmatpush1.bf16.xpose.msra.mxu0 %v497
      %515 = vmatprep.subr.bf16.mxu0 0
      %516 = vmatpush2.bf16.xpose.msra.mxu0 0
      %517 = vmatprep.subr.bf16.mxu0 0
      %518 = vmatpush2.bf16.xpose.msra.mxu0 0
      %519 = vmatprep.subr.bf16.mxu0 0
      %520 = vmatpush2.bf16.xpose.msra.mxu0 0
      %521 = vmatprep.subr.bf16.mxu0 0
      %522 = vmatpush2.bf16.xpose.msra.mxu0 0
      %523 = vmatprep.subr.bf16.mxu0 0
      %524 = vmatpush2.bf16.xpose.msra.mxu0 0
      %525 = vmatprep.subr.bf16.mxu0 0
      %526 = vmatpush2.bf16.xpose.msra.mxu0 0
      %527 = vmatprep.subr.bf16.mxu0 0
      %528 = vmatpush2.bf16.xpose.msra.mxu0 0
      %529 = vmatprep.subr.bf16.mxu0 0
      %530 = vmatpush2.bf16.xpose.msra.mxu0 0
      %531 = vmatprep.mubr.bf16.mxu0 0
      %532 = vmatmul.mubr.bf16.gmra.mxu0 %v494
      %v533 = vpop.f32.mrf.mxu0
      %v534 = vadd.f32 0.0, %v533
      %v535 = vpop.f32.mrf.mxu0
      %v536 = vpop.f32.mrf.mxu0
      %v537 = vpop.f32.mrf.mxu0
      %538 = vdwg.mxu0
      %540 = vrot.lane.b32.xlu0 %v489, 64
      %v541 = vpop.permute.xlu0 %540
      %v543 = vsel %vm318, %v489, 0
      %v546 = vsel %vm318, %v541, 0
      %548 = vmatprep.subr.bf16.mxu0 0
      %549 = vmatpush1.bf16.xpose.msra.mxu0 0
      %550 = vmatprep.subr.bf16.mxu0 0
      %551 = vmatpush1.bf16.xpose.msra.mxu0 0
      %552 = vmatprep.subr.bf16.mxu0 0
      %553 = vmatpush1.bf16.xpose.msra.mxu0 0
      %554 = vmatprep.subr.bf16.mxu0 0
      %555 = vmatpush1.bf16.xpose.msra.mxu0 0
      %556 = vmatprep.subr.bf16.mxu0 0
      %557 = vmatpush1.bf16.xpose.msra.mxu0 0
      %558 = vmatprep.subr.bf16.mxu0 0
      %559 = vmatpush1.bf16.xpose.msra.mxu0 0
      %560 = vmatprep.subr.bf16.mxu0 0
      %561 = vmatpush1.bf16.xpose.msra.mxu0 0
      %562 = vmatprep.subr.bf16.mxu0 0
      %563 = vmatpush1.bf16.xpose.msra.mxu0 %v546
      %564 = vmatprep.subr.bf16.mxu0 0
      %565 = vmatpush2.bf16.xpose.msra.mxu0 0
      %566 = vmatprep.subr.bf16.mxu0 0
      %567 = vmatpush2.bf16.xpose.msra.mxu0 0
      %568 = vmatprep.subr.bf16.mxu0 0
      %569 = vmatpush2.bf16.xpose.msra.mxu0 0
      %570 = vmatprep.subr.bf16.mxu0 0
      %571 = vmatpush2.bf16.xpose.msra.mxu0 0
      %572 = vmatprep.subr.bf16.mxu0 0
      %573 = vmatpush2.bf16.xpose.msra.mxu0 0
      %574 = vmatprep.subr.bf16.mxu0 0
      %575 = vmatpush2.bf16.xpose.msra.mxu0 0
      %576 = vmatprep.subr.bf16.mxu0 0
      %577 = vmatpush2.bf16.xpose.msra.mxu0 0
      %578 = vmatprep.subr.bf16.mxu0 0
      %579 = vmatpush2.bf16.xpose.msra.mxu0 0
      %580 = vmatprep.mubr.bf16.mxu0 0
      %581 = vmatmul.mubr.bf16.gmra.mxu0 %v543
      %v582 = vpop.f32.mrf.mxu0
      %v583 = vadd.f32 0.0, %v582
      %v584 = vpop.f32.mrf.mxu0
      %v585 = vpop.f32.mrf.mxu0
      %v586 = vpop.f32.mrf.mxu0
      %587 = vdwg.mxu0
      %588 = vrot.lane.b32.xlu0 %v488, 112
      %v589 = vpop.permute.xlu0 %588
      %590 = vrot.lane.b32.xlu0 %v488, 48
      %v591 = vpop.permute.xlu0 %590
      %v593 = vsel %vm318, %v589, 0
      %v596 = vsel %vm318, %v591, 0
      %598 = vmatprep.subr.bf16.mxu0 0
      %599 = vmatpush1.bf16.xpose.msra.mxu0 0
      %600 = vmatprep.subr.bf16.mxu0 0
      %601 = vmatpush1.bf16.xpose.msra.mxu0 0
      %602 = vmatprep.subr.bf16.mxu0 0
      %603 = vmatpush1.bf16.xpose.msra.mxu0 0
      %604 = vmatprep.subr.bf16.mxu0 0
      %605 = vmatpush1.bf16.xpose.msra.mxu0 0
      %606 = vmatprep.subr.bf16.mxu0 0
      %607 = vmatpush1.bf16.xpose.msra.mxu0 0
      %608 = vmatprep.subr.bf16.mxu0 0
      %609 = vmatpush1.bf16.xpose.msra.mxu0 0
      %610 = vmatprep.subr.bf16.mxu0 0
      %611 = vmatpush1.bf16.xpose.msra.mxu0 0
      %612 = vmatprep.subr.bf16.mxu0 0
      %613 = vmatpush1.bf16.xpose.msra.mxu0 %v596
      %614 = vmatprep.subr.bf16.mxu0 0
      %615 = vmatpush2.bf16.xpose.msra.mxu0 0
      %616 = vmatprep.subr.bf16.mxu0 0
      %617 = vmatpush2.bf16.xpose.msra.mxu0 0
      %618 = vmatprep.subr.bf16.mxu0 0
      %619 = vmatpush2.bf16.xpose.msra.mxu0 0
      %620 = vmatprep.subr.bf16.mxu0 0
      %621 = vmatpush2.bf16.xpose.msra.mxu0 0
      %622 = vmatprep.subr.bf16.mxu0 0
      %623 = vmatpush2.bf16.xpose.msra.mxu0 0
      %624 = vmatprep.subr.bf16.mxu0 0
      %625 = vmatpush2.bf16.xpose.msra.mxu0 0
      %626 = vmatprep.subr.bf16.mxu0 0
      %627 = vmatpush2.bf16.xpose.msra.mxu0 0
      %628 = vmatprep.subr.bf16.mxu0 0
      %629 = vmatpush2.bf16.xpose.msra.mxu0 0
      %630 = vmatprep.mubr.bf16.mxu0 0
      %631 = vmatmul.mubr.bf16.gmra.mxu0 %v593
      %v632 = vpop.f32.mrf.mxu0
      %v633 = vadd.f32 0.0, %v632
      %v634 = vpop.f32.mrf.mxu0
      %v635 = vpop.f32.mrf.mxu0
      %v636 = vpop.f32.mrf.mxu0
      %637 = vdwg.mxu0
      %638 = vrot.lane.b32.xlu0 %v489, 112
      %v639 = vpop.permute.xlu0 %638
      %640 = vrot.lane.b32.xlu0 %v489, 48
      %v641 = vpop.permute.xlu0 %640
      %v643 = vsel %vm318, %v639, 0
      %v646 = vsel %vm318, %v641, 0
      %648 = vmatprep.subr.bf16.mxu0 0
      %649 = vmatpush1.bf16.xpose.msra.mxu0 0
      %650 = vmatprep.subr.bf16.mxu0 0
      %651 = vmatpush1.bf16.xpose.msra.mxu0 0
      %652 = vmatprep.subr.bf16.mxu0 0
      %653 = vmatpush1.bf16.xpose.msra.mxu0 0
      %654 = vmatprep.subr.bf16.mxu0 0
      %655 = vmatpush1.bf16.xpose.msra.mxu0 0
      %656 = vmatprep.subr.bf16.mxu0 0
      %657 = vmatpush1.bf16.xpose.msra.mxu0 0
      %658 = vmatprep.subr.bf16.mxu0 0
      %659 = vmatpush1.bf16.xpose.msra.mxu0 0
      %660 = vmatprep.subr.bf16.mxu0 0
      %661 = vmatpush1.bf16.xpose.msra.mxu0 0
      %662 = vmatprep.subr.bf16.mxu0 0
      %663 = vmatpush1.bf16.xpose.msra.mxu0 %v646
      %664 = vmatprep.subr.bf16.mxu0 0
      %665 = vmatpush2.bf16.xpose.msra.mxu0 0
      %666 = vmatprep.subr.bf16.mxu0 0
      %667 = vmatpush2.bf16.xpose.msra.mxu0 0
      %668 = vmatprep.subr.bf16.mxu0 0
      %669 = vmatpush2.bf16.xpose.msra.mxu0 0
      %670 = vmatprep.subr.bf16.mxu0 0
      %671 = vmatpush2.bf16.xpose.msra.mxu0 0
      %672 = vmatprep.subr.bf16.mxu0 0
      %673 = vmatpush2.bf16.xpose.msra.mxu0 0
      %674 = vmatprep.subr.bf16.mxu0 0
      %675 = vmatpush2.bf16.xpose.msra.mxu0 0
      %676 = vmatprep.subr.bf16.mxu0 0
      %677 = vmatpush2.bf16.xpose.msra.mxu0 0
      %678 = vmatprep.subr.bf16.mxu0 0
      %679 = vmatpush2.bf16.xpose.msra.mxu0 0
      %680 = vmatprep.mubr.bf16.mxu0 0
      %681 = vmatmul.mubr.bf16.gmra.mxu0 %v643
      %v682 = vpop.f32.mrf.mxu0
      %v683 = vadd.f32 0.0, %v682
      %v684 = vpop.f32.mrf.mxu0
      %v685 = vpop.f32.mrf.mxu0
      %v686 = vpop.f32.mrf.mxu0
      %687 = vdwg.mxu0
      %688 = vrot.lane.b32.xlu0 %v488, 96
      %v689 = vpop.permute.xlu0 %688
      %690 = vrot.lane.b32.xlu0 %v488, 32
      %v691 = vpop.permute.xlu0 %690
      %v693 = vsel %vm318, %v689, 0
      %v696 = vsel %vm318, %v691, 0
      %698 = vmatprep.subr.bf16.mxu0 0
      %699 = vmatpush1.bf16.xpose.msra.mxu0 0
      %700 = vmatprep.subr.bf16.mxu0 0
      %701 = vmatpush1.bf16.xpose.msra.mxu0 0
      %702 = vmatprep.subr.bf16.mxu0 0
      %703 = vmatpush1.bf16.xpose.msra.mxu0 0
      %704 = vmatprep.subr.bf16.mxu0 0
      %705 = vmatpush1.bf16.xpose.msra.mxu0 0
      %706 = vmatprep.subr.bf16.mxu0 0
      %707 = vmatpush1.bf16.xpose.msra.mxu0 0
      %708 = vmatprep.subr.bf16.mxu0 0
      %709 = vmatpush1.bf16.xpose.msra.mxu0 0
      %710 = vmatprep.subr.bf16.mxu0 0
      %711 = vmatpush1.bf16.xpose.msra.mxu0 0
      %712 = vmatprep.subr.bf16.mxu0 0
      %713 = vmatpush1.bf16.xpose.msra.mxu0 %v696
      %714 = vmatprep.subr.bf16.mxu0 0
      %715 = vmatpush2.bf16.xpose.msra.mxu0 0
      %716 = vmatprep.subr.bf16.mxu0 0
      %717 = vmatpush2.bf16.xpose.msra.mxu0 0
      %718 = vmatprep.subr.bf16.mxu0 0
      %719 = vmatpush2.bf16.xpose.msra.mxu0 0
      %720 = vmatprep.subr.bf16.mxu0 0
      %721 = vmatpush2.bf16.xpose.msra.mxu0 0
      %722 = vmatprep.subr.bf16.mxu0 0
      %723 = vmatpush2.bf16.xpose.msra.mxu0 0
      %724 = vmatprep.subr.bf16.mxu0 0
      %725 = vmatpush2.bf16.xpose.msra.mxu0 0
      %726 = vmatprep.subr.bf16.mxu0 0
      %727 = vmatpush2.bf16.xpose.msra.mxu0 0
      %728 = vmatprep.subr.bf16.mxu0 0
      %729 = vmatpush2.bf16.xpose.msra.mxu0 0
      %730 = vmatprep.mubr.bf16.mxu0 0
      %731 = vmatmul.mubr.bf16.gmra.mxu0 %v693
      %v732 = vpop.f32.mrf.mxu0
      %v733 = vadd.f32 0.0, %v732
      %v734 = vpop.f32.mrf.mxu0
      %v735 = vpop.f32.mrf.mxu0
      %v736 = vpop.f32.mrf.mxu0
      %737 = vdwg.mxu0
      %738 = vrot.lane.b32.xlu0 %v489, 96
      %v739 = vpop.permute.xlu0 %738
      %740 = vrot.lane.b32.xlu0 %v489, 32
      %v741 = vpop.permute.xlu0 %740
      %v743 = vsel %vm318, %v739, 0
      %v746 = vsel %vm318, %v741, 0
      %748 = vmatprep.subr.bf16.mxu0 0
      %749 = vmatpush1.bf16.xpose.msra.mxu0 0
      %750 = vmatprep.subr.bf16.mxu0 0
      %751 = vmatpush1.bf16.xpose.msra.mxu0 0
      %752 = vmatprep.subr.bf16.mxu0 0
      %753 = vmatpush1.bf16.xpose.msra.mxu0 0
      %754 = vmatprep.subr.bf16.mxu0 0
      %755 = vmatpush1.bf16.xpose.msra.mxu0 0
      %756 = vmatprep.subr.bf16.mxu0 0
      %757 = vmatpush1.bf16.xpose.msra.mxu0 0
      %758 = vmatprep.subr.bf16.mxu0 0
      %759 = vmatpush1.bf16.xpose.msra.mxu0 0
      %760 = vmatprep.subr.bf16.mxu0 0
      %761 = vmatpush1.bf16.xpose.msra.mxu0 0
      %762 = vmatprep.subr.bf16.mxu0 0
      %763 = vmatpush1.bf16.xpose.msra.mxu0 %v746
      %764 = vmatprep.subr.bf16.mxu0 0
      %765 = vmatpush2.bf16.xpose.msra.mxu0 0
      %766 = vmatprep.subr.bf16.mxu0 0
      %767 = vmatpush2.bf16.xpose.msra.mxu0 0
      %768 = vmatprep.subr.bf16.mxu0 0
      %769 = vmatpush2.bf16.xpose.msra.mxu0 0
      %770 = vmatprep.subr.bf16.mxu0 0
      %771 = vmatpush2.bf16.xpose.msra.mxu0 0
      %772 = vmatprep.subr.bf16.mxu0 0
      %773 = vmatpush2.bf16.xpose.msra.mxu0 0
      %774 = vmatprep.subr.bf16.mxu0 0
      %775 = vmatpush2.bf16.xpose.msra.mxu0 0
      %776 = vmatprep.subr.bf16.mxu0 0
      %777 = vmatpush2.bf16.xpose.msra.mxu0 0
      %778 = vmatprep.subr.bf16.mxu0 0
      %779 = vmatpush2.bf16.xpose.msra.mxu0 0
      %780 = vmatprep.mubr.bf16.mxu0 0
      %781 = vmatmul.mubr.bf16.gmra.mxu0 %v743
      %v782 = vpop.f32.mrf.mxu0
      %v783 = vadd.f32 0.0, %v782
      %v784 = vpop.f32.mrf.mxu0
      %v785 = vpop.f32.mrf.mxu0
      %v786 = vpop.f32.mrf.mxu0
      %787 = vdwg.mxu0
      %788 = vrot.lane.b32.xlu0 %v488, 80
      %v789 = vpop.permute.xlu0 %788
      %790 = vrot.lane.b32.xlu0 %v488, 16
      %v791 = vpop.permute.xlu0 %790
      %v793 = vsel %vm318, %v789, 0
      %v796 = vsel %vm318, %v791, 0
      %798 = vmatprep.subr.bf16.mxu0 0
      %799 = vmatpush1.bf16.xpose.msra.mxu0 0
      %800 = vmatprep.subr.bf16.mxu0 0
      %801 = vmatpush1.bf16.xpose.msra.mxu0 0
      %802 = vmatprep.subr.bf16.mxu0 0
      %803 = vmatpush1.bf16.xpose.msra.mxu0 0
      %804 = vmatprep.subr.bf16.mxu0 0
      %805 = vmatpush1.bf16.xpose.msra.mxu0 0
      %806 = vmatprep.subr.bf16.mxu0 0
      %807 = vmatpush1.bf16.xpose.msra.mxu0 0
      %808 = vmatprep.subr.bf16.mxu0 0
      %809 = vmatpush1.bf16.xpose.msra.mxu0 0
      %810 = vmatprep.subr.bf16.mxu0 0
      %811 = vmatpush1.bf16.xpose.msra.mxu0 0
      %812 = vmatprep.subr.bf16.mxu0 0
      %813 = vmatpush1.bf16.xpose.msra.mxu0 %v796
      %814 = vmatprep.subr.bf16.mxu0 0
      %815 = vmatpush2.bf16.xpose.msra.mxu0 0
      %816 = vmatprep.subr.bf16.mxu0 0
      %817 = vmatpush2.bf16.xpose.msra.mxu0 0
      %818 = vmatprep.subr.bf16.mxu0 0
      %819 = vmatpush2.bf16.xpose.msra.mxu0 0
      %820 = vmatprep.subr.bf16.mxu0 0
      %821 = vmatpush2.bf16.xpose.msra.mxu0 0
      %822 = vmatprep.subr.bf16.mxu0 0
      %823 = vmatpush2.bf16.xpose.msra.mxu0 0
      %824 = vmatprep.subr.bf16.mxu0 0
      %825 = vmatpush2.bf16.xpose.msra.mxu0 0
      %826 = vmatprep.subr.bf16.mxu0 0
      %827 = vmatpush2.bf16.xpose.msra.mxu0 0
      %828 = vmatprep.subr.bf16.mxu0 0
      %829 = vmatpush2.bf16.xpose.msra.mxu0 0
      %830 = vmatprep.mubr.bf16.mxu0 0
      %831 = vmatmul.mubr.bf16.gmra.mxu0 %v793
      %v832 = vpop.f32.mrf.mxu0
      %v833 = vadd.f32 0.0, %v832
      %v834 = vpop.f32.mrf.mxu0
      %v835 = vpop.f32.mrf.mxu0
      %v836 = vpop.f32.mrf.mxu0
      %837 = vdwg.mxu0
      %838 = vrot.lane.b32.xlu0 %v489, 80
      %v839 = vpop.permute.xlu0 %838
      %840 = vrot.lane.b32.xlu0 %v489, 16
      %v841 = vpop.permute.xlu0 %840
      %v843 = vsel %vm318, %v839, 0
      %v846 = vsel %vm318, %v841, 0
      %848 = vmatprep.subr.bf16.mxu0 0
      %849 = vmatpush1.bf16.xpose.msra.mxu0 0
      %850 = vmatprep.subr.bf16.mxu0 0
      %851 = vmatpush1.bf16.xpose.msra.mxu0 0
      %852 = vmatprep.subr.bf16.mxu0 0
      %853 = vmatpush1.bf16.xpose.msra.mxu0 0
      %854 = vmatprep.subr.bf16.mxu0 0
      %855 = vmatpush1.bf16.xpose.msra.mxu0 0
      %856 = vmatprep.subr.bf16.mxu0 0
      %857 = vmatpush1.bf16.xpose.msra.mxu0 0
      %858 = vmatprep.subr.bf16.mxu0 0
      %859 = vmatpush1.bf16.xpose.msra.mxu0 0
      %860 = vmatprep.subr.bf16.mxu0 0
      %861 = vmatpush1.bf16.xpose.msra.mxu0 0
      %862 = vmatprep.subr.bf16.mxu0 0
      %863 = vmatpush1.bf16.xpose.msra.mxu0 %v846
      %864 = vmatprep.subr.bf16.mxu0 0
      %865 = vmatpush2.bf16.xpose.msra.mxu0 0
      %866 = vmatprep.subr.bf16.mxu0 0
      %867 = vmatpush2.bf16.xpose.msra.mxu0 0
      %868 = vmatprep.subr.bf16.mxu0 0
      %869 = vmatpush2.bf16.xpose.msra.mxu0 0
      %870 = vmatprep.subr.bf16.mxu0 0
      %871 = vmatpush2.bf16.xpose.msra.mxu0 0
      %872 = vmatprep.subr.bf16.mxu0 0
      %873 = vmatpush2.bf16.xpose.msra.mxu0 0
      %874 = vmatprep.subr.bf16.mxu0 0
      %875 = vmatpush2.bf16.xpose.msra.mxu0 0
      %876 = vmatprep.subr.bf16.mxu0 0
      %877 = vmatpush2.bf16.xpose.msra.mxu0 0
      %878 = vmatprep.subr.bf16.mxu0 0
      %879 = vmatpush2.bf16.xpose.msra.mxu0 0
      %880 = vmatprep.mubr.bf16.mxu0 0
      %881 = vmatmul.mubr.bf16.gmra.mxu0 %v843
      %v882 = vpop.f32.mrf.mxu0
      %v883 = vadd.f32 0.0, %v882
      %v884 = vpop.f32.mrf.mxu0
      %v885 = vpop.f32.mrf.mxu0
      %v886 = vpop.f32.mrf.mxu0
      %887 = vdwg.mxu0
      %vm888 = vcmask 64512
      %v889 = vsel %vm888, %v534, -inf
      %890 = vmax.xlane.f32.xlu0 %v889
      %v891 = vpop.xlane.xlu0 %890
      %v892 = vsel %vm888, %v633, -inf
      %893 = vmax.xlane.f32.xlu0 %v892
      %v894 = vpop.xlane.xlu0 %893
      %v895 = vsel %vm888, %v733, -inf
      %896 = vmax.xlane.f32.xlu0 %v895
      %v897 = vpop.xlane.xlu0 %896
      %v898 = vsel %vm888, %v833, -inf
      %899 = vmax.xlane.f32.xlu0 %v898
      %v900 = vpop.xlane.xlu0 %899
      %v901 = vsel %vm888, %v583, -inf
      %902 = vmax.xlane.f32.xlu0 %v901
      %v903 = vpop.xlane.xlu0 %902
      %v904 = vsel %vm888, %v683, -inf
      %905 = vmax.xlane.f32.xlu0 %v904
      %v906 = vpop.xlane.xlu0 %905
      %v907 = vsel %vm888, %v783, -inf
      %908 = vmax.xlane.f32.xlu0 %v907
      %v909 = vpop.xlane.xlu0 %908
      %v910 = vsel %vm888, %v883, -inf
      %911 = vmax.xlane.f32.xlu0 %v910
      %v912 = vpop.xlane.xlu0 %911
      %v913 = vsub.f32 %v534, %v891
      %v914 = vsub.f32 %v633, %v894
      %v915 = vsub.f32 %v733, %v897
      %v916 = vsub.f32 %v833, %v900
      %v917 = vsub.f32 %v583, %v903
      %v918 = vsub.f32 %v683, %v906
      %v919 = vsub.f32 %v783, %v909
      %v920 = vsub.f32 %v883, %v912
      %v921 = vmul.f32 %v913, 1.442695
      %v922 = vpow.pop %v921
      %v923 = vmul.f32 %v914, 1.442695
      %v924 = vpow.pop %v923
      %v925 = vmul.f32 %v915, 1.442695
      %v926 = vpow.pop %v925
      %v927 = vmul.f32 %v916, 1.442695
      %v928 = vpow.pop %v927
      %v929 = vmul.f32 %v917, 1.442695
      %v930 = vpow.pop %v929
      %v931 = vmul.f32 %v918, 1.442695
      %v932 = vpow.pop %v931
      %v933 = vmul.f32 %v919, 1.442695
      %v934 = vpow.pop %v933
      %v935 = vmul.f32 %v920, 1.442695
      %v936 = vpow.pop %v935
      %v937 = vsel %vm888, %v922, 0.0
      %938 = vadd.xlane.f32.xlu0 %v937
      %v939 = vpop.xlane.xlu0 %938
      %v940 = vsel %vm888, %v924, 0.0
      %941 = vadd.xlane.f32.xlu0 %v940
      %v942 = vpop.xlane.xlu0 %941
      %v943 = vsel %vm888, %v926, 0.0
      %944 = vadd.xlane.f32.xlu0 %v943
      %v945 = vpop.xlane.xlu0 %944
      %v946 = vsel %vm888, %v928, 0.0
      %947 = vadd.xlane.f32.xlu0 %v946
      %v948 = vpop.xlane.xlu0 %947
      %v949 = vsel %vm888, %v930, 0.0
      %950 = vadd.xlane.f32.xlu0 %v949
      %v951 = vpop.xlane.xlu0 %950
      %v952 = vsel %vm888, %v932, 0.0
      %953 = vadd.xlane.f32.xlu0 %v952
      %v954 = vpop.xlane.xlu0 %953
      %v955 = vsel %vm888, %v934, 0.0
      %956 = vadd.xlane.f32.xlu0 %v955
      %v957 = vpop.xlane.xlu0 %956
      %v958 = vsel %vm888, %v936, 0.0
      %959 = vadd.xlane.f32.xlu0 %v958
      %v960 = vpop.xlane.xlu0 %959
      %v961 = vrcp.pop %v939
      %v962 = vrcp.pop %v942
      %v963 = vrcp.pop %v945
      %v964 = vrcp.pop %v948
      %v965 = vrcp.pop %v951
      %v966 = vrcp.pop %v954
      %v967 = vrcp.pop %v957
      %v968 = vrcp.pop %v960
      %v969 = vmul.f32 %v922, %v961
      %v970 = vmul.f32 %v924, %v962
      %v971 = vmul.f32 %v926, %v963
      %v972 = vmul.f32 %v928, %v964
      %v973 = vmul.f32 %v930, %v965
      %v974 = vmul.f32 %v932, %v966
      %v975 = vmul.f32 %v934, %v967
      %v976 = vmul.f32 %v936, %v968
      %v977 = vpack.c.bf16 %v969, %v969
      %v978 = vpack.c.bf16 %v973, %v973
      %v979 = vpack.c.bf16 %v482, %v482
      %v980 = vpack.c.bf16 %v486, %v486
      %v982 = vsel %vm888, %v977, 0
      %vm984 = vcmask 1043456
      %v986 = vsel %vm984, %v979, 0
      %988 = vmatprep.subr.bf16.mxu0 0
      %989 = vmatpush1.bf16.msra.mxu0 0
      %990 = vmatprep.subr.bf16.mxu0 0
      %991 = vmatpush1.bf16.msra.mxu0 0
      %992 = vmatprep.subr.bf16.mxu0 0
      %993 = vmatpush1.bf16.msra.mxu0 0
      %994 = vmatprep.subr.bf16.mxu0 0
      %995 = vmatpush1.bf16.msra.mxu0 0
      %996 = vmatprep.subr.bf16.mxu0 0
      %997 = vmatpush1.bf16.msra.mxu0 0
      %998 = vmatprep.subr.bf16.mxu0 0
      %999 = vmatpush1.bf16.msra.mxu0 0
      %1000 = vmatprep.subr.bf16.mxu0 0
      %1001 = vmatpush1.bf16.msra.mxu0 0
      %1002 = vmatprep.subr.bf16.mxu0 0
      %1003 = vmatpush1.bf16.msra.mxu0 %v986
      %1004 = vmatprep.subr.bf16.mxu0 0
      %1005 = vmatpush2.bf16.msra.mxu0 0
      %1006 = vmatprep.subr.bf16.mxu0 0
      %1007 = vmatpush2.bf16.msra.mxu0 0
      %1008 = vmatprep.subr.bf16.mxu0 0
      %1009 = vmatpush2.bf16.msra.mxu0 0
      %1010 = vmatprep.subr.bf16.mxu0 0
      %1011 = vmatpush2.bf16.msra.mxu0 0
      %1012 = vmatprep.subr.bf16.mxu0 0
      %1013 = vmatpush2.bf16.msra.mxu0 0
      %1014 = vmatprep.subr.bf16.mxu0 0
      %1015 = vmatpush2.bf16.msra.mxu0 0
      %1016 = vmatprep.subr.bf16.mxu0 0
      %1017 = vmatpush2.bf16.msra.mxu0 0
      %1018 = vmatprep.subr.bf16.mxu0 0
      %1019 = vmatpush2.bf16.msra.mxu0 0
      %1020 = vmatprep.mubr.bf16.mxu0 0
      %1021 = vmatmul.mubr.bf16.gmra.mxu0 %v982
      %v1022 = vpop.f32.mrf.mxu0
      %v1023 = vadd.f32 0.0, %v1022
      %v1024 = vpop.f32.mrf.mxu0
      %v1025 = vpop.f32.mrf.mxu0
      %v1026 = vpop.f32.mrf.mxu0
      %1027 = vdwg.mxu0
      %v1029 = vsel %vm888, %v978, 0
      %v1032 = vsel %vm984, %v980, 0
      %1034 = vmatprep.subr.bf16.mxu0 0
      %1035 = vmatpush1.bf16.msra.mxu0 0
      %1036 = vmatprep.subr.bf16.mxu0 0
      %1037 = vmatpush1.bf16.msra.mxu0 0
      %1038 = vmatprep.subr.bf16.mxu0 0
      %1039 = vmatpush1.bf16.msra.mxu0 0
      %1040 = vmatprep.subr.bf16.mxu0 0
      %1041 = vmatpush1.bf16.msra.mxu0 0
      %1042 = vmatprep.subr.bf16.mxu0 0
      %1043 = vmatpush1.bf16.msra.mxu0 0
      %1044 = vmatprep.subr.bf16.mxu0 0
      %1045 = vmatpush1.bf16.msra.mxu0 0
      %1046 = vmatprep.subr.bf16.mxu0 0
      %1047 = vmatpush1.bf16.msra.mxu0 0
      %1048 = vmatprep.subr.bf16.mxu0 0
      %1049 = vmatpush1.bf16.msra.mxu0 %v1032
      %1050 = vmatprep.subr.bf16.mxu0 0
      %1051 = vmatpush2.bf16.msra.mxu0 0
      %1052 = vmatprep.subr.bf16.mxu0 0
      %1053 = vmatpush2.bf16.msra.mxu0 0
      %1054 = vmatprep.subr.bf16.mxu0 0
      %1055 = vmatpush2.bf16.msra.mxu0 0
      %1056 = vmatprep.subr.bf16.mxu0 0
      %1057 = vmatpush2.bf16.msra.mxu0 0
      %1058 = vmatprep.subr.bf16.mxu0 0
      %1059 = vmatpush2.bf16.msra.mxu0 0
      %1060 = vmatprep.subr.bf16.mxu0 0
      %1061 = vmatpush2.bf16.msra.mxu0 0
      %1062 = vmatprep.subr.bf16.mxu0 0
      %1063 = vmatpush2.bf16.msra.mxu0 0
      %1064 = vmatprep.subr.bf16.mxu0 0
      %1065 = vmatpush2.bf16.msra.mxu0 0
      %1066 = vmatprep.mubr.bf16.mxu0 0
      %1067 = vmatmul.mubr.bf16.gmra.mxu0 %v1029
      %v1068 = vpop.f32.mrf.mxu0
      %v1069 = vadd.f32 0.0, %v1068
      %v1070 = vpop.f32.mrf.mxu0
      %v1071 = vpop.f32.mrf.mxu0
      %v1072 = vpop.f32.mrf.mxu0
      %1073 = vdwg.mxu0
      %v1074 = vpack.c.bf16 %v970, %v970
      %v1075 = vpack.c.bf16 %v974, %v974
      %1077 = vrot.lane.b32.xlu0 %v979, 112
      %v1078 = vpop.permute.xlu0 %1077
      %v1080 = vsel %vm888, %v1074, 0
      %v1083 = vsel %vm984, %v1078, 0
      %1085 = vmatprep.subr.bf16.mxu0 0
      %1086 = vmatpush1.bf16.msra.mxu0 0
      %1087 = vmatprep.subr.bf16.mxu0 0
      %1088 = vmatpush1.bf16.msra.mxu0 0
      %1089 = vmatprep.subr.bf16.mxu0 0
      %1090 = vmatpush1.bf16.msra.mxu0 0
      %1091 = vmatprep.subr.bf16.mxu0 0
      %1092 = vmatpush1.bf16.msra.mxu0 0
      %1093 = vmatprep.subr.bf16.mxu0 0
      %1094 = vmatpush1.bf16.msra.mxu0 0
      %1095 = vmatprep.subr.bf16.mxu0 0
      %1096 = vmatpush1.bf16.msra.mxu0 0
      %1097 = vmatprep.subr.bf16.mxu0 0
      %1098 = vmatpush1.bf16.msra.mxu0 0
      %1099 = vmatprep.subr.bf16.mxu0 0
      %1100 = vmatpush1.bf16.msra.mxu0 %v1083
      %1101 = vmatprep.subr.bf16.mxu0 0
      %1102 = vmatpush2.bf16.msra.mxu0 0
      %1103 = vmatprep.subr.bf16.mxu0 0
      %1104 = vmatpush2.bf16.msra.mxu0 0
      %1105 = vmatprep.subr.bf16.mxu0 0
      %1106 = vmatpush2.bf16.msra.mxu0 0
      %1107 = vmatprep.subr.bf16.mxu0 0
      %1108 = vmatpush2.bf16.msra.mxu0 0
      %1109 = vmatprep.subr.bf16.mxu0 0
      %1110 = vmatpush2.bf16.msra.mxu0 0
      %1111 = vmatprep.subr.bf16.mxu0 0
      %1112 = vmatpush2.bf16.msra.mxu0 0
      %1113 = vmatprep.subr.bf16.mxu0 0
      %1114 = vmatpush2.bf16.msra.mxu0 0
      %1115 = vmatprep.subr.bf16.mxu0 0
      %1116 = vmatpush2.bf16.msra.mxu0 0
      %1117 = vmatprep.mubr.bf16.mxu0 0
      %1118 = vmatmul.mubr.bf16.gmra.mxu0 %v1080
      %v1119 = vpop.f32.mrf.mxu0
      %v1120 = vadd.f32 0.0, %v1119
      %v1121 = vpop.f32.mrf.mxu0
      %v1122 = vpop.f32.mrf.mxu0
      %v1123 = vpop.f32.mrf.mxu0
      %1124 = vdwg.mxu0
      %1126 = vrot.lane.b32.xlu0 %v980, 112
      %v1127 = vpop.permute.xlu0 %1126
      %v1129 = vsel %vm888, %v1075, 0
      %v1132 = vsel %vm984, %v1127, 0
      %1134 = vmatprep.subr.bf16.mxu0 0
      %1135 = vmatpush1.bf16.msra.mxu0 0
      %1136 = vmatprep.subr.bf16.mxu0 0
      %1137 = vmatpush1.bf16.msra.mxu0 0
      %1138 = vmatprep.subr.bf16.mxu0 0
      %1139 = vmatpush1.bf16.msra.mxu0 0
      %1140 = vmatprep.subr.bf16.mxu0 0
      %1141 = vmatpush1.bf16.msra.mxu0 0
      %1142 = vmatprep.subr.bf16.mxu0 0
      %1143 = vmatpush1.bf16.msra.mxu0 0
      %1144 = vmatprep.subr.bf16.mxu0 0
      %1145 = vmatpush1.bf16.msra.mxu0 0
      %1146 = vmatprep.subr.bf16.mxu0 0
      %1147 = vmatpush1.bf16.msra.mxu0 0
      %1148 = vmatprep.subr.bf16.mxu0 0
      %1149 = vmatpush1.bf16.msra.mxu0 %v1132
      %1150 = vmatprep.subr.bf16.mxu0 0
      %1151 = vmatpush2.bf16.msra.mxu0 0
      %1152 = vmatprep.subr.bf16.mxu0 0
      %1153 = vmatpush2.bf16.msra.mxu0 0
      %1154 = vmatprep.subr.bf16.mxu0 0
      %1155 = vmatpush2.bf16.msra.mxu0 0
      %1156 = vmatprep.subr.bf16.mxu0 0
      %1157 = vmatpush2.bf16.msra.mxu0 0
      %1158 = vmatprep.subr.bf16.mxu0 0
      %1159 = vmatpush2.bf16.msra.mxu0 0
      %1160 = vmatprep.subr.bf16.mxu0 0
      %1161 = vmatpush2.bf16.msra.mxu0 0
      %1162 = vmatprep.subr.bf16.mxu0 0
      %1163 = vmatpush2.bf16.msra.mxu0 0
      %1164 = vmatprep.subr.bf16.mxu0 0
      %1165 = vmatpush2.bf16.msra.mxu0 0
      %1166 = vmatprep.mubr.bf16.mxu0 0
      %1167 = vmatmul.mubr.bf16.gmra.mxu0 %v1129
      %v1168 = vpop.f32.mrf.mxu0
      %v1169 = vadd.f32 0.0, %v1168
      %v1170 = vpop.f32.mrf.mxu0
      %v1171 = vpop.f32.mrf.mxu0
      %v1172 = vpop.f32.mrf.mxu0
      %1173 = vdwg.mxu0
      %v1174 = vpack.c.bf16 %v971, %v971
      %v1175 = vpack.c.bf16 %v975, %v975
      %1176 = vrot.lane.b32.xlu0 %v979, 96
      %v1177 = vpop.permute.xlu0 %1176
      %v1179 = vsel %vm888, %v1174, 0
      %v1182 = vsel %vm984, %v1177, 0
      %1184 = vmatprep.subr.bf16.mxu0 0
      %1185 = vmatpush1.bf16.msra.mxu0 0
      %1186 = vmatprep.subr.bf16.mxu0 0
      %1187 = vmatpush1.bf16.msra.mxu0 0
      %1188 = vmatprep.subr.bf16.mxu0 0
      %1189 = vmatpush1.bf16.msra.mxu0 0
      %1190 = vmatprep.subr.bf16.mxu0 0
      %1191 = vmatpush1.bf16.msra.mxu0 0
      %1192 = vmatprep.subr.bf16.mxu0 0
      %1193 = vmatpush1.bf16.msra.mxu0 0
      %1194 = vmatprep.subr.bf16.mxu0 0
      %1195 = vmatpush1.bf16.msra.mxu0 0
      %1196 = vmatprep.subr.bf16.mxu0 0
      %1197 = vmatpush1.bf16.msra.mxu0 0
      %1198 = vmatprep.subr.bf16.mxu0 0
      %1199 = vmatpush1.bf16.msra.mxu0 %v1182
      %1200 = vmatprep.subr.bf16.mxu0 0
      %1201 = vmatpush2.bf16.msra.mxu0 0
      %1202 = vmatprep.subr.bf16.mxu0 0
      %1203 = vmatpush2.bf16.msra.mxu0 0
      %1204 = vmatprep.subr.bf16.mxu0 0
      %1205 = vmatpush2.bf16.msra.mxu0 0
      %1206 = vmatprep.subr.bf16.mxu0 0
      %1207 = vmatpush2.bf16.msra.mxu0 0
      %1208 = vmatprep.subr.bf16.mxu0 0
      %1209 = vmatpush2.bf16.msra.mxu0 0
      %1210 = vmatprep.subr.bf16.mxu0 0
      %1211 = vmatpush2.bf16.msra.mxu0 0
      %1212 = vmatprep.subr.bf16.mxu0 0
      %1213 = vmatpush2.bf16.msra.mxu0 0
      %1214 = vmatprep.subr.bf16.mxu0 0
      %1215 = vmatpush2.bf16.msra.mxu0 0
      %1216 = vmatprep.mubr.bf16.mxu0 0
      %1217 = vmatmul.mubr.bf16.gmra.mxu0 %v1179
      %v1218 = vpop.f32.mrf.mxu0
      %v1219 = vadd.f32 0.0, %v1218
      %v1220 = vpop.f32.mrf.mxu0
      %v1221 = vpop.f32.mrf.mxu0
      %v1222 = vpop.f32.mrf.mxu0
      %1223 = vdwg.mxu0
      %1224 = vrot.lane.b32.xlu0 %v980, 96
      %v1225 = vpop.permute.xlu0 %1224
      %v1227 = vsel %vm888, %v1175, 0
      %v1230 = vsel %vm984, %v1225, 0
      %1232 = vmatprep.subr.bf16.mxu0 0
      %1233 = vmatpush1.bf16.msra.mxu0 0
      %1234 = vmatprep.subr.bf16.mxu0 0
      %1235 = vmatpush1.bf16.msra.mxu0 0
      %1236 = vmatprep.subr.bf16.mxu0 0
      %1237 = vmatpush1.bf16.msra.mxu0 0
      %1238 = vmatprep.subr.bf16.mxu0 0
      %1239 = vmatpush1.bf16.msra.mxu0 0
      %1240 = vmatprep.subr.bf16.mxu0 0
      %1241 = vmatpush1.bf16.msra.mxu0 0
      %1242 = vmatprep.subr.bf16.mxu0 0
      %1243 = vmatpush1.bf16.msra.mxu0 0
      %1244 = vmatprep.subr.bf16.mxu0 0
      %1245 = vmatpush1.bf16.msra.mxu0 0
      %1246 = vmatprep.subr.bf16.mxu0 0
      %1247 = vmatpush1.bf16.msra.mxu0 %v1230
      %1248 = vmatprep.subr.bf16.mxu0 0
      %1249 = vmatpush2.bf16.msra.mxu0 0
      %1250 = vmatprep.subr.bf16.mxu0 0
      %1251 = vmatpush2.bf16.msra.mxu0 0
      %1252 = vmatprep.subr.bf16.mxu0 0
      %1253 = vmatpush2.bf16.msra.mxu0 0
      %1254 = vmatprep.subr.bf16.mxu0 0
      %1255 = vmatpush2.bf16.msra.mxu0 0
      %1256 = vmatprep.subr.bf16.mxu0 0
      %1257 = vmatpush2.bf16.msra.mxu0 0
      %1258 = vmatprep.subr.bf16.mxu0 0
      %1259 = vmatpush2.bf16.msra.mxu0 0
      %1260 = vmatprep.subr.bf16.mxu0 0
      %1261 = vmatpush2.bf16.msra.mxu0 0
      %1262 = vmatprep.subr.bf16.mxu0 0
      %1263 = vmatpush2.bf16.msra.mxu0 0
      %1264 = vmatprep.mubr.bf16.mxu0 0
      %1265 = vmatmul.mubr.bf16.gmra.mxu0 %v1227
      %v1266 = vpop.f32.mrf.mxu0
      %v1267 = vadd.f32 0.0, %v1266
      %v1268 = vpop.f32.mrf.mxu0
      %v1269 = vpop.f32.mrf.mxu0
      %v1270 = vpop.f32.mrf.mxu0
      %1271 = vdwg.mxu0
      %v1272 = vpack.c.bf16 %v972, %v972
      %v1273 = vpack.c.bf16 %v976, %v976
      %1274 = vrot.lane.b32.xlu0 %v979, 80
      %v1275 = vpop.permute.xlu0 %1274
      %v1277 = vsel %vm888, %v1272, 0
      %v1280 = vsel %vm984, %v1275, 0
      %1282 = vmatprep.subr.bf16.mxu0 0
      %1283 = vmatpush1.bf16.msra.mxu0 0
      %1284 = vmatprep.subr.bf16.mxu0 0
      %1285 = vmatpush1.bf16.msra.mxu0 0
      %1286 = vmatprep.subr.bf16.mxu0 0
      %1287 = vmatpush1.bf16.msra.mxu0 0
      %1288 = vmatprep.subr.bf16.mxu0 0
      %1289 = vmatpush1.bf16.msra.mxu0 0
      %1290 = vmatprep.subr.bf16.mxu0 0
      %1291 = vmatpush1.bf16.msra.mxu0 0
      %1292 = vmatprep.subr.bf16.mxu0 0
      %1293 = vmatpush1.bf16.msra.mxu0 0
      %1294 = vmatprep.subr.bf16.mxu0 0
      %1295 = vmatpush1.bf16.msra.mxu0 0
      %1296 = vmatprep.subr.bf16.mxu0 0
      %1297 = vmatpush1.bf16.msra.mxu0 %v1280
      %1298 = vmatprep.subr.bf16.mxu0 0
      %1299 = vmatpush2.bf16.msra.mxu0 0
      %1300 = vmatprep.subr.bf16.mxu0 0
      %1301 = vmatpush2.bf16.msra.mxu0 0
      %1302 = vmatprep.subr.bf16.mxu0 0
      %1303 = vmatpush2.bf16.msra.mxu0 0
      %1304 = vmatprep.subr.bf16.mxu0 0
      %1305 = vmatpush2.bf16.msra.mxu0 0
      %1306 = vmatprep.subr.bf16.mxu0 0
      %1307 = vmatpush2.bf16.msra.mxu0 0
      %1308 = vmatprep.subr.bf16.mxu0 0
      %1309 = vmatpush2.bf16.msra.mxu0 0
      %1310 = vmatprep.subr.bf16.mxu0 0
      %1311 = vmatpush2.bf16.msra.mxu0 0
      %1312 = vmatprep.subr.bf16.mxu0 0
      %1313 = vmatpush2.bf16.msra.mxu0 0
      %1314 = vmatprep.mubr.bf16.mxu0 0
      %1315 = vmatmul.mubr.bf16.gmra.mxu0 %v1277
      %v1316 = vpop.f32.mrf.mxu0
      %v1317 = vadd.f32 0.0, %v1316
      %v1318 = vpop.f32.mrf.mxu0
      %v1319 = vpop.f32.mrf.mxu0
      %v1320 = vpop.f32.mrf.mxu0
      %1321 = vdwg.mxu0
      %1322 = vrot.lane.b32.xlu0 %v980, 80
      %v1323 = vpop.permute.xlu0 %1322
      %v1325 = vsel %vm888, %v1273, 0
      %v1328 = vsel %vm984, %v1323, 0
      %1330 = vmatprep.subr.bf16.mxu0 0
      %1331 = vmatpush1.bf16.msra.mxu0 0
      %1332 = vmatprep.subr.bf16.mxu0 0
      %1333 = vmatpush1.bf16.msra.mxu0 0
      %1334 = vmatprep.subr.bf16.mxu0 0
      %1335 = vmatpush1.bf16.msra.mxu0 0
      %1336 = vmatprep.subr.bf16.mxu0 0
      %1337 = vmatpush1.bf16.msra.mxu0 0
      %1338 = vmatprep.subr.bf16.mxu0 0
      %1339 = vmatpush1.bf16.msra.mxu0 0
      %1340 = vmatprep.subr.bf16.mxu0 0
      %1341 = vmatpush1.bf16.msra.mxu0 0
      %1342 = vmatprep.subr.bf16.mxu0 0
      %1343 = vmatpush1.bf16.msra.mxu0 0
      %1344 = vmatprep.subr.bf16.mxu0 0
      %1345 = vmatpush1.bf16.msra.mxu0 %v1328
      %1346 = vmatprep.subr.bf16.mxu0 0
      %1347 = vmatpush2.bf16.msra.mxu0 0
      %1348 = vmatprep.subr.bf16.mxu0 0
      %1349 = vmatpush2.bf16.msra.mxu0 0
      %1350 = vmatprep.subr.bf16.mxu0 0
      %1351 = vmatpush2.bf16.msra.mxu0 0
      %1352 = vmatprep.subr.bf16.mxu0 0
      %1353 = vmatpush2.bf16.msra.mxu0 0
      %1354 = vmatprep.subr.bf16.mxu0 0
      %1355 = vmatpush2.bf16.msra.mxu0 0
      %1356 = vmatprep.subr.bf16.mxu0 0
      %1357 = vmatpush2.bf16.msra.mxu0 0
      %1358 = vmatprep.subr.bf16.mxu0 0
      %1359 = vmatpush2.bf16.msra.mxu0 0
      %1360 = vmatprep.subr.bf16.mxu0 0
      %1361 = vmatpush2.bf16.msra.mxu0 0
      %1362 = vmatprep.mubr.bf16.mxu0 0
      %1363 = vmatmul.mubr.bf16.gmra.mxu0 %v1325
      %v1364 = vpop.f32.mrf.mxu0
      %v1365 = vadd.f32 0.0, %v1364
      %v1366 = vpop.f32.mrf.mxu0
      %v1367 = vpop.f32.mrf.mxu0
      %v1368 = vpop.f32.mrf.mxu0
      %1369 = vdwg.mxu0
      %1372 = vrot.lane.b32.xlu0 %v1120, 16
      %v1373 = vpop.permute.xlu0 %1372
      %1374 = vrot.lane.b32.xlu0 %v1169, 16
      %v1375 = vpop.permute.xlu0 %1374
      %1380 = vrot.lane.b32.xlu0 %v1219, 32
      %v1381 = vpop.permute.xlu0 %1380
      %1382 = vrot.lane.b32.xlu0 %v1267, 32
      %v1383 = vpop.permute.xlu0 %1382
      %1388 = vrot.lane.b32.xlu0 %v1317, 48
      %v1389 = vpop.permute.xlu0 %1388
      %1390 = vrot.lane.b32.xlu0 %v1365, 48
      %v1391 = vpop.permute.xlu0 %1390
      %v1394 = vsel %vm318, %v1023, %v1373
      %v1395 = vsel %vm318, %v1069, %v1375
      %vm1396 = vcmask 261120
      %v1397 = vsel %vm1396, %v1394, %v1381
      %v1398 = vsel %vm1396, %v1395, %v1383
      %vm1399 = vcmask 392192
      %v1400 = vsel %vm1399, %v1397, %v1389
      %v1401 = vsel %vm1399, %v1398, %v1391
      %v1402 = vpack.c.bf16 %v1401, %v1400
      %v1404 = vlaneseq
      %v1405 = vshrl.u32 %v1404, 7
      %v1406 = vsub.s32 0, %v1405
      %v1407 = vrot.slane %v384, %v1406
      %v1417 = vunpack.c.l.b16 %v373
      %v1418 = vunpack.c.l.b16 %v374
      %v1419 = vunpack.c.l.b16 %v375
      %v1420 = vunpack.c.l.b16 %v376
      %v1421 = vunpack.c.l.b16 %v377
      %v1422 = vunpack.c.l.b16 %v378
      %v1423 = vunpack.c.l.b16 %v379
      %v1424 = vunpack.c.l.b16 %v380
      %v1425 = vpack.c.b16 %v1418, %v1417
      %v1426 = vpack.c.b16 %v1420, %v1419
      %v1427 = vpack.c.b16 %v1422, %v1421
      %v1428 = vpack.c.b16 %v1424, %v1423
      %v1434 = vsel %vm441, %v1402, 0
      %1436 = vmatprep.subr.bf16.mxu0 0
      %1437 = vmatpush1.bf16.msra.mxu0 0
      %1438 = vmatprep.subr.bf16.mxu0 0
      %1439 = vmatpush1.bf16.msra.mxu0 0
      %1440 = vmatprep.subr.bf16.mxu0 0
      %1441 = vmatpush1.bf16.msra.mxu0 0
      %1442 = vmatprep.subr.bf16.mxu0 0
      %1443 = vmatpush1.bf16.msra.mxu0 0
      %1444 = vmatprep.subr.bf16.mxu0 0
      %1445 = vmatpush1.bf16.msra.mxu0 %v1428
      %1446 = vmatprep.subr.bf16.mxu0 0
      %1447 = vmatpush1.bf16.msra.mxu0 %v1427
      %1448 = vmatprep.subr.bf16.mxu0 0
      %1449 = vmatpush1.bf16.msra.mxu0 %v1426
      %1450 = vmatprep.subr.bf16.mxu0 0
      %1451 = vmatpush1.bf16.msra.mxu0 %v1425
      %1452 = vmatprep.subr.bf16.mxu0 0
      %1453 = vmatpush2.bf16.msra.mxu0 0
      %1454 = vmatprep.subr.bf16.mxu0 0
      %1455 = vmatpush2.bf16.msra.mxu0 0
      %1456 = vmatprep.subr.bf16.mxu0 0
      %1457 = vmatpush2.bf16.msra.mxu0 0
      %1458 = vmatprep.subr.bf16.mxu0 0
      %1459 = vmatpush2.bf16.msra.mxu0 0
      %1460 = vmatprep.subr.bf16.mxu0 0
      %1461 = vmatpush2.bf16.msra.mxu0 0
      %1462 = vmatprep.subr.bf16.mxu0 0
      %1463 = vmatpush2.bf16.msra.mxu0 0
      %1464 = vmatprep.subr.bf16.mxu0 0
      %1465 = vmatpush2.bf16.msra.mxu0 0
      %1466 = vmatprep.subr.bf16.mxu0 0
      %1467 = vmatpush2.bf16.msra.mxu0 0
      %1468 = vmatprep.mubr.bf16.mxu0 0
      %1469 = vmatmul.mubr.bf16.gmra.mxu0 %v1434
      %v1470 = vpop.f32.mrf.mxu0
      %v1471 = vadd.f32 %v1407, %v1470
      %v1472 = vpop.f32.mrf.mxu0
      %v1473 = vpop.f32.mrf.mxu0
      %v1474 = vadd.f32 %v1407, %v1473
      %v1475 = vpop.f32.mrf.mxu0
      %1476 = vdwg.mxu0
      %v1477 = vadd.f32 %v363, %v1471
      %v1478 = vadd.f32 %v364, %v1474
      %v1479 = vsel %vm441, %v1477, 0.0
      %1480 = vadd.xlane.f32.xlu0 %v1479
      %v1481 = vpop.xlane.xlu0 %1480
      %v1482 = vsel %vm441, %v1478, 0.0
      %1483 = vadd.xlane.f32.xlu0 %v1482
      %v1484 = vpop.xlane.xlu0 %1483
      %v1485 = vrcp.pop 64.0
      %v1486 = vmul.f32 %v1481, %v1485
      %v1487 = vmul.f32 %v1484, %v1485
      %v1488 = vsub.f32 %v1477, %v1486
      %v1489 = vsub.f32 %v1478, %v1487
      %v1490 = vmul.f32 %v1488, %v1488
      %v1491 = vmul.f32 %v1489, %v1489
      %v1492 = vsel %vm441, %v1490, 0.0
      %1493 = vadd.xlane.f32.xlu0 %v1492
      %v1494 = vpop.xlane.xlu0 %1493
      %v1495 = vsel %vm441, %v1491, 0.0
      %1496 = vadd.xlane.f32.xlu0 %v1495
      %v1497 = vpop.xlane.xlu0 %1496
      %v1498 = vmul.f32 %v1494, %v1485
      %v1499 = vmul.f32 %v1497, %v1485
      %v1500 = vadd.f32 %v1498, 1e-05
      %v1501 = vadd.f32 %v1499, 1e-05
      %v1502 = vrsqrt.pop %v1500
      %v1503 = vrsqrt.pop %v1501
      %v1504 = vmul.f32 %v1488, %v1502
      %v1505 = vmul.f32 %v1489, %v1503
      %v1507 = vlaneseq
      %v1508 = vshrl.u32 %v1507, 7
      %v1509 = vsub.s32 0, %v1508
      %v1510 = vrot.slane %v386, %v1509
      %v1512 = vmul.f32 %v1504, %v1510
      %v1513 = vmul.f32 %v1505, %v1510
      %v1515 = vlaneseq
      %v1516 = vshrl.u32 %v1515, 7
      %v1517 = vsub.s32 0, %v1516
      %v1518 = vrot.slane %v388, %v1517
      %v1520 = vadd.f32 %v1512, %v1518
      %v1521 = vadd.f32 %v1513, %v1518
      %v1522 = vpack.c.bf16 %v1521, %v1520
      %v1524 = vlaneseq
      %v1525 = vshrl.u32 %v1524, 7
      %v1526 = vsub.s32 0, %v1525
      %v1527 = vrot.slane %v290, %v1526
      %v1537 = vunpack.c.l.b16 %v257
      %v1538 = vunpack.c.l.b16 %v258
      %v1539 = vunpack.c.l.b16 %v259
      %v1540 = vunpack.c.l.b16 %v260
      %v1541 = vunpack.c.l.b16 %v261
      %v1542 = vunpack.c.l.b16 %v262
      %v1543 = vunpack.c.l.b16 %v263
      %v1544 = vunpack.c.l.b16 %v264
      %v1545 = vpack.c.b16 %v1538, %v1537
      %v1546 = vpack.c.b16 %v1540, %v1539
      %v1547 = vpack.c.b16 %v1542, %v1541
      %v1548 = vpack.c.b16 %v1544, %v1543
      %v1554 = vsel %vm441, %v1522, 0
      %1556 = vmatprep.subr.bf16.mxu0 0
      %1557 = vmatpush1.bf16.msra.mxu0 0
      %1558 = vmatprep.subr.bf16.mxu0 0
      %1559 = vmatpush1.bf16.msra.mxu0 0
      %1560 = vmatprep.subr.bf16.mxu0 0
      %1561 = vmatpush1.bf16.msra.mxu0 0
      %1562 = vmatprep.subr.bf16.mxu0 0
      %1563 = vmatpush1.bf16.msra.mxu0 0
      %1564 = vmatprep.subr.bf16.mxu0 0
      %1565 = vmatpush1.bf16.msra.mxu0 %v1548
      %1566 = vmatprep.subr.bf16.mxu0 0
      %1567 = vmatpush1.bf16.msra.mxu0 %v1547
      %1568 = vmatprep.subr.bf16.mxu0 0
      %1569 = vmatpush1.bf16.msra.mxu0 %v1546
      %1570 = vmatprep.subr.bf16.mxu0 0
      %1571 = vmatpush1.bf16.msra.mxu0 %v1545
      %1572 = vmatprep.subr.bf16.mxu0 0
      %1573 = vmatpush2.bf16.msra.mxu0 0
      %1574 = vmatprep.subr.bf16.mxu0 0
      %1575 = vmatpush2.bf16.msra.mxu0 0
      %1576 = vmatprep.subr.bf16.mxu0 0
      %1577 = vmatpush2.bf16.msra.mxu0 0
      %1578 = vmatprep.subr.bf16.mxu0 0
      %1579 = vmatpush2.bf16.msra.mxu0 0
      %1580 = vmatprep.subr.bf16.mxu0 0
      %1581 = vmatpush2.bf16.msra.mxu0 0
      %1582 = vmatprep.subr.bf16.mxu0 0
      %1583 = vmatpush2.bf16.msra.mxu0 0
      %1584 = vmatprep.subr.bf16.mxu0 0
      %1585 = vmatpush2.bf16.msra.mxu0 0
      %1586 = vmatprep.subr.bf16.mxu0 0
      %1587 = vmatpush2.bf16.msra.mxu0 0
      %1588 = vmatprep.mubr.bf16.mxu0 0
      %1589 = vmatmul.mubr.bf16.gmra.mxu0 %v1554
      %v1590 = vpop.f32.mrf.mxu0
      %v1591 = vadd.f32 %v1527, %v1590
      %v1592 = vpop.f32.mrf.mxu0
      %v1593 = vpop.f32.mrf.mxu0
      %v1594 = vadd.f32 %v1527, %v1593
      %v1595 = vpop.f32.mrf.mxu0
      %1596 = vdwg.mxu0
      %v1597 = vmul.f32 %v1591, 0.5
      %v1598 = vmul.f32 %v1594, 0.5
      %v1599 = vmul.f32 %v1591, 0.70710677
      %v1600 = vmul.f32 %v1594, 0.70710677
      %v1601 = vand.u32 2147483647, %v1599
      %v1602 = vand.u32 2147483647, %v1600
      %v1603 = vmul.f32 %v1601, 0.3275911
      %v1604 = vmul.f32 %v1602, 0.3275911
      %v1605 = vadd.f32 %v1603, 1.0
      %v1606 = vadd.f32 %v1604, 1.0
      %v1607 = vrcp.pop %v1605
      %v1608 = vmul.f32 1.0, %v1607
      %v1609 = vrcp.pop %v1606
      %v1610 = vmul.f32 1.0, %v1609
      %v1611 = vmul.f32 %v1608, 1.0614054
      %v1612 = vmul.f32 %v1610, 1.0614054
      %v1613 = vadd.f32 %v1611, -1.4531521
      %v1614 = vadd.f32 %v1612, -1.4531521
      %v1615 = vmul.f32 %v1613, %v1608
      %v1616 = vmul.f32 %v1614, %v1610
      %v1617 = vadd.f32 %v1615, 1.4214138
      %v1618 = vadd.f32 %v1616, 1.4214138
      %v1619 = vmul.f32 %v1617, %v1608
      %v1620 = vmul.f32 %v1618, %v1610
      %v1621 = vadd.f32 %v1619, -0.28449672
      %v1622 = vadd.f32 %v1620, -0.28449672
      %v1623 = vmul.f32 %v1621, %v1608
      %v1624 = vmul.f32 %v1622, %v1610
      %v1625 = vadd.f32 %v1623, 0.2548296
      %v1626 = vadd.f32 %v1624, 0.2548296
      %v1627 = vmul.f32 %v1625, %v1608
      %v1628 = vmul.f32 %v1626, %v1610
      %v1629 = vsub.f32 0.0, %v1601
      %v1630 = vsub.f32 0.0, %v1602
      %v1631 = vmul.f32 %v1629, %v1601
      %v1632 = vmul.f32 %v1630, %v1602
      %v1633 = vmul.f32 %v1631, 1.442695
      %v1634 = vpow.pop %v1633
      %v1635 = vmul.f32 %v1632, 1.442695
      %v1636 = vpow.pop %v1635
      %v1637 = vmul.f32 %v1627, %v1634
      %v1638 = vmul.f32 %v1628, %v1636
      %v1639 = vsub.f32 1.0, %v1637
      %v1640 = vsub.f32 1.0, %v1638
      %vm1641 = vcmp.ge.f32.partialorder %v1599, 0.0
      %vm1642 = vcmp.ge.f32.partialorder %v1600, 0.0
      %v1643 = vsub.f32 0.0, %v1639
      %v1644 = vsub.f32 0.0, %v1640
      %v1645 = vsel %vm1641, %v1639, %v1643
      %v1646 = vsel %vm1642, %v1640, %v1644
      %v1647 = vadd.f32 %v1645, 1.0
      %v1648 = vadd.f32 %v1646, 1.0
      %v1649 = vmul.f32 %v1597, %v1647
      %v1650 = vmul.f32 %v1598, %v1648
      %v1651 = vpack.c.bf16 %v1650, %v1649
      %v1653 = vlaneseq
      %v1654 = vshrl.u32 %v1653, 7
      %v1655 = vsub.s32 0, %v1654
      %v1656 = vrot.slane %v292, %v1655
      %v1674 = vunpack.c.l.b16 %v265
      %v1675 = vunpack.c.l.b16 %v266
      %v1676 = vunpack.c.l.b16 %v267
      %v1677 = vunpack.c.l.b16 %v268
      %v1678 = vunpack.c.l.b16 %v269
      %v1679 = vunpack.c.l.b16 %v270
      %v1680 = vunpack.c.l.b16 %v271
      %v1681 = vunpack.c.l.b16 %v272
      %v1682 = vunpack.c.l.b16 %v273
      %v1683 = vunpack.c.l.b16 %v274
      %v1684 = vunpack.c.l.b16 %v275
      %v1685 = vunpack.c.l.b16 %v276
      %v1686 = vunpack.c.l.b16 %v277
      %v1687 = vunpack.c.l.b16 %v278
      %v1688 = vunpack.c.l.b16 %v279
      %v1689 = vunpack.c.l.b16 %v280
      %v1690 = vpack.c.b16 %v1675, %v1674
      %v1691 = vpack.c.b16 %v1677, %v1676
      %v1692 = vpack.c.b16 %v1679, %v1678
      %v1693 = vpack.c.b16 %v1681, %v1680
      %v1694 = vpack.c.b16 %v1683, %v1682
      %v1695 = vpack.c.b16 %v1685, %v1684
      %v1696 = vpack.c.b16 %v1687, %v1686
      %v1697 = vpack.c.b16 %v1689, %v1688
      %1706 = vmatprep.subr.bf16.mxu0 0
      %1707 = vmatpush1.bf16.msra.mxu0 %v1697
      %1708 = vmatprep.subr.bf16.mxu0 0
      %1709 = vmatpush1.bf16.msra.mxu0 %v1696
      %1710 = vmatprep.subr.bf16.mxu0 0
      %1711 = vmatpush1.bf16.msra.mxu0 %v1695
      %1712 = vmatprep.subr.bf16.mxu0 0
      %1713 = vmatpush1.bf16.msra.mxu0 %v1694
      %1714 = vmatprep.subr.bf16.mxu0 0
      %1715 = vmatpush1.bf16.msra.mxu0 %v1693
      %1716 = vmatprep.subr.bf16.mxu0 0
      %1717 = vmatpush1.bf16.msra.mxu0 %v1692
      %1718 = vmatprep.subr.bf16.mxu0 0
      %1719 = vmatpush1.bf16.msra.mxu0 %v1691
      %1720 = vmatprep.subr.bf16.mxu0 0
      %1721 = vmatpush1.bf16.msra.mxu0 %v1690
      %1722 = vmatprep.subr.bf16.mxu0 0
      %1723 = vmatpush2.bf16.msra.mxu0 0
      %1724 = vmatprep.subr.bf16.mxu0 0
      %1725 = vmatpush2.bf16.msra.mxu0 0
      %1726 = vmatprep.subr.bf16.mxu0 0
      %1727 = vmatpush2.bf16.msra.mxu0 0
      %1728 = vmatprep.subr.bf16.mxu0 0
      %1729 = vmatpush2.bf16.msra.mxu0 0
      %1730 = vmatprep.subr.bf16.mxu0 0
      %1731 = vmatpush2.bf16.msra.mxu0 0
      %1732 = vmatprep.subr.bf16.mxu0 0
      %1733 = vmatpush2.bf16.msra.mxu0 0
      %1734 = vmatprep.subr.bf16.mxu0 0
      %1735 = vmatpush2.bf16.msra.mxu0 0
      %1736 = vmatprep.subr.bf16.mxu0 0
      %1737 = vmatpush2.bf16.msra.mxu0 0
      %1738 = vmatprep.mubr.bf16.mxu0 0
      %1739 = vmatmul.mubr.bf16.gmra.mxu0 %v1651
      %v1740 = vpop.f32.mrf.mxu0
      %v1741 = vadd.f32 %v1656, %v1740
      %v1742 = vpop.f32.mrf.mxu0
      %v1743 = vpop.f32.mrf.mxu0
      %v1744 = vadd.f32 %v1656, %v1743
      %v1745 = vpop.f32.mrf.mxu0
      %1746 = vdwg.mxu0
      %v1747 = vadd.f32 %v1520, %v1741
      %v1748 = vadd.f32 %v1521, %v1744
      %v1749 = vsel %vm441, %v1747, 0.0
      %1750 = vadd.xlane.f32.xlu0 %v1749
      %v1751 = vpop.xlane.xlu0 %1750
      %v1752 = vsel %vm441, %v1748, 0.0
      %1753 = vadd.xlane.f32.xlu0 %v1752
      %v1754 = vpop.xlane.xlu0 %1753
      %v1755 = vmul.f32 %v1751, %v1485
      %v1756 = vmul.f32 %v1754, %v1485
      %v1757 = vsub.f32 %v1747, %v1755
      %v1758 = vsub.f32 %v1748, %v1756
      %v1759 = vmul.f32 %v1757, %v1757
      %v1760 = vmul.f32 %v1758, %v1758
      %v1761 = vsel %vm441, %v1759, 0.0
      %1762 = vadd.xlane.f32.xlu0 %v1761
      %v1763 = vpop.xlane.xlu0 %1762
      %v1764 = vsel %vm441, %v1760, 0.0
      %1765 = vadd.xlane.f32.xlu0 %v1764
      %v1766 = vpop.xlane.xlu0 %1765
      %v1767 = vmul.f32 %v1763, %v1485
      %v1768 = vmul.f32 %v1766, %v1485
      %v1769 = vadd.f32 %v1767, 1e-05
      %v1770 = vadd.f32 %v1768, 1e-05
      %v1771 = vrsqrt.pop %v1769
      %v1772 = vrsqrt.pop %v1770
      %v1773 = vmul.f32 %v1757, %v1771
      %v1774 = vmul.f32 %v1758, %v1772
      %v1776 = vlaneseq
      %v1777 = vshrl.u32 %v1776, 7
      %v1778 = vsub.s32 0, %v1777
      %v1779 = vrot.slane %v294, %v1778
      %v1781 = vmul.f32 %v1773, %v1779
      %v1782 = vmul.f32 %v1774, %v1779
      %v1784 = vlaneseq
      %v1785 = vshrl.u32 %v1784, 7
      %v1786 = vsub.s32 0, %v1785
      %v1787 = vrot.slane %v296, %v1786
      %v1789 = vadd.f32 %v1781, %v1787
      %v1790 = vadd.f32 %v1782, %v1787
      %s1791 = scalar_lea.vmem %s3, 128
      %v1792 = vld [vmem:[%s1791] sm:$0xff]
      %v1793 = vld [vmem:[%s1791 + $0x8] sm:$0xff]
      %v1794 = vld [vmem:[%s1791 + $0x10] sm:$0xff]
      %v1795 = vld [vmem:[%s1791 + $0x18] sm:$0xff]
      %v1796 = vld [vmem:[%s1791 + $0x20] sm:$0xff]
      %v1797 = vld [vmem:[%s1791 + $0x28] sm:$0xff]
      %v1798 = vld [vmem:[%s1791 + $0x30] sm:$0xff]
      %v1799 = vld [vmem:[%s1791 + $0x38] sm:$0xff]
      %v1800 = vld [vmem:[%s1791 + $0x40] sm:$0xff]
      %v1801 = vld [vmem:[%s1791 + $0x48] sm:$0xff]
      %v1802 = vld [vmem:[%s1791 + $0x50] sm:$0xff]
      %v1803 = vld [vmem:[%s1791 + $0x58] sm:$0xff]
      %v1804 = vld [vmem:[%s1791 + $0x60] sm:$0xff]
      %v1805 = vld [vmem:[%s1791 + $0x68] sm:$0xff]
      %v1806 = vld [vmem:[%s1791 + $0x70] sm:$0xff]
      %v1807 = vld [vmem:[%s1791 + $0x78] sm:$0xff]
      %s1808 = scalar_lea.vmem %s5, 4
      %v1809 = vld [vmem:[%s1808] sm:$0x3]
      %s1810 = scalar_lea.vmem %s5, 10
      %v1811 = vld [vmem:[%s1810] sm:$0x3]
      %s1812 = scalar_lea.vmem %s5, 16
      %v1813 = vld [vmem:[%s1812] sm:$0x3]
      %s1814 = scalar_lea.vmem %s5, 22
      %v1815 = vld [vmem:[%s1814] sm:$0x3]
      %v1816 = vpack.c.bf16 %v1790, %v1789
      %v1818 = vlaneseq
      %v1819 = vshrl.u32 %v1818, 7
      %v1820 = vsub.s32 0, %v1819
      %v1821 = vrot.slane %v1809, %v1820
      %v1822 = vlaneseq
      %v1823 = vshrl.u32 %v1822, 7
      %v1824 = vsub.s32 1, %v1823
      %v1825 = vrot.slane %v1809, %v1824
      %v1836 = vunpack.c.l.b16 %v1792
      %v1837 = vunpack.c.h.b16 %v1792
      %v1838 = vunpack.c.l.b16 %v1793
      %v1839 = vunpack.c.h.b16 %v1793
      %v1840 = vunpack.c.l.b16 %v1794
      %v1841 = vunpack.c.h.b16 %v1794
      %v1842 = vunpack.c.l.b16 %v1795
      %v1843 = vunpack.c.h.b16 %v1795
      %v1844 = vunpack.c.l.b16 %v1796
      %v1845 = vunpack.c.h.b16 %v1796
      %v1846 = vunpack.c.l.b16 %v1797
      %v1847 = vunpack.c.h.b16 %v1797
      %v1848 = vunpack.c.l.b16 %v1798
      %v1849 = vunpack.c.h.b16 %v1798
      %v1850 = vunpack.c.l.b16 %v1799
      %v1851 = vunpack.c.h.b16 %v1799
      %v1852 = vpack.c.b16 %v1838, %v1836
      %v1853 = vpack.c.b16 %v1839, %v1837
      %v1854 = vpack.c.b16 %v1842, %v1840
      %v1855 = vpack.c.b16 %v1843, %v1841
      %v1856 = vpack.c.b16 %v1846, %v1844
      %v1857 = vpack.c.b16 %v1847, %v1845
      %v1858 = vpack.c.b16 %v1850, %v1848
      %v1859 = vpack.c.b16 %v1851, %v1849
      %v1869 = vsel %vm441, %v1816, 0
      %1871 = vmatprep.subr.bf16.mxu0 0
      %1872 = vmatpush1.bf16.msra.mxu0 0
      %1873 = vmatprep.subr.bf16.mxu0 0
      %1874 = vmatpush1.bf16.msra.mxu0 0
      %1875 = vmatprep.subr.bf16.mxu0 0
      %1876 = vmatpush1.bf16.msra.mxu0 0
      %1877 = vmatprep.subr.bf16.mxu0 0
      %1878 = vmatpush1.bf16.msra.mxu0 0
      %1879 = vmatprep.subr.bf16.mxu0 %v1859
      %1880 = vmatpush1.bf16.msra.mxu0 %v1858
      %1881 = vmatprep.subr.bf16.mxu0 %v1857
      %1882 = vmatpush1.bf16.msra.mxu0 %v1856
      %1883 = vmatprep.subr.bf16.mxu0 %v1855
      %1884 = vmatpush1.bf16.msra.mxu0 %v1854
      %1885 = vmatprep.subr.bf16.mxu0 %v1853
      %1886 = vmatpush1.bf16.msra.mxu0 %v1852
      %1887 = vmatprep.subr.bf16.mxu0 0
      %1888 = vmatpush2.bf16.msra.mxu0 0
      %1889 = vmatprep.subr.bf16.mxu0 0
      %1890 = vmatpush2.bf16.msra.mxu0 0
      %1891 = vmatprep.subr.bf16.mxu0 0
      %1892 = vmatpush2.bf16.msra.mxu0 0
      %1893 = vmatprep.subr.bf16.mxu0 0
      %1894 = vmatpush2.bf16.msra.mxu0 0
      %1895 = vmatprep.subr.bf16.mxu0 0
      %1896 = vmatpush2.bf16.msra.mxu0 0
      %1897 = vmatprep.subr.bf16.mxu0 0
      %1898 = vmatpush2.bf16.msra.mxu0 0
      %1899 = vmatprep.subr.bf16.mxu0 0
      %1900 = vmatpush2.bf16.msra.mxu0 0
      %1901 = vmatprep.subr.bf16.mxu0 0
      %1902 = vmatpush2.bf16.msra.mxu0 0
      %1903 = vmatprep.mubr.bf16.mxu0 0
      %1904 = vmatmul.mubr.bf16.gmra.mxu0 %v1869
      %v1905 = vpop.f32.mrf.mxu0
      %v1906 = vadd.f32 %v1821, %v1905
      %v1907 = vpop.f32.mrf.mxu0
      %v1908 = vadd.f32 %v1825, %v1907
      %v1909 = vpop.f32.mrf.mxu0
      %v1910 = vadd.f32 %v1821, %v1909
      %v1911 = vpop.f32.mrf.mxu0
      %v1912 = vadd.f32 %v1825, %v1911
      %1913 = vdwg.mxu0
      %v1914 = vpack.c.bf16 %v1906, %v1906
      %v1915 = vpack.c.bf16 %v1910, %v1910
      %1917 = vrot.lane.b32.xlu0 %v1914, 64
      %v1918 = vpop.permute.xlu0 %1917
      %v1920 = vsel %vm318, %v1914, 0
      %v1923 = vsel %vm318, %v1918, 0
      %1925 = vmatprep.subr.bf16.mxu0 0
      %1926 = vmatpush1.bf16.xpose.msra.mxu0 0
      %1927 = vmatprep.subr.bf16.mxu0 0
      %1928 = vmatpush1.bf16.xpose.msra.mxu0 0
      %1929 = vmatprep.subr.bf16.mxu0 0
      %1930 = vmatpush1.bf16.xpose.msra.mxu0 0
      %1931 = vmatprep.subr.bf16.mxu0 0
      %1932 = vmatpush1.bf16.xpose.msra.mxu0 0
      %1933 = vmatprep.subr.bf16.mxu0 0
      %1934 = vmatpush1.bf16.xpose.msra.mxu0 0
      %1935 = vmatprep.subr.bf16.mxu0 0
      %1936 = vmatpush1.bf16.xpose.msra.mxu0 0
      %1937 = vmatprep.subr.bf16.mxu0 0
      %1938 = vmatpush1.bf16.xpose.msra.mxu0 0
      %1939 = vmatprep.subr.bf16.mxu0 0
      %1940 = vmatpush1.bf16.xpose.msra.mxu0 %v1923
      %1941 = vmatprep.subr.bf16.mxu0 0
      %1942 = vmatpush2.bf16.xpose.msra.mxu0 0
      %1943 = vmatprep.subr.bf16.mxu0 0
      %1944 = vmatpush2.bf16.xpose.msra.mxu0 0
      %1945 = vmatprep.subr.bf16.mxu0 0
      %1946 = vmatpush2.bf16.xpose.msra.mxu0 0
      %1947 = vmatprep.subr.bf16.mxu0 0
      %1948 = vmatpush2.bf16.xpose.msra.mxu0 0
      %1949 = vmatprep.subr.bf16.mxu0 0
      %1950 = vmatpush2.bf16.xpose.msra.mxu0 0
      %1951 = vmatprep.subr.bf16.mxu0 0
      %1952 = vmatpush2.bf16.xpose.msra.mxu0 0
      %1953 = vmatprep.subr.bf16.mxu0 0
      %1954 = vmatpush2.bf16.xpose.msra.mxu0 0
      %1955 = vmatprep.subr.bf16.mxu0 0
      %1956 = vmatpush2.bf16.xpose.msra.mxu0 0
      %1957 = vmatprep.mubr.bf16.mxu0 0
      %1958 = vmatmul.mubr.bf16.gmra.mxu0 %v1920
      %v1959 = vpop.f32.mrf.mxu0
      %v1960 = vadd.f32 0.0, %v1959
      %v1961 = vpop.f32.mrf.mxu0
      %v1962 = vpop.f32.mrf.mxu0
      %v1963 = vpop.f32.mrf.mxu0
      %1964 = vdwg.mxu0
      %1966 = vrot.lane.b32.xlu0 %v1915, 64
      %v1967 = vpop.permute.xlu0 %1966
      %v1969 = vsel %vm318, %v1915, 0
      %v1972 = vsel %vm318, %v1967, 0
      %1974 = vmatprep.subr.bf16.mxu0 0
      %1975 = vmatpush1.bf16.xpose.msra.mxu0 0
      %1976 = vmatprep.subr.bf16.mxu0 0
      %1977 = vmatpush1.bf16.xpose.msra.mxu0 0
      %1978 = vmatprep.subr.bf16.mxu0 0
      %1979 = vmatpush1.bf16.xpose.msra.mxu0 0
      %1980 = vmatprep.subr.bf16.mxu0 0
      %1981 = vmatpush1.bf16.xpose.msra.mxu0 0
      %1982 = vmatprep.subr.bf16.mxu0 0
      %1983 = vmatpush1.bf16.xpose.msra.mxu0 0
      %1984 = vmatprep.subr.bf16.mxu0 0
      %1985 = vmatpush1.bf16.xpose.msra.mxu0 0
      %1986 = vmatprep.subr.bf16.mxu0 0
      %1987 = vmatpush1.bf16.xpose.msra.mxu0 0
      %1988 = vmatprep.subr.bf16.mxu0 0
      %1989 = vmatpush1.bf16.xpose.msra.mxu0 %v1972
      %1990 = vmatprep.subr.bf16.mxu0 0
      %1991 = vmatpush2.bf16.xpose.msra.mxu0 0
      %1992 = vmatprep.subr.bf16.mxu0 0
      %1993 = vmatpush2.bf16.xpose.msra.mxu0 0
      %1994 = vmatprep.subr.bf16.mxu0 0
      %1995 = vmatpush2.bf16.xpose.msra.mxu0 0
      %1996 = vmatprep.subr.bf16.mxu0 0
      %1997 = vmatpush2.bf16.xpose.msra.mxu0 0
      %1998 = vmatprep.subr.bf16.mxu0 0
      %1999 = vmatpush2.bf16.xpose.msra.mxu0 0
      %2000 = vmatprep.subr.bf16.mxu0 0
      %2001 = vmatpush2.bf16.xpose.msra.mxu0 0
      %2002 = vmatprep.subr.bf16.mxu0 0
      %2003 = vmatpush2.bf16.xpose.msra.mxu0 0
      %2004 = vmatprep.subr.bf16.mxu0 0
      %2005 = vmatpush2.bf16.xpose.msra.mxu0 0
      %2006 = vmatprep.mubr.bf16.mxu0 0
      %2007 = vmatmul.mubr.bf16.gmra.mxu0 %v1969
      %v2008 = vpop.f32.mrf.mxu0
      %v2009 = vadd.f32 0.0, %v2008
      %v2010 = vpop.f32.mrf.mxu0
      %v2011 = vpop.f32.mrf.mxu0
      %v2012 = vpop.f32.mrf.mxu0
      %2013 = vdwg.mxu0
      %2014 = vrot.lane.b32.xlu0 %v1914, 112
      %v2015 = vpop.permute.xlu0 %2014
      %2016 = vrot.lane.b32.xlu0 %v1914, 48
      %v2017 = vpop.permute.xlu0 %2016
      %v2019 = vsel %vm318, %v2015, 0
      %v2022 = vsel %vm318, %v2017, 0
      %2024 = vmatprep.subr.bf16.mxu0 0
      %2025 = vmatpush1.bf16.xpose.msra.mxu0 0
      %2026 = vmatprep.subr.bf16.mxu0 0
      %2027 = vmatpush1.bf16.xpose.msra.mxu0 0
      %2028 = vmatprep.subr.bf16.mxu0 0
      %2029 = vmatpush1.bf16.xpose.msra.mxu0 0
      %2030 = vmatprep.subr.bf16.mxu0 0
      %2031 = vmatpush1.bf16.xpose.msra.mxu0 0
      %2032 = vmatprep.subr.bf16.mxu0 0
      %2033 = vmatpush1.bf16.xpose.msra.mxu0 0
      %2034 = vmatprep.subr.bf16.mxu0 0
      %2035 = vmatpush1.bf16.xpose.msra.mxu0 0
      %2036 = vmatprep.subr.bf16.mxu0 0
      %2037 = vmatpush1.bf16.xpose.msra.mxu0 0
      %2038 = vmatprep.subr.bf16.mxu0 0
      %2039 = vmatpush1.bf16.xpose.msra.mxu0 %v2022
      %2040 = vmatprep.subr.bf16.mxu0 0
      %2041 = vmatpush2.bf16.xpose.msra.mxu0 0
      %2042 = vmatprep.subr.bf16.mxu0 0
      %2043 = vmatpush2.bf16.xpose.msra.mxu0 0
      %2044 = vmatprep.subr.bf16.mxu0 0
      %2045 = vmatpush2.bf16.xpose.msra.mxu0 0
      %2046 = vmatprep.subr.bf16.mxu0 0
      %2047 = vmatpush2.bf16.xpose.msra.mxu0 0
      %2048 = vmatprep.subr.bf16.mxu0 0
      %2049 = vmatpush2.bf16.xpose.msra.mxu0 0
      %2050 = vmatprep.subr.bf16.mxu0 0
      %2051 = vmatpush2.bf16.xpose.msra.mxu0 0
      %2052 = vmatprep.subr.bf16.mxu0 0
      %2053 = vmatpush2.bf16.xpose.msra.mxu0 0
      %2054 = vmatprep.subr.bf16.mxu0 0
      %2055 = vmatpush2.bf16.xpose.msra.mxu0 0
      %2056 = vmatprep.mubr.bf16.mxu0 0
      %2057 = vmatmul.mubr.bf16.gmra.mxu0 %v2019
      %v2058 = vpop.f32.mrf.mxu0
      %v2059 = vadd.f32 0.0, %v2058
      %v2060 = vpop.f32.mrf.mxu0
      %v2061 = vpop.f32.mrf.mxu0
      %v2062 = vpop.f32.mrf.mxu0
      %2063 = vdwg.mxu0
      %2064 = vrot.lane.b32.xlu0 %v1915, 112
      %v2065 = vpop.permute.xlu0 %2064
      %2066 = vrot.lane.b32.xlu0 %v1915, 48
      %v2067 = vpop.permute.xlu0 %2066
      %v2069 = vsel %vm318, %v2065, 0
      %v2072 = vsel %vm318, %v2067, 0
      %2074 = vmatprep.subr.bf16.mxu0 0
      %2075 = vmatpush1.bf16.xpose.msra.mxu0 0
      %2076 = vmatprep.subr.bf16.mxu0 0
      %2077 = vmatpush1.bf16.xpose.msra.mxu0 0
      %2078 = vmatprep.subr.bf16.mxu0 0
      %2079 = vmatpush1.bf16.xpose.msra.mxu0 0
      %2080 = vmatprep.subr.bf16.mxu0 0
      %2081 = vmatpush1.bf16.xpose.msra.mxu0 0
      %2082 = vmatprep.subr.bf16.mxu0 0
      %2083 = vmatpush1.bf16.xpose.msra.mxu0 0
      %2084 = vmatprep.subr.bf16.mxu0 0
      %2085 = vmatpush1.bf16.xpose.msra.mxu0 0
      %2086 = vmatprep.subr.bf16.mxu0 0
      %2087 = vmatpush1.bf16.xpose.msra.mxu0 0
      %2088 = vmatprep.subr.bf16.mxu0 0
      %2089 = vmatpush1.bf16.xpose.msra.mxu0 %v2072
      %2090 = vmatprep.subr.bf16.mxu0 0
      %2091 = vmatpush2.bf16.xpose.msra.mxu0 0
      %2092 = vmatprep.subr.bf16.mxu0 0
      %2093 = vmatpush2.bf16.xpose.msra.mxu0 0
      %2094 = vmatprep.subr.bf16.mxu0 0
      %2095 = vmatpush2.bf16.xpose.msra.mxu0 0
      %2096 = vmatprep.subr.bf16.mxu0 0
      %2097 = vmatpush2.bf16.xpose.msra.mxu0 0
      %2098 = vmatprep.subr.bf16.mxu0 0
      %2099 = vmatpush2.bf16.xpose.msra.mxu0 0
      %2100 = vmatprep.subr.bf16.mxu0 0
      %2101 = vmatpush2.bf16.xpose.msra.mxu0 0
      %2102 = vmatprep.subr.bf16.mxu0 0
      %2103 = vmatpush2.bf16.xpose.msra.mxu0 0
      %2104 = vmatprep.subr.bf16.mxu0 0
      %2105 = vmatpush2.bf16.xpose.msra.mxu0 0
      %2106 = vmatprep.mubr.bf16.mxu0 0
      %2107 = vmatmul.mubr.bf16.gmra.mxu0 %v2069
      %v2108 = vpop.f32.mrf.mxu0
      %v2109 = vadd.f32 0.0, %v2108
      %v2110 = vpop.f32.mrf.mxu0
      %v2111 = vpop.f32.mrf.mxu0
      %v2112 = vpop.f32.mrf.mxu0
      %2113 = vdwg.mxu0
      %2114 = vrot.lane.b32.xlu0 %v1914, 96
      %v2115 = vpop.permute.xlu0 %2114
      %2116 = vrot.lane.b32.xlu0 %v1914, 32
      %v2117 = vpop.permute.xlu0 %2116
      %v2119 = vsel %vm318, %v2115, 0
      %v2122 = vsel %vm318, %v2117, 0
      %2124 = vmatprep.subr.bf16.mxu0 0
      %2125 = vmatpush1.bf16.xpose.msra.mxu0 0
      %2126 = vmatprep.subr.bf16.mxu0 0
      %2127 = vmatpush1.bf16.xpose.msra.mxu0 0
      %2128 = vmatprep.subr.bf16.mxu0 0
      %2129 = vmatpush1.bf16.xpose.msra.mxu0 0
      %2130 = vmatprep.subr.bf16.mxu0 0
      %2131 = vmatpush1.bf16.xpose.msra.mxu0 0
      %2132 = vmatprep.subr.bf16.mxu0 0
      %2133 = vmatpush1.bf16.xpose.msra.mxu0 0
      %2134 = vmatprep.subr.bf16.mxu0 0
      %2135 = vmatpush1.bf16.xpose.msra.mxu0 0
      %2136 = vmatprep.subr.bf16.mxu0 0
      %2137 = vmatpush1.bf16.xpose.msra.mxu0 0
      %2138 = vmatprep.subr.bf16.mxu0 0
      %2139 = vmatpush1.bf16.xpose.msra.mxu0 %v2122
      %2140 = vmatprep.subr.bf16.mxu0 0
      %2141 = vmatpush2.bf16.xpose.msra.mxu0 0
      %2142 = vmatprep.subr.bf16.mxu0 0
      %2143 = vmatpush2.bf16.xpose.msra.mxu0 0
      %2144 = vmatprep.subr.bf16.mxu0 0
      %2145 = vmatpush2.bf16.xpose.msra.mxu0 0
      %2146 = vmatprep.subr.bf16.mxu0 0
      %2147 = vmatpush2.bf16.xpose.msra.mxu0 0
      %2148 = vmatprep.subr.bf16.mxu0 0
      %2149 = vmatpush2.bf16.xpose.msra.mxu0 0
      %2150 = vmatprep.subr.bf16.mxu0 0
      %2151 = vmatpush2.bf16.xpose.msra.mxu0 0
      %2152 = vmatprep.subr.bf16.mxu0 0
      %2153 = vmatpush2.bf16.xpose.msra.mxu0 0
      %2154 = vmatprep.subr.bf16.mxu0 0
      %2155 = vmatpush2.bf16.xpose.msra.mxu0 0
      %2156 = vmatprep.mubr.bf16.mxu0 0
      %2157 = vmatmul.mubr.bf16.gmra.mxu0 %v2119
      %v2158 = vpop.f32.mrf.mxu0
      %v2159 = vadd.f32 0.0, %v2158
      %v2160 = vpop.f32.mrf.mxu0
      %v2161 = vpop.f32.mrf.mxu0
      %v2162 = vpop.f32.mrf.mxu0
      %2163 = vdwg.mxu0
      %2164 = vrot.lane.b32.xlu0 %v1915, 96
      %v2165 = vpop.permute.xlu0 %2164
      %2166 = vrot.lane.b32.xlu0 %v1915, 32
      %v2167 = vpop.permute.xlu0 %2166
      %v2169 = vsel %vm318, %v2165, 0
      %v2172 = vsel %vm318, %v2167, 0
      %2174 = vmatprep.subr.bf16.mxu0 0
      %2175 = vmatpush1.bf16.xpose.msra.mxu0 0
      %2176 = vmatprep.subr.bf16.mxu0 0
      %2177 = vmatpush1.bf16.xpose.msra.mxu0 0
      %2178 = vmatprep.subr.bf16.mxu0 0
      %2179 = vmatpush1.bf16.xpose.msra.mxu0 0
      %2180 = vmatprep.subr.bf16.mxu0 0
      %2181 = vmatpush1.bf16.xpose.msra.mxu0 0
      %2182 = vmatprep.subr.bf16.mxu0 0
      %2183 = vmatpush1.bf16.xpose.msra.mxu0 0
      %2184 = vmatprep.subr.bf16.mxu0 0
      %2185 = vmatpush1.bf16.xpose.msra.mxu0 0
      %2186 = vmatprep.subr.bf16.mxu0 0
      %2187 = vmatpush1.bf16.xpose.msra.mxu0 0
      %2188 = vmatprep.subr.bf16.mxu0 0
      %2189 = vmatpush1.bf16.xpose.msra.mxu0 %v2172
      %2190 = vmatprep.subr.bf16.mxu0 0
      %2191 = vmatpush2.bf16.xpose.msra.mxu0 0
      %2192 = vmatprep.subr.bf16.mxu0 0
      %2193 = vmatpush2.bf16.xpose.msra.mxu0 0
      %2194 = vmatprep.subr.bf16.mxu0 0
      %2195 = vmatpush2.bf16.xpose.msra.mxu0 0
      %2196 = vmatprep.subr.bf16.mxu0 0
      %2197 = vmatpush2.bf16.xpose.msra.mxu0 0
      %2198 = vmatprep.subr.bf16.mxu0 0
      %2199 = vmatpush2.bf16.xpose.msra.mxu0 0
      %2200 = vmatprep.subr.bf16.mxu0 0
      %2201 = vmatpush2.bf16.xpose.msra.mxu0 0
      %2202 = vmatprep.subr.bf16.mxu0 0
      %2203 = vmatpush2.bf16.xpose.msra.mxu0 0
      %2204 = vmatprep.subr.bf16.mxu0 0
      %2205 = vmatpush2.bf16.xpose.msra.mxu0 0
      %2206 = vmatprep.mubr.bf16.mxu0 0
      %2207 = vmatmul.mubr.bf16.gmra.mxu0 %v2169
      %v2208 = vpop.f32.mrf.mxu0
      %v2209 = vadd.f32 0.0, %v2208
      %v2210 = vpop.f32.mrf.mxu0
      %v2211 = vpop.f32.mrf.mxu0
      %v2212 = vpop.f32.mrf.mxu0
      %2213 = vdwg.mxu0
      %2214 = vrot.lane.b32.xlu0 %v1914, 80
      %v2215 = vpop.permute.xlu0 %2214
      %2216 = vrot.lane.b32.xlu0 %v1914, 16
      %v2217 = vpop.permute.xlu0 %2216
      %v2219 = vsel %vm318, %v2215, 0
      %v2222 = vsel %vm318, %v2217, 0
      %2224 = vmatprep.subr.bf16.mxu0 0
      %2225 = vmatpush1.bf16.xpose.msra.mxu0 0
      %2226 = vmatprep.subr.bf16.mxu0 0
      %2227 = vmatpush1.bf16.xpose.msra.mxu0 0
      %2228 = vmatprep.subr.bf16.mxu0 0
      %2229 = vmatpush1.bf16.xpose.msra.mxu0 0
      %2230 = vmatprep.subr.bf16.mxu0 0
      %2231 = vmatpush1.bf16.xpose.msra.mxu0 0
      %2232 = vmatprep.subr.bf16.mxu0 0
      %2233 = vmatpush1.bf16.xpose.msra.mxu0 0
      %2234 = vmatprep.subr.bf16.mxu0 0
      %2235 = vmatpush1.bf16.xpose.msra.mxu0 0
      %2236 = vmatprep.subr.bf16.mxu0 0
      %2237 = vmatpush1.bf16.xpose.msra.mxu0 0
      %2238 = vmatprep.subr.bf16.mxu0 0
      %2239 = vmatpush1.bf16.xpose.msra.mxu0 %v2222
      %2240 = vmatprep.subr.bf16.mxu0 0
      %2241 = vmatpush2.bf16.xpose.msra.mxu0 0
      %2242 = vmatprep.subr.bf16.mxu0 0
      %2243 = vmatpush2.bf16.xpose.msra.mxu0 0
      %2244 = vmatprep.subr.bf16.mxu0 0
      %2245 = vmatpush2.bf16.xpose.msra.mxu0 0
      %2246 = vmatprep.subr.bf16.mxu0 0
      %2247 = vmatpush2.bf16.xpose.msra.mxu0 0
      %2248 = vmatprep.subr.bf16.mxu0 0
      %2249 = vmatpush2.bf16.xpose.msra.mxu0 0
      %2250 = vmatprep.subr.bf16.mxu0 0
      %2251 = vmatpush2.bf16.xpose.msra.mxu0 0
      %2252 = vmatprep.subr.bf16.mxu0 0
      %2253 = vmatpush2.bf16.xpose.msra.mxu0 0
      %2254 = vmatprep.subr.bf16.mxu0 0
      %2255 = vmatpush2.bf16.xpose.msra.mxu0 0
      %2256 = vmatprep.mubr.bf16.mxu0 0
      %2257 = vmatmul.mubr.bf16.gmra.mxu0 %v2219
      %v2258 = vpop.f32.mrf.mxu0
      %v2259 = vadd.f32 0.0, %v2258
      %v2260 = vpop.f32.mrf.mxu0
      %v2261 = vpop.f32.mrf.mxu0
      %v2262 = vpop.f32.mrf.mxu0
      %2263 = vdwg.mxu0
      %2264 = vrot.lane.b32.xlu0 %v1915, 80
      %v2265 = vpop.permute.xlu0 %2264
      %2266 = vrot.lane.b32.xlu0 %v1915, 16
      %v2267 = vpop.permute.xlu0 %2266
      %v2269 = vsel %vm318, %v2265, 0
      %v2272 = vsel %vm318, %v2267, 0
      %2274 = vmatprep.subr.bf16.mxu0 0
      %2275 = vmatpush1.bf16.xpose.msra.mxu0 0
      %2276 = vmatprep.subr.bf16.mxu0 0
      %2277 = vmatpush1.bf16.xpose.msra.mxu0 0
      %2278 = vmatprep.subr.bf16.mxu0 0
      %2279 = vmatpush1.bf16.xpose.msra.mxu0 0
      %2280 = vmatprep.subr.bf16.mxu0 0
      %2281 = vmatpush1.bf16.xpose.msra.mxu0 0
      %2282 = vmatprep.subr.bf16.mxu0 0
      %2283 = vmatpush1.bf16.xpose.msra.mxu0 0
      %2284 = vmatprep.subr.bf16.mxu0 0
      %2285 = vmatpush1.bf16.xpose.msra.mxu0 0
      %2286 = vmatprep.subr.bf16.mxu0 0
      %2287 = vmatpush1.bf16.xpose.msra.mxu0 0
      %2288 = vmatprep.subr.bf16.mxu0 0
      %2289 = vmatpush1.bf16.xpose.msra.mxu0 %v2272
      %2290 = vmatprep.subr.bf16.mxu0 0
      %2291 = vmatpush2.bf16.xpose.msra.mxu0 0
      %2292 = vmatprep.subr.bf16.mxu0 0
      %2293 = vmatpush2.bf16.xpose.msra.mxu0 0
      %2294 = vmatprep.subr.bf16.mxu0 0
      %2295 = vmatpush2.bf16.xpose.msra.mxu0 0
      %2296 = vmatprep.subr.bf16.mxu0 0
      %2297 = vmatpush2.bf16.xpose.msra.mxu0 0
      %2298 = vmatprep.subr.bf16.mxu0 0
      %2299 = vmatpush2.bf16.xpose.msra.mxu0 0
      %2300 = vmatprep.subr.bf16.mxu0 0
      %2301 = vmatpush2.bf16.xpose.msra.mxu0 0
      %2302 = vmatprep.subr.bf16.mxu0 0
      %2303 = vmatpush2.bf16.xpose.msra.mxu0 0
      %2304 = vmatprep.subr.bf16.mxu0 0
      %2305 = vmatpush2.bf16.xpose.msra.mxu0 0
      %2306 = vmatprep.mubr.bf16.mxu0 0
      %2307 = vmatmul.mubr.bf16.gmra.mxu0 %v2269
      %v2308 = vpop.f32.mrf.mxu0
      %v2309 = vadd.f32 0.0, %v2308
      %v2310 = vpop.f32.mrf.mxu0
      %v2311 = vpop.f32.mrf.mxu0
      %v2312 = vpop.f32.mrf.mxu0
      %2313 = vdwg.mxu0
      %v2314 = vsel %vm888, %v1960, -inf
      %2315 = vmax.xlane.f32.xlu0 %v2314
      %v2316 = vpop.xlane.xlu0 %2315
      %v2317 = vsel %vm888, %v2059, -inf
      %2318 = vmax.xlane.f32.xlu0 %v2317
      %v2319 = vpop.xlane.xlu0 %2318
      %v2320 = vsel %vm888, %v2159, -inf
      %2321 = vmax.xlane.f32.xlu0 %v2320
      %v2322 = vpop.xlane.xlu0 %2321
      %v2323 = vsel %vm888, %v2259, -inf
      %2324 = vmax.xlane.f32.xlu0 %v2323
      %v2325 = vpop.xlane.xlu0 %2324
      %v2326 = vsel %vm888, %v2009, -inf
      %2327 = vmax.xlane.f32.xlu0 %v2326
      %v2328 = vpop.xlane.xlu0 %2327
      %v2329 = vsel %vm888, %v2109, -inf
      %2330 = vmax.xlane.f32.xlu0 %v2329
      %v2331 = vpop.xlane.xlu0 %2330
      %v2332 = vsel %vm888, %v2209, -inf
      %2333 = vmax.xlane.f32.xlu0 %v2332
      %v2334 = vpop.xlane.xlu0 %2333
      %v2335 = vsel %vm888, %v2309, -inf
      %2336 = vmax.xlane.f32.xlu0 %v2335
      %v2337 = vpop.xlane.xlu0 %2336
      %v2338 = vsub.f32 %v1960, %v2316
      %v2339 = vsub.f32 %v2059, %v2319
      %v2340 = vsub.f32 %v2159, %v2322
      %v2341 = vsub.f32 %v2259, %v2325
      %v2342 = vsub.f32 %v2009, %v2328
      %v2343 = vsub.f32 %v2109, %v2331
      %v2344 = vsub.f32 %v2209, %v2334
      %v2345 = vsub.f32 %v2309, %v2337
      %v2346 = vmul.f32 %v2338, 1.442695
      %v2347 = vpow.pop %v2346
      %v2348 = vmul.f32 %v2339, 1.442695
      %v2349 = vpow.pop %v2348
      %v2350 = vmul.f32 %v2340, 1.442695
      %v2351 = vpow.pop %v2350
      %v2352 = vmul.f32 %v2341, 1.442695
      %v2353 = vpow.pop %v2352
      %v2354 = vmul.f32 %v2342, 1.442695
      %v2355 = vpow.pop %v2354
      %v2356 = vmul.f32 %v2343, 1.442695
      %v2357 = vpow.pop %v2356
      %v2358 = vmul.f32 %v2344, 1.442695
      %v2359 = vpow.pop %v2358
      %v2360 = vmul.f32 %v2345, 1.442695
      %v2361 = vpow.pop %v2360
      %v2362 = vsel %vm888, %v2347, 0.0
      %2363 = vadd.xlane.f32.xlu0 %v2362
      %v2364 = vpop.xlane.xlu0 %2363
      %v2365 = vsel %vm888, %v2349, 0.0
      %2366 = vadd.xlane.f32.xlu0 %v2365
      %v2367 = vpop.xlane.xlu0 %2366
      %v2368 = vsel %vm888, %v2351, 0.0
      %2369 = vadd.xlane.f32.xlu0 %v2368
      %v2370 = vpop.xlane.xlu0 %2369
      %v2371 = vsel %vm888, %v2353, 0.0
      %2372 = vadd.xlane.f32.xlu0 %v2371
      %v2373 = vpop.xlane.xlu0 %2372
      %v2374 = vsel %vm888, %v2355, 0.0
      %2375 = vadd.xlane.f32.xlu0 %v2374
      %v2376 = vpop.xlane.xlu0 %2375
      %v2377 = vsel %vm888, %v2357, 0.0
      %2378 = vadd.xlane.f32.xlu0 %v2377
      %v2379 = vpop.xlane.xlu0 %2378
      %v2380 = vsel %vm888, %v2359, 0.0
      %2381 = vadd.xlane.f32.xlu0 %v2380
      %v2382 = vpop.xlane.xlu0 %2381
      %v2383 = vsel %vm888, %v2361, 0.0
      %2384 = vadd.xlane.f32.xlu0 %v2383
      %v2385 = vpop.xlane.xlu0 %2384
      %v2386 = vrcp.pop %v2364
      %v2387 = vrcp.pop %v2367
      %v2388 = vrcp.pop %v2370
      %v2389 = vrcp.pop %v2373
      %v2390 = vrcp.pop %v2376
      %v2391 = vrcp.pop %v2379
      %v2392 = vrcp.pop %v2382
      %v2393 = vrcp.pop %v2385
      %v2394 = vmul.f32 %v2347, %v2386
      %v2395 = vmul.f32 %v2349, %v2387
      %v2396 = vmul.f32 %v2351, %v2388
      %v2397 = vmul.f32 %v2353, %v2389
      %v2398 = vmul.f32 %v2355, %v2390
      %v2399 = vmul.f32 %v2357, %v2391
      %v2400 = vmul.f32 %v2359, %v2392
      %v2401 = vmul.f32 %v2361, %v2393
      %v2402 = vpack.c.bf16 %v2394, %v2394
      %v2403 = vpack.c.bf16 %v2398, %v2398
      %v2404 = vpack.c.bf16 %v1908, %v1908
      %v2405 = vpack.c.bf16 %v1912, %v1912
      %v2407 = vsel %vm888, %v2402, 0
      %v2410 = vsel %vm984, %v2404, 0
      %2412 = vmatprep.subr.bf16.mxu0 0
      %2413 = vmatpush1.bf16.msra.mxu0 0
      %2414 = vmatprep.subr.bf16.mxu0 0
      %2415 = vmatpush1.bf16.msra.mxu0 0
      %2416 = vmatprep.subr.bf16.mxu0 0
      %2417 = vmatpush1.bf16.msra.mxu0 0
      %2418 = vmatprep.subr.bf16.mxu0 0
      %2419 = vmatpush1.bf16.msra.mxu0 0
      %2420 = vmatprep.subr.bf16.mxu0 0
      %2421 = vmatpush1.bf16.msra.mxu0 0
      %2422 = vmatprep.subr.bf16.mxu0 0
      %2423 = vmatpush1.bf16.msra.mxu0 0
      %2424 = vmatprep.subr.bf16.mxu0 0
      %2425 = vmatpush1.bf16.msra.mxu0 0
      %2426 = vmatprep.subr.bf16.mxu0 0
      %2427 = vmatpush1.bf16.msra.mxu0 %v2410
      %2428 = vmatprep.subr.bf16.mxu0 0
      %2429 = vmatpush2.bf16.msra.mxu0 0
      %2430 = vmatprep.subr.bf16.mxu0 0
      %2431 = vmatpush2.bf16.msra.mxu0 0
      %2432 = vmatprep.subr.bf16.mxu0 0
      %2433 = vmatpush2.bf16.msra.mxu0 0
      %2434 = vmatprep.subr.bf16.mxu0 0
      %2435 = vmatpush2.bf16.msra.mxu0 0
      %2436 = vmatprep.subr.bf16.mxu0 0
      %2437 = vmatpush2.bf16.msra.mxu0 0
      %2438 = vmatprep.subr.bf16.mxu0 0
      %2439 = vmatpush2.bf16.msra.mxu0 0
      %2440 = vmatprep.subr.bf16.mxu0 0
      %2441 = vmatpush2.bf16.msra.mxu0 0
      %2442 = vmatprep.subr.bf16.mxu0 0
      %2443 = vmatpush2.bf16.msra.mxu0 0
      %2444 = vmatprep.mubr.bf16.mxu0 0
      %2445 = vmatmul.mubr.bf16.gmra.mxu0 %v2407
      %v2446 = vpop.f32.mrf.mxu0
      %v2447 = vadd.f32 0.0, %v2446
      %v2448 = vpop.f32.mrf.mxu0
      %v2449 = vpop.f32.mrf.mxu0
      %v2450 = vpop.f32.mrf.mxu0
      %2451 = vdwg.mxu0
      %v2453 = vsel %vm888, %v2403, 0
      %v2456 = vsel %vm984, %v2405, 0
      %2458 = vmatprep.subr.bf16.mxu0 0
      %2459 = vmatpush1.bf16.msra.mxu0 0
      %2460 = vmatprep.subr.bf16.mxu0 0
      %2461 = vmatpush1.bf16.msra.mxu0 0
      %2462 = vmatprep.subr.bf16.mxu0 0
      %2463 = vmatpush1.bf16.msra.mxu0 0
      %2464 = vmatprep.subr.bf16.mxu0 0
      %2465 = vmatpush1.bf16.msra.mxu0 0
      %2466 = vmatprep.subr.bf16.mxu0 0
      %2467 = vmatpush1.bf16.msra.mxu0 0
      %2468 = vmatprep.subr.bf16.mxu0 0
      %2469 = vmatpush1.bf16.msra.mxu0 0
      %2470 = vmatprep.subr.bf16.mxu0 0
      %2471 = vmatpush1.bf16.msra.mxu0 0
      %2472 = vmatprep.subr.bf16.mxu0 0
      %2473 = vmatpush1.bf16.msra.mxu0 %v2456
      %2474 = vmatprep.subr.bf16.mxu0 0
      %2475 = vmatpush2.bf16.msra.mxu0 0
      %2476 = vmatprep.subr.bf16.mxu0 0
      %2477 = vmatpush2.bf16.msra.mxu0 0
      %2478 = vmatprep.subr.bf16.mxu0 0
      %2479 = vmatpush2.bf16.msra.mxu0 0
      %2480 = vmatprep.subr.bf16.mxu0 0
      %2481 = vmatpush2.bf16.msra.mxu0 0
      %2482 = vmatprep.subr.bf16.mxu0 0
      %2483 = vmatpush2.bf16.msra.mxu0 0
      %2484 = vmatprep.subr.bf16.mxu0 0
      %2485 = vmatpush2.bf16.msra.mxu0 0
      %2486 = vmatprep.subr.bf16.mxu0 0
      %2487 = vmatpush2.bf16.msra.mxu0 0
      %2488 = vmatprep.subr.bf16.mxu0 0
      %2489 = vmatpush2.bf16.msra.mxu0 0
      %2490 = vmatprep.mubr.bf16.mxu0 0
      %2491 = vmatmul.mubr.bf16.gmra.mxu0 %v2453
      %v2492 = vpop.f32.mrf.mxu0
      %v2493 = vadd.f32 0.0, %v2492
      %v2494 = vpop.f32.mrf.mxu0
      %v2495 = vpop.f32.mrf.mxu0
      %v2496 = vpop.f32.mrf.mxu0
      %2497 = vdwg.mxu0
      %v2498 = vpack.c.bf16 %v2395, %v2395
      %v2499 = vpack.c.bf16 %v2399, %v2399
      %2501 = vrot.lane.b32.xlu0 %v2404, 112
      %v2502 = vpop.permute.xlu0 %2501
      %v2504 = vsel %vm888, %v2498, 0
      %v2507 = vsel %vm984, %v2502, 0
      %2509 = vmatprep.subr.bf16.mxu0 0
      %2510 = vmatpush1.bf16.msra.mxu0 0
      %2511 = vmatprep.subr.bf16.mxu0 0
      %2512 = vmatpush1.bf16.msra.mxu0 0
      %2513 = vmatprep.subr.bf16.mxu0 0
      %2514 = vmatpush1.bf16.msra.mxu0 0
      %2515 = vmatprep.subr.bf16.mxu0 0
      %2516 = vmatpush1.bf16.msra.mxu0 0
      %2517 = vmatprep.subr.bf16.mxu0 0
      %2518 = vmatpush1.bf16.msra.mxu0 0
      %2519 = vmatprep.subr.bf16.mxu0 0
      %2520 = vmatpush1.bf16.msra.mxu0 0
      %2521 = vmatprep.subr.bf16.mxu0 0
      %2522 = vmatpush1.bf16.msra.mxu0 0
      %2523 = vmatprep.subr.bf16.mxu0 0
      %2524 = vmatpush1.bf16.msra.mxu0 %v2507
      %2525 = vmatprep.subr.bf16.mxu0 0
      %2526 = vmatpush2.bf16.msra.mxu0 0
      %2527 = vmatprep.subr.bf16.mxu0 0
      %2528 = vmatpush2.bf16.msra.mxu0 0
      %2529 = vmatprep.subr.bf16.mxu0 0
      %2530 = vmatpush2.bf16.msra.mxu0 0
      %2531 = vmatprep.subr.bf16.mxu0 0
      %2532 = vmatpush2.bf16.msra.mxu0 0
      %2533 = vmatprep.subr.bf16.mxu0 0
      %2534 = vmatpush2.bf16.msra.mxu0 0
      %2535 = vmatprep.subr.bf16.mxu0 0
      %2536 = vmatpush2.bf16.msra.mxu0 0
      %2537 = vmatprep.subr.bf16.mxu0 0
      %2538 = vmatpush2.bf16.msra.mxu0 0
      %2539 = vmatprep.subr.bf16.mxu0 0
      %2540 = vmatpush2.bf16.msra.mxu0 0
      %2541 = vmatprep.mubr.bf16.mxu0 0
      %2542 = vmatmul.mubr.bf16.gmra.mxu0 %v2504
      %v2543 = vpop.f32.mrf.mxu0
      %v2544 = vadd.f32 0.0, %v2543
      %v2545 = vpop.f32.mrf.mxu0
      %v2546 = vpop.f32.mrf.mxu0
      %v2547 = vpop.f32.mrf.mxu0
      %2548 = vdwg.mxu0
      %2550 = vrot.lane.b32.xlu0 %v2405, 112
      %v2551 = vpop.permute.xlu0 %2550
      %v2553 = vsel %vm888, %v2499, 0
      %v2556 = vsel %vm984, %v2551, 0
      %2558 = vmatprep.subr.bf16.mxu0 0
      %2559 = vmatpush1.bf16.msra.mxu0 0
      %2560 = vmatprep.subr.bf16.mxu0 0
      %2561 = vmatpush1.bf16.msra.mxu0 0
      %2562 = vmatprep.subr.bf16.mxu0 0
      %2563 = vmatpush1.bf16.msra.mxu0 0
      %2564 = vmatprep.subr.bf16.mxu0 0
      %2565 = vmatpush1.bf16.msra.mxu0 0
      %2566 = vmatprep.subr.bf16.mxu0 0
      %2567 = vmatpush1.bf16.msra.mxu0 0
      %2568 = vmatprep.subr.bf16.mxu0 0
      %2569 = vmatpush1.bf16.msra.mxu0 0
      %2570 = vmatprep.subr.bf16.mxu0 0
      %2571 = vmatpush1.bf16.msra.mxu0 0
      %2572 = vmatprep.subr.bf16.mxu0 0
      %2573 = vmatpush1.bf16.msra.mxu0 %v2556
      %2574 = vmatprep.subr.bf16.mxu0 0
      %2575 = vmatpush2.bf16.msra.mxu0 0
      %2576 = vmatprep.subr.bf16.mxu0 0
      %2577 = vmatpush2.bf16.msra.mxu0 0
      %2578 = vmatprep.subr.bf16.mxu0 0
      %2579 = vmatpush2.bf16.msra.mxu0 0
      %2580 = vmatprep.subr.bf16.mxu0 0
      %2581 = vmatpush2.bf16.msra.mxu0 0
      %2582 = vmatprep.subr.bf16.mxu0 0
      %2583 = vmatpush2.bf16.msra.mxu0 0
      %2584 = vmatprep.subr.bf16.mxu0 0
      %2585 = vmatpush2.bf16.msra.mxu0 0
      %2586 = vmatprep.subr.bf16.mxu0 0
      %2587 = vmatpush2.bf16.msra.mxu0 0
      %2588 = vmatprep.subr.bf16.mxu0 0
      %2589 = vmatpush2.bf16.msra.mxu0 0
      %2590 = vmatprep.mubr.bf16.mxu0 0
      %2591 = vmatmul.mubr.bf16.gmra.mxu0 %v2553
      %v2592 = vpop.f32.mrf.mxu0
      %v2593 = vadd.f32 0.0, %v2592
      %v2594 = vpop.f32.mrf.mxu0
      %v2595 = vpop.f32.mrf.mxu0
      %v2596 = vpop.f32.mrf.mxu0
      %2597 = vdwg.mxu0
      %v2598 = vpack.c.bf16 %v2396, %v2396
      %v2599 = vpack.c.bf16 %v2400, %v2400
      %2600 = vrot.lane.b32.xlu0 %v2404, 96
      %v2601 = vpop.permute.xlu0 %2600
      %v2603 = vsel %vm888, %v2598, 0
      %v2606 = vsel %vm984, %v2601, 0
      %2608 = vmatprep.subr.bf16.mxu0 0
      %2609 = vmatpush1.bf16.msra.mxu0 0
      %2610 = vmatprep.subr.bf16.mxu0 0
      %2611 = vmatpush1.bf16.msra.mxu0 0
      %2612 = vmatprep.subr.bf16.mxu0 0
      %2613 = vmatpush1.bf16.msra.mxu0 0
      %2614 = vmatprep.subr.bf16.mxu0 0
      %2615 = vmatpush1.bf16.msra.mxu0 0
      %2616 = vmatprep.subr.bf16.mxu0 0
      %2617 = vmatpush1.bf16.msra.mxu0 0
      %2618 = vmatprep.subr.bf16.mxu0 0
      %2619 = vmatpush1.bf16.msra.mxu0 0
      %2620 = vmatprep.subr.bf16.mxu0 0
      %2621 = vmatpush1.bf16.msra.mxu0 0
      %2622 = vmatprep.subr.bf16.mxu0 0
      %2623 = vmatpush1.bf16.msra.mxu0 %v2606
      %2624 = vmatprep.subr.bf16.mxu0 0
      %2625 = vmatpush2.bf16.msra.mxu0 0
      %2626 = vmatprep.subr.bf16.mxu0 0
      %2627 = vmatpush2.bf16.msra.mxu0 0
      %2628 = vmatprep.subr.bf16.mxu0 0
      %2629 = vmatpush2.bf16.msra.mxu0 0
      %2630 = vmatprep.subr.bf16.mxu0 0
      %2631 = vmatpush2.bf16.msra.mxu0 0
      %2632 = vmatprep.subr.bf16.mxu0 0
      %2633 = vmatpush2.bf16.msra.mxu0 0
      %2634 = vmatprep.subr.bf16.mxu0 0
      %2635 = vmatpush2.bf16.msra.mxu0 0
      %2636 = vmatprep.subr.bf16.mxu0 0
      %2637 = vmatpush2.bf16.msra.mxu0 0
      %2638 = vmatprep.subr.bf16.mxu0 0
      %2639 = vmatpush2.bf16.msra.mxu0 0
      %2640 = vmatprep.mubr.bf16.mxu0 0
      %2641 = vmatmul.mubr.bf16.gmra.mxu0 %v2603
      %v2642 = vpop.f32.mrf.mxu0
      %v2643 = vadd.f32 0.0, %v2642
      %v2644 = vpop.f32.mrf.mxu0
      %v2645 = vpop.f32.mrf.mxu0
      %v2646 = vpop.f32.mrf.mxu0
      %2647 = vdwg.mxu0
      %2648 = vrot.lane.b32.xlu0 %v2405, 96
      %v2649 = vpop.permute.xlu0 %2648
      %v2651 = vsel %vm888, %v2599, 0
      %v2654 = vsel %vm984, %v2649, 0
      %2656 = vmatprep.subr.bf16.mxu0 0
      %2657 = vmatpush1.bf16.msra.mxu0 0
      %2658 = vmatprep.subr.bf16.mxu0 0
      %2659 = vmatpush1.bf16.msra.mxu0 0
      %2660 = vmatprep.subr.bf16.mxu0 0
      %2661 = vmatpush1.bf16.msra.mxu0 0
      %2662 = vmatprep.subr.bf16.mxu0 0
      %2663 = vmatpush1.bf16.msra.mxu0 0
      %2664 = vmatprep.subr.bf16.mxu0 0
      %2665 = vmatpush1.bf16.msra.mxu0 0
      %2666 = vmatprep.subr.bf16.mxu0 0
      %2667 = vmatpush1.bf16.msra.mxu0 0
      %2668 = vmatprep.subr.bf16.mxu0 0
      %2669 = vmatpush1.bf16.msra.mxu0 0
      %2670 = vmatprep.subr.bf16.mxu0 0
      %2671 = vmatpush1.bf16.msra.mxu0 %v2654
      %2672 = vmatprep.subr.bf16.mxu0 0
      %2673 = vmatpush2.bf16.msra.mxu0 0
      %2674 = vmatprep.subr.bf16.mxu0 0
      %2675 = vmatpush2.bf16.msra.mxu0 0
      %2676 = vmatprep.subr.bf16.mxu0 0
      %2677 = vmatpush2.bf16.msra.mxu0 0
      %2678 = vmatprep.subr.bf16.mxu0 0
      %2679 = vmatpush2.bf16.msra.mxu0 0
      %2680 = vmatprep.subr.bf16.mxu0 0
      %2681 = vmatpush2.bf16.msra.mxu0 0
      %2682 = vmatprep.subr.bf16.mxu0 0
      %2683 = vmatpush2.bf16.msra.mxu0 0
      %2684 = vmatprep.subr.bf16.mxu0 0
      %2685 = vmatpush2.bf16.msra.mxu0 0
      %2686 = vmatprep.subr.bf16.mxu0 0
      %2687 = vmatpush2.bf16.msra.mxu0 0
      %2688 = vmatprep.mubr.bf16.mxu0 0
      %2689 = vmatmul.mubr.bf16.gmra.mxu0 %v2651
      %v2690 = vpop.f32.mrf.mxu0
      %v2691 = vadd.f32 0.0, %v2690
      %v2692 = vpop.f32.mrf.mxu0
      %v2693 = vpop.f32.mrf.mxu0
      %v2694 = vpop.f32.mrf.mxu0
      %2695 = vdwg.mxu0
      %v2696 = vpack.c.bf16 %v2397, %v2397
      %v2697 = vpack.c.bf16 %v2401, %v2401
      %2698 = vrot.lane.b32.xlu0 %v2404, 80
      %v2699 = vpop.permute.xlu0 %2698
      %v2701 = vsel %vm888, %v2696, 0
      %v2704 = vsel %vm984, %v2699, 0
      %2706 = vmatprep.subr.bf16.mxu0 0
      %2707 = vmatpush1.bf16.msra.mxu0 0
      %2708 = vmatprep.subr.bf16.mxu0 0
      %2709 = vmatpush1.bf16.msra.mxu0 0
      %2710 = vmatprep.subr.bf16.mxu0 0
      %2711 = vmatpush1.bf16.msra.mxu0 0
      %2712 = vmatprep.subr.bf16.mxu0 0
      %2713 = vmatpush1.bf16.msra.mxu0 0
      %2714 = vmatprep.subr.bf16.mxu0 0
      %2715 = vmatpush1.bf16.msra.mxu0 0
      %2716 = vmatprep.subr.bf16.mxu0 0
      %2717 = vmatpush1.bf16.msra.mxu0 0
      %2718 = vmatprep.subr.bf16.mxu0 0
      %2719 = vmatpush1.bf16.msra.mxu0 0
      %2720 = vmatprep.subr.bf16.mxu0 0
      %2721 = vmatpush1.bf16.msra.mxu0 %v2704
      %2722 = vmatprep.subr.bf16.mxu0 0
      %2723 = vmatpush2.bf16.msra.mxu0 0
      %2724 = vmatprep.subr.bf16.mxu0 0
      %2725 = vmatpush2.bf16.msra.mxu0 0
      %2726 = vmatprep.subr.bf16.mxu0 0
      %2727 = vmatpush2.bf16.msra.mxu0 0
      %2728 = vmatprep.subr.bf16.mxu0 0
      %2729 = vmatpush2.bf16.msra.mxu0 0
      %2730 = vmatprep.subr.bf16.mxu0 0
      %2731 = vmatpush2.bf16.msra.mxu0 0
      %2732 = vmatprep.subr.bf16.mxu0 0
      %2733 = vmatpush2.bf16.msra.mxu0 0
      %2734 = vmatprep.subr.bf16.mxu0 0
      %2735 = vmatpush2.bf16.msra.mxu0 0
      %2736 = vmatprep.subr.bf16.mxu0 0
      %2737 = vmatpush2.bf16.msra.mxu0 0
      %2738 = vmatprep.mubr.bf16.mxu0 0
      %2739 = vmatmul.mubr.bf16.gmra.mxu0 %v2701
      %v2740 = vpop.f32.mrf.mxu0
      %v2741 = vadd.f32 0.0, %v2740
      %v2742 = vpop.f32.mrf.mxu0
      %v2743 = vpop.f32.mrf.mxu0
      %v2744 = vpop.f32.mrf.mxu0
      %2745 = vdwg.mxu0
      %2746 = vrot.lane.b32.xlu0 %v2405, 80
      %v2747 = vpop.permute.xlu0 %2746
      %v2749 = vsel %vm888, %v2697, 0
      %v2752 = vsel %vm984, %v2747, 0
      %2754 = vmatprep.subr.bf16.mxu0 0
      %2755 = vmatpush1.bf16.msra.mxu0 0
      %2756 = vmatprep.subr.bf16.mxu0 0
      %2757 = vmatpush1.bf16.msra.mxu0 0
      %2758 = vmatprep.subr.bf16.mxu0 0
      %2759 = vmatpush1.bf16.msra.mxu0 0
      %2760 = vmatprep.subr.bf16.mxu0 0
      %2761 = vmatpush1.bf16.msra.mxu0 0
      %2762 = vmatprep.subr.bf16.mxu0 0
      %2763 = vmatpush1.bf16.msra.mxu0 0
      %2764 = vmatprep.subr.bf16.mxu0 0
      %2765 = vmatpush1.bf16.msra.mxu0 0
      %2766 = vmatprep.subr.bf16.mxu0 0
      %2767 = vmatpush1.bf16.msra.mxu0 0
      %2768 = vmatprep.subr.bf16.mxu0 0
      %2769 = vmatpush1.bf16.msra.mxu0 %v2752
      %2770 = vmatprep.subr.bf16.mxu0 0
      %2771 = vmatpush2.bf16.msra.mxu0 0
      %2772 = vmatprep.subr.bf16.mxu0 0
      %2773 = vmatpush2.bf16.msra.mxu0 0
      %2774 = vmatprep.subr.bf16.mxu0 0
      %2775 = vmatpush2.bf16.msra.mxu0 0
      %2776 = vmatprep.subr.bf16.mxu0 0
      %2777 = vmatpush2.bf16.msra.mxu0 0
      %2778 = vmatprep.subr.bf16.mxu0 0
      %2779 = vmatpush2.bf16.msra.mxu0 0
      %2780 = vmatprep.subr.bf16.mxu0 0
      %2781 = vmatpush2.bf16.msra.mxu0 0
      %2782 = vmatprep.subr.bf16.mxu0 0
      %2783 = vmatpush2.bf16.msra.mxu0 0
      %2784 = vmatprep.subr.bf16.mxu0 0
      %2785 = vmatpush2.bf16.msra.mxu0 0
      %2786 = vmatprep.mubr.bf16.mxu0 0
      %2787 = vmatmul.mubr.bf16.gmra.mxu0 %v2749
      %v2788 = vpop.f32.mrf.mxu0
      %v2789 = vadd.f32 0.0, %v2788
      %v2790 = vpop.f32.mrf.mxu0
      %v2791 = vpop.f32.mrf.mxu0
      %v2792 = vpop.f32.mrf.mxu0
      %2793 = vdwg.mxu0
      %2796 = vrot.lane.b32.xlu0 %v2544, 16
      %v2797 = vpop.permute.xlu0 %2796
      %2798 = vrot.lane.b32.xlu0 %v2593, 16
      %v2799 = vpop.permute.xlu0 %2798
      %2804 = vrot.lane.b32.xlu0 %v2643, 32
      %v2805 = vpop.permute.xlu0 %2804
      %2806 = vrot.lane.b32.xlu0 %v2691, 32
      %v2807 = vpop.permute.xlu0 %2806
      %2812 = vrot.lane.b32.xlu0 %v2741, 48
      %v2813 = vpop.permute.xlu0 %2812
      %2814 = vrot.lane.b32.xlu0 %v2789, 48
      %v2815 = vpop.permute.xlu0 %2814
      %v2818 = vsel %vm318, %v2447, %v2797
      %v2819 = vsel %vm318, %v2493, %v2799
      %v2820 = vsel %vm1396, %v2818, %v2805
      %v2821 = vsel %vm1396, %v2819, %v2807
      %v2822 = vsel %vm1399, %v2820, %v2813
      %v2823 = vsel %vm1399, %v2821, %v2815
      %v2824 = vpack.c.bf16 %v2823, %v2822
      %v2826 = vlaneseq
      %v2827 = vshrl.u32 %v2826, 7
      %v2828 = vsub.s32 0, %v2827
      %v2829 = vrot.slane %v1811, %v2828
      %v2839 = vunpack.c.l.b16 %v1800
      %v2840 = vunpack.c.l.b16 %v1801
      %v2841 = vunpack.c.l.b16 %v1802
      %v2842 = vunpack.c.l.b16 %v1803
      %v2843 = vunpack.c.l.b16 %v1804
      %v2844 = vunpack.c.l.b16 %v1805
      %v2845 = vunpack.c.l.b16 %v1806
      %v2846 = vunpack.c.l.b16 %v1807
      %v2847 = vpack.c.b16 %v2840, %v2839
      %v2848 = vpack.c.b16 %v2842, %v2841
      %v2849 = vpack.c.b16 %v2844, %v2843
      %v2850 = vpack.c.b16 %v2846, %v2845
      %v2856 = vsel %vm441, %v2824, 0
      %2858 = vmatprep.subr.bf16.mxu0 0
      %2859 = vmatpush1.bf16.msra.mxu0 0
      %2860 = vmatprep.subr.bf16.mxu0 0
      %2861 = vmatpush1.bf16.msra.mxu0 0
      %2862 = vmatprep.subr.bf16.mxu0 0
      %2863 = vmatpush1.bf16.msra.mxu0 0
      %2864 = vmatprep.subr.bf16.mxu0 0
      %2865 = vmatpush1.bf16.msra.mxu0 0
      %2866 = vmatprep.subr.bf16.mxu0 0
      %2867 = vmatpush1.bf16.msra.mxu0 %v2850
      %2868 = vmatprep.subr.bf16.mxu0 0
      %2869 = vmatpush1.bf16.msra.mxu0 %v2849
      %2870 = vmatprep.subr.bf16.mxu0 0
      %2871 = vmatpush1.bf16.msra.mxu0 %v2848
      %2872 = vmatprep.subr.bf16.mxu0 0
      %2873 = vmatpush1.bf16.msra.mxu0 %v2847
      %2874 = vmatprep.subr.bf16.mxu0 0
      %2875 = vmatpush2.bf16.msra.mxu0 0
      %2876 = vmatprep.subr.bf16.mxu0 0
      %2877 = vmatpush2.bf16.msra.mxu0 0
      %2878 = vmatprep.subr.bf16.mxu0 0
      %2879 = vmatpush2.bf16.msra.mxu0 0
      %2880 = vmatprep.subr.bf16.mxu0 0
      %2881 = vmatpush2.bf16.msra.mxu0 0
      %2882 = vmatprep.subr.bf16.mxu0 0
      %2883 = vmatpush2.bf16.msra.mxu0 0
      %2884 = vmatprep.subr.bf16.mxu0 0
      %2885 = vmatpush2.bf16.msra.mxu0 0
      %2886 = vmatprep.subr.bf16.mxu0 0
      %2887 = vmatpush2.bf16.msra.mxu0 0
      %2888 = vmatprep.subr.bf16.mxu0 0
      %2889 = vmatpush2.bf16.msra.mxu0 0
      %2890 = vmatprep.mubr.bf16.mxu0 0
      %2891 = vmatmul.mubr.bf16.gmra.mxu0 %v2856
      %v2892 = vpop.f32.mrf.mxu0
      %v2893 = vadd.f32 %v2829, %v2892
      %v2894 = vpop.f32.mrf.mxu0
      %v2895 = vpop.f32.mrf.mxu0
      %v2896 = vadd.f32 %v2829, %v2895
      %v2897 = vpop.f32.mrf.mxu0
      %2898 = vdwg.mxu0
      %v2899 = vadd.f32 %v1789, %v2893
      %v2900 = vadd.f32 %v1790, %v2896
      %v2901 = vsel %vm441, %v2899, 0.0
      %2902 = vadd.xlane.f32.xlu0 %v2901
      %v2903 = vpop.xlane.xlu0 %2902
      %v2904 = vsel %vm441, %v2900, 0.0
      %2905 = vadd.xlane.f32.xlu0 %v2904
      %v2906 = vpop.xlane.xlu0 %2905
      %v2907 = vmul.f32 %v2903, %v1485
      %v2908 = vmul.f32 %v2906, %v1485
      %v2909 = vsub.f32 %v2899, %v2907
      %v2910 = vsub.f32 %v2900, %v2908
      %v2911 = vmul.f32 %v2909, %v2909
      %v2912 = vmul.f32 %v2910, %v2910
      %v2913 = vsel %vm441, %v2911, 0.0
      %2914 = vadd.xlane.f32.xlu0 %v2913
      %v2915 = vpop.xlane.xlu0 %2914
      %v2916 = vsel %vm441, %v2912, 0.0
      %2917 = vadd.xlane.f32.xlu0 %v2916
      %v2918 = vpop.xlane.xlu0 %2917
      %v2919 = vmul.f32 %v2915, %v1485
      %v2920 = vmul.f32 %v2918, %v1485
      %v2921 = vadd.f32 %v2919, 1e-05
      %v2922 = vadd.f32 %v2920, 1e-05
      %v2923 = vrsqrt.pop %v2921
      %v2924 = vrsqrt.pop %v2922
      %v2925 = vmul.f32 %v2909, %v2923
      %v2926 = vmul.f32 %v2910, %v2924
      %v2928 = vlaneseq
      %v2929 = vshrl.u32 %v2928, 7
      %v2930 = vsub.s32 0, %v2929
      %v2931 = vrot.slane %v1813, %v2930
      %v2933 = vmul.f32 %v2925, %v2931
      %v2934 = vmul.f32 %v2926, %v2931
      %v2936 = vlaneseq
      %v2937 = vshrl.u32 %v2936, 7
      %v2938 = vsub.s32 0, %v2937
      %v2939 = vrot.slane %v1815, %v2938
      %v2941 = vadd.f32 %v2933, %v2939
      %v2942 = vadd.f32 %v2934, %v2939
      %v2943 = vpack.c.bf16 %v2942, %v2941
      %v2945 = vsel %vm441, %v2943, 0
      %2947 = vmatprep.subr.bf16.mxu0 0
      %2948 = vmatpush1.bf16.msra.mxu0 0
      %2949 = vmatprep.subr.bf16.mxu0 0
      %2950 = vmatpush1.bf16.msra.mxu0 0
      %2951 = vmatprep.subr.bf16.mxu0 0
      %2952 = vmatpush1.bf16.msra.mxu0 0
      %2953 = vmatprep.subr.bf16.mxu0 0
      %2954 = vmatpush1.bf16.msra.mxu0 0
      %2955 = vmatprep.subr.bf16.mxu0 0
      %2956 = vmatpush1.bf16.msra.mxu0 %v1548
      %2957 = vmatprep.subr.bf16.mxu0 0
      %2958 = vmatpush1.bf16.msra.mxu0 %v1547
      %2959 = vmatprep.subr.bf16.mxu0 0
      %2960 = vmatpush1.bf16.msra.mxu0 %v1546
      %2961 = vmatprep.subr.bf16.mxu0 0
      %2962 = vmatpush1.bf16.msra.mxu0 %v1545
      %2963 = vmatprep.subr.bf16.mxu0 0
      %2964 = vmatpush2.bf16.msra.mxu0 0
      %2965 = vmatprep.subr.bf16.mxu0 0
      %2966 = vmatpush2.bf16.msra.mxu0 0
      %2967 = vmatprep.subr.bf16.mxu0 0
      %2968 = vmatpush2.bf16.msra.mxu0 0
      %2969 = vmatprep.subr.bf16.mxu0 0
      %2970 = vmatpush2.bf16.msra.mxu0 0
      %2971 = vmatprep.subr.bf16.mxu0 0
      %2972 = vmatpush2.bf16.msra.mxu0 0
      %2973 = vmatprep.subr.bf16.mxu0 0
      %2974 = vmatpush2.bf16.msra.mxu0 0
      %2975 = vmatprep.subr.bf16.mxu0 0
      %2976 = vmatpush2.bf16.msra.mxu0 0
      %2977 = vmatprep.subr.bf16.mxu0 0
      %2978 = vmatpush2.bf16.msra.mxu0 0
      %2979 = vmatprep.mubr.bf16.mxu0 0
      %2980 = vmatmul.mubr.bf16.gmra.mxu0 %v2945
      %v2981 = vpop.f32.mrf.mxu0
      %v2982 = vadd.f32 %v1527, %v2981
      %v2983 = vpop.f32.mrf.mxu0
      %v2984 = vpop.f32.mrf.mxu0
      %v2985 = vadd.f32 %v1527, %v2984
      %v2986 = vpop.f32.mrf.mxu0
      %2987 = vdwg.mxu0
      %v2988 = vmul.f32 %v2982, 0.5
      %v2989 = vmul.f32 %v2985, 0.5
      %v2990 = vmul.f32 %v2982, 0.70710677
      %v2991 = vmul.f32 %v2985, 0.70710677
      %v2992 = vand.u32 2147483647, %v2990
      %v2993 = vand.u32 2147483647, %v2991
      %v2994 = vmul.f32 %v2992, 0.3275911
      %v2995 = vmul.f32 %v2993, 0.3275911
      %v2996 = vadd.f32 %v2994, 1.0
      %v2997 = vadd.f32 %v2995, 1.0
      %v2998 = vrcp.pop %v2996
      %v2999 = vmul.f32 1.0, %v2998
      %v3000 = vrcp.pop %v2997
      %v3001 = vmul.f32 1.0, %v3000
      %v3002 = vmul.f32 %v2999, 1.0614054
      %v3003 = vmul.f32 %v3001, 1.0614054
      %v3004 = vadd.f32 %v3002, -1.4531521
      %v3005 = vadd.f32 %v3003, -1.4531521
      %v3006 = vmul.f32 %v3004, %v2999
      %v3007 = vmul.f32 %v3005, %v3001
      %v3008 = vadd.f32 %v3006, 1.4214138
      %v3009 = vadd.f32 %v3007, 1.4214138
      %v3010 = vmul.f32 %v3008, %v2999
      %v3011 = vmul.f32 %v3009, %v3001
      %v3012 = vadd.f32 %v3010, -0.28449672
      %v3013 = vadd.f32 %v3011, -0.28449672
      %v3014 = vmul.f32 %v3012, %v2999
      %v3015 = vmul.f32 %v3013, %v3001
      %v3016 = vadd.f32 %v3014, 0.2548296
      %v3017 = vadd.f32 %v3015, 0.2548296
      %v3018 = vmul.f32 %v3016, %v2999
      %v3019 = vmul.f32 %v3017, %v3001
      %v3020 = vsub.f32 0.0, %v2992
      %v3021 = vsub.f32 0.0, %v2993
      %v3022 = vmul.f32 %v3020, %v2992
      %v3023 = vmul.f32 %v3021, %v2993
      %v3024 = vmul.f32 %v3022, 1.442695
      %v3025 = vpow.pop %v3024
      %v3026 = vmul.f32 %v3023, 1.442695
      %v3027 = vpow.pop %v3026
      %v3028 = vmul.f32 %v3018, %v3025
      %v3029 = vmul.f32 %v3019, %v3027
      %v3030 = vsub.f32 1.0, %v3028
      %v3031 = vsub.f32 1.0, %v3029
      %vm3032 = vcmp.ge.f32.partialorder %v2990, 0.0
      %vm3033 = vcmp.ge.f32.partialorder %v2991, 0.0
      %v3034 = vsub.f32 0.0, %v3030
      %v3035 = vsub.f32 0.0, %v3031
      %v3036 = vsel %vm3032, %v3030, %v3034
      %v3037 = vsel %vm3033, %v3031, %v3035
      %v3038 = vadd.f32 %v3036, 1.0
      %v3039 = vadd.f32 %v3037, 1.0
      %v3040 = vmul.f32 %v2988, %v3038
      %v3041 = vmul.f32 %v2989, %v3039
      %v3042 = vpack.c.bf16 %v3041, %v3040
      %3043 = vmatprep.subr.bf16.mxu0 0
      %3044 = vmatpush1.bf16.msra.mxu0 %v1697
      %3045 = vmatprep.subr.bf16.mxu0 0
      %3046 = vmatpush1.bf16.msra.mxu0 %v1696
      %3047 = vmatprep.subr.bf16.mxu0 0
      %3048 = vmatpush1.bf16.msra.mxu0 %v1695
      %3049 = vmatprep.subr.bf16.mxu0 0
      %3050 = vmatpush1.bf16.msra.mxu0 %v1694
      %3051 = vmatprep.subr.bf16.mxu0 0
      %3052 = vmatpush1.bf16.msra.mxu0 %v1693
      %3053 = vmatprep.subr.bf16.mxu0 0
      %3054 = vmatpush1.bf16.msra.mxu0 %v1692
      %3055 = vmatprep.subr.bf16.mxu0 0
      %3056 = vmatpush1.bf16.msra.mxu0 %v1691
      %3057 = vmatprep.subr.bf16.mxu0 0
      %3058 = vmatpush1.bf16.msra.mxu0 %v1690
      %3059 = vmatprep.subr.bf16.mxu0 0
      %3060 = vmatpush2.bf16.msra.mxu0 0
      %3061 = vmatprep.subr.bf16.mxu0 0
      %3062 = vmatpush2.bf16.msra.mxu0 0
      %3063 = vmatprep.subr.bf16.mxu0 0
      %3064 = vmatpush2.bf16.msra.mxu0 0
      %3065 = vmatprep.subr.bf16.mxu0 0
      %3066 = vmatpush2.bf16.msra.mxu0 0
      %3067 = vmatprep.subr.bf16.mxu0 0
      %3068 = vmatpush2.bf16.msra.mxu0 0
      %3069 = vmatprep.subr.bf16.mxu0 0
      %3070 = vmatpush2.bf16.msra.mxu0 0
      %3071 = vmatprep.subr.bf16.mxu0 0
      %3072 = vmatpush2.bf16.msra.mxu0 0
      %3073 = vmatprep.subr.bf16.mxu0 0
      %3074 = vmatpush2.bf16.msra.mxu0 0
      %3075 = vmatprep.mubr.bf16.mxu0 0
      %3076 = vmatmul.mubr.bf16.gmra.mxu0 %v3042
      %v3077 = vpop.f32.mrf.mxu0
      %v3078 = vadd.f32 %v1656, %v3077
      %v3079 = vpop.f32.mrf.mxu0
      %v3080 = vpop.f32.mrf.mxu0
      %v3081 = vadd.f32 %v1656, %v3080
      %v3082 = vpop.f32.mrf.mxu0
      %3083 = vdwg.mxu0
      %v3084 = vadd.f32 %v2941, %v3078
      %v3085 = vadd.f32 %v2942, %v3081
      %v3086 = vsel %vm441, %v3084, 0.0
      %3087 = vadd.xlane.f32.xlu0 %v3086
      %v3088 = vpop.xlane.xlu0 %3087
      %v3089 = vsel %vm441, %v3085, 0.0
      %3090 = vadd.xlane.f32.xlu0 %v3089
      %v3091 = vpop.xlane.xlu0 %3090
      %v3092 = vmul.f32 %v3088, %v1485
      %v3093 = vmul.f32 %v3091, %v1485
      %v3094 = vsub.f32 %v3084, %v3092
      %v3095 = vsub.f32 %v3085, %v3093
      %v3096 = vmul.f32 %v3094, %v3094
      %v3097 = vmul.f32 %v3095, %v3095
      %v3098 = vsel %vm441, %v3096, 0.0
      %3099 = vadd.xlane.f32.xlu0 %v3098
      %v3100 = vpop.xlane.xlu0 %3099
      %v3101 = vsel %vm441, %v3097, 0.0
      %3102 = vadd.xlane.f32.xlu0 %v3101
      %v3103 = vpop.xlane.xlu0 %3102
      %v3104 = vmul.f32 %v3100, %v1485
      %v3105 = vmul.f32 %v3103, %v1485
      %v3106 = vadd.f32 %v3104, 1e-05
      %v3107 = vadd.f32 %v3105, 1e-05
      %v3108 = vrsqrt.pop %v3106
      %v3109 = vrsqrt.pop %v3107
      %v3110 = vmul.f32 %v3094, %v3108
      %v3111 = vmul.f32 %v3095, %v3109
      %v3112 = vmul.f32 %v3110, %v1779
      %v3113 = vmul.f32 %v3111, %v1779
      %v3114 = vadd.f32 %v3112, %v1787
      %v3115 = vadd.f32 %v3113, %v1787
      %s3116 = scalar_lea.vmem %s3, 256
      %v3117 = vld [vmem:[%s3116] sm:$0xff]
      %v3118 = vld [vmem:[%s3116 + $0x8] sm:$0xff]
      %v3119 = vld [vmem:[%s3116 + $0x10] sm:$0xff]
      %v3120 = vld [vmem:[%s3116 + $0x18] sm:$0xff]
      %v3121 = vld [vmem:[%s3116 + $0x20] sm:$0xff]
      %v3122 = vld [vmem:[%s3116 + $0x28] sm:$0xff]
      %v3123 = vld [vmem:[%s3116 + $0x30] sm:$0xff]
      %v3124 = vld [vmem:[%s3116 + $0x38] sm:$0xff]
      %v3125 = vld [vmem:[%s3116 + $0x40] sm:$0xff]
      %v3126 = vld [vmem:[%s3116 + $0x48] sm:$0xff]
      %v3127 = vld [vmem:[%s3116 + $0x50] sm:$0xff]
      %v3128 = vld [vmem:[%s3116 + $0x58] sm:$0xff]
      %v3129 = vld [vmem:[%s3116 + $0x60] sm:$0xff]
      %v3130 = vld [vmem:[%s3116 + $0x68] sm:$0xff]
      %v3131 = vld [vmem:[%s3116 + $0x70] sm:$0xff]
      %v3132 = vld [vmem:[%s3116 + $0x78] sm:$0xff]
      %s3133 = scalar_lea.vmem %s5, 6
      %v3134 = vld [vmem:[%s3133] sm:$0x3]
      %s3135 = scalar_lea.vmem %s5, 12
      %v3136 = vld [vmem:[%s3135] sm:$0x3]
      %s3137 = scalar_lea.vmem %s5, 18
      %v3138 = vld [vmem:[%s3137] sm:$0x3]
      %s3139 = scalar_lea.vmem %s5, 24
      %v3140 = vld [vmem:[%s3139] sm:$0x3]
      %v3141 = vpack.c.bf16 %v3115, %v3114
      %v3143 = vlaneseq
      %v3144 = vshrl.u32 %v3143, 7
      %v3145 = vsub.s32 0, %v3144
      %v3146 = vrot.slane %v3134, %v3145
      %v3147 = vlaneseq
      %v3148 = vshrl.u32 %v3147, 7
      %v3149 = vsub.s32 1, %v3148
      %v3150 = vrot.slane %v3134, %v3149
      %v3161 = vunpack.c.l.b16 %v3117
      %v3162 = vunpack.c.h.b16 %v3117
      %v3163 = vunpack.c.l.b16 %v3118
      %v3164 = vunpack.c.h.b16 %v3118
      %v3165 = vunpack.c.l.b16 %v3119
      %v3166 = vunpack.c.h.b16 %v3119
      %v3167 = vunpack.c.l.b16 %v3120
      %v3168 = vunpack.c.h.b16 %v3120
      %v3169 = vunpack.c.l.b16 %v3121
      %v3170 = vunpack.c.h.b16 %v3121
      %v3171 = vunpack.c.l.b16 %v3122
      %v3172 = vunpack.c.h.b16 %v3122
      %v3173 = vunpack.c.l.b16 %v3123
      %v3174 = vunpack.c.h.b16 %v3123
      %v3175 = vunpack.c.l.b16 %v3124
      %v3176 = vunpack.c.h.b16 %v3124
      %v3177 = vpack.c.b16 %v3163, %v3161
      %v3178 = vpack.c.b16 %v3164, %v3162
      %v3179 = vpack.c.b16 %v3167, %v3165
      %v3180 = vpack.c.b16 %v3168, %v3166
      %v3181 = vpack.c.b16 %v3171, %v3169
      %v3182 = vpack.c.b16 %v3172, %v3170
      %v3183 = vpack.c.b16 %v3175, %v3173
      %v3184 = vpack.c.b16 %v3176, %v3174
      %v3194 = vsel %vm441, %v3141, 0
      %3196 = vmatprep.subr.bf16.mxu0 0
      %3197 = vmatpush1.bf16.msra.mxu0 0
      %3198 = vmatprep.subr.bf16.mxu0 0
      %3199 = vmatpush1.bf16.msra.mxu0 0
      %3200 = vmatprep.subr.bf16.mxu0 0
      %3201 = vmatpush1.bf16.msra.mxu0 0
      %3202 = vmatprep.subr.bf16.mxu0 0
      %3203 = vmatpush1.bf16.msra.mxu0 0
      %3204 = vmatprep.subr.bf16.mxu0 %v3184
      %3205 = vmatpush1.bf16.msra.mxu0 %v3183
      %3206 = vmatprep.subr.bf16.mxu0 %v3182
      %3207 = vmatpush1.bf16.msra.mxu0 %v3181
      %3208 = vmatprep.subr.bf16.mxu0 %v3180
      %3209 = vmatpush1.bf16.msra.mxu0 %v3179
      %3210 = vmatprep.subr.bf16.mxu0 %v3178
      %3211 = vmatpush1.bf16.msra.mxu0 %v3177
      %3212 = vmatprep.subr.bf16.mxu0 0
      %3213 = vmatpush2.bf16.msra.mxu0 0
      %3214 = vmatprep.subr.bf16.mxu0 0
      %3215 = vmatpush2.bf16.msra.mxu0 0
      %3216 = vmatprep.subr.bf16.mxu0 0
      %3217 = vmatpush2.bf16.msra.mxu0 0
      %3218 = vmatprep.subr.bf16.mxu0 0
      %3219 = vmatpush2.bf16.msra.mxu0 0
      %3220 = vmatprep.subr.bf16.mxu0 0
      %3221 = vmatpush2.bf16.msra.mxu0 0
      %3222 = vmatprep.subr.bf16.mxu0 0
      %3223 = vmatpush2.bf16.msra.mxu0 0
      %3224 = vmatprep.subr.bf16.mxu0 0
      %3225 = vmatpush2.bf16.msra.mxu0 0
      %3226 = vmatprep.subr.bf16.mxu0 0
      %3227 = vmatpush2.bf16.msra.mxu0 0
      %3228 = vmatprep.mubr.bf16.mxu0 0
      %3229 = vmatmul.mubr.bf16.gmra.mxu0 %v3194
      %v3230 = vpop.f32.mrf.mxu0
      %v3231 = vadd.f32 %v3146, %v3230
      %v3232 = vpop.f32.mrf.mxu0
      %v3233 = vadd.f32 %v3150, %v3232
      %v3234 = vpop.f32.mrf.mxu0
      %v3235 = vadd.f32 %v3146, %v3234
      %v3236 = vpop.f32.mrf.mxu0
      %v3237 = vadd.f32 %v3150, %v3236
      %3238 = vdwg.mxu0
      %v3239 = vpack.c.bf16 %v3231, %v3231
      %v3240 = vpack.c.bf16 %v3235, %v3235
      %3242 = vrot.lane.b32.xlu0 %v3239, 64
      %v3243 = vpop.permute.xlu0 %3242
      %v3245 = vsel %vm318, %v3239, 0
      %v3248 = vsel %vm318, %v3243, 0
      %3250 = vmatprep.subr.bf16.mxu0 0
      %3251 = vmatpush1.bf16.xpose.msra.mxu0 0
      %3252 = vmatprep.subr.bf16.mxu0 0
      %3253 = vmatpush1.bf16.xpose.msra.mxu0 0
      %3254 = vmatprep.subr.bf16.mxu0 0
      %3255 = vmatpush1.bf16.xpose.msra.mxu0 0
      %3256 = vmatprep.subr.bf16.mxu0 0
      %3257 = vmatpush1.bf16.xpose.msra.mxu0 0
      %3258 = vmatprep.subr.bf16.mxu0 0
      %3259 = vmatpush1.bf16.xpose.msra.mxu0 0
      %3260 = vmatprep.subr.bf16.mxu0 0
      %3261 = vmatpush1.bf16.xpose.msra.mxu0 0
      %3262 = vmatprep.subr.bf16.mxu0 0
      %3263 = vmatpush1.bf16.xpose.msra.mxu0 0
      %3264 = vmatprep.subr.bf16.mxu0 0
      %3265 = vmatpush1.bf16.xpose.msra.mxu0 %v3248
      %3266 = vmatprep.subr.bf16.mxu0 0
      %3267 = vmatpush2.bf16.xpose.msra.mxu0 0
      %3268 = vmatprep.subr.bf16.mxu0 0
      %3269 = vmatpush2.bf16.xpose.msra.mxu0 0
      %3270 = vmatprep.subr.bf16.mxu0 0
      %3271 = vmatpush2.bf16.xpose.msra.mxu0 0
      %3272 = vmatprep.subr.bf16.mxu0 0
      %3273 = vmatpush2.bf16.xpose.msra.mxu0 0
      %3274 = vmatprep.subr.bf16.mxu0 0
      %3275 = vmatpush2.bf16.xpose.msra.mxu0 0
      %3276 = vmatprep.subr.bf16.mxu0 0
      %3277 = vmatpush2.bf16.xpose.msra.mxu0 0
      %3278 = vmatprep.subr.bf16.mxu0 0
      %3279 = vmatpush2.bf16.xpose.msra.mxu0 0
      %3280 = vmatprep.subr.bf16.mxu0 0
      %3281 = vmatpush2.bf16.xpose.msra.mxu0 0
      %3282 = vmatprep.mubr.bf16.mxu0 0
      %3283 = vmatmul.mubr.bf16.gmra.mxu0 %v3245
      %v3284 = vpop.f32.mrf.mxu0
      %v3285 = vadd.f32 0.0, %v3284
      %v3286 = vpop.f32.mrf.mxu0
      %v3287 = vpop.f32.mrf.mxu0
      %v3288 = vpop.f32.mrf.mxu0
      %3289 = vdwg.mxu0
      %3291 = vrot.lane.b32.xlu0 %v3240, 64
      %v3292 = vpop.permute.xlu0 %3291
      %v3294 = vsel %vm318, %v3240, 0
      %v3297 = vsel %vm318, %v3292, 0
      %3299 = vmatprep.subr.bf16.mxu0 0
      %3300 = vmatpush1.bf16.xpose.msra.mxu0 0
      %3301 = vmatprep.subr.bf16.mxu0 0
      %3302 = vmatpush1.bf16.xpose.msra.mxu0 0
      %3303 = vmatprep.subr.bf16.mxu0 0
      %3304 = vmatpush1.bf16.xpose.msra.mxu0 0
      %3305 = vmatprep.subr.bf16.mxu0 0
      %3306 = vmatpush1.bf16.xpose.msra.mxu0 0
      %3307 = vmatprep.subr.bf16.mxu0 0
      %3308 = vmatpush1.bf16.xpose.msra.mxu0 0
      %3309 = vmatprep.subr.bf16.mxu0 0
      %3310 = vmatpush1.bf16.xpose.msra.mxu0 0
      %3311 = vmatprep.subr.bf16.mxu0 0
      %3312 = vmatpush1.bf16.xpose.msra.mxu0 0
      %3313 = vmatprep.subr.bf16.mxu0 0
      %3314 = vmatpush1.bf16.xpose.msra.mxu0 %v3297
      %3315 = vmatprep.subr.bf16.mxu0 0
      %3316 = vmatpush2.bf16.xpose.msra.mxu0 0
      %3317 = vmatprep.subr.bf16.mxu0 0
      %3318 = vmatpush2.bf16.xpose.msra.mxu0 0
      %3319 = vmatprep.subr.bf16.mxu0 0
      %3320 = vmatpush2.bf16.xpose.msra.mxu0 0
      %3321 = vmatprep.subr.bf16.mxu0 0
      %3322 = vmatpush2.bf16.xpose.msra.mxu0 0
      %3323 = vmatprep.subr.bf16.mxu0 0
      %3324 = vmatpush2.bf16.xpose.msra.mxu0 0
      %3325 = vmatprep.subr.bf16.mxu0 0
      %3326 = vmatpush2.bf16.xpose.msra.mxu0 0
      %3327 = vmatprep.subr.bf16.mxu0 0
      %3328 = vmatpush2.bf16.xpose.msra.mxu0 0
      %3329 = vmatprep.subr.bf16.mxu0 0
      %3330 = vmatpush2.bf16.xpose.msra.mxu0 0
      %3331 = vmatprep.mubr.bf16.mxu0 0
      %3332 = vmatmul.mubr.bf16.gmra.mxu0 %v3294
      %v3333 = vpop.f32.mrf.mxu0
      %v3334 = vadd.f32 0.0, %v3333
      %v3335 = vpop.f32.mrf.mxu0
      %v3336 = vpop.f32.mrf.mxu0
      %v3337 = vpop.f32.mrf.mxu0
      %3338 = vdwg.mxu0
      %3339 = vrot.lane.b32.xlu0 %v3239, 112
      %v3340 = vpop.permute.xlu0 %3339
      %3341 = vrot.lane.b32.xlu0 %v3239, 48
      %v3342 = vpop.permute.xlu0 %3341
      %v3344 = vsel %vm318, %v3340, 0
      %v3347 = vsel %vm318, %v3342, 0
      %3349 = vmatprep.subr.bf16.mxu0 0
      %3350 = vmatpush1.bf16.xpose.msra.mxu0 0
      %3351 = vmatprep.subr.bf16.mxu0 0
      %3352 = vmatpush1.bf16.xpose.msra.mxu0 0
      %3353 = vmatprep.subr.bf16.mxu0 0
      %3354 = vmatpush1.bf16.xpose.msra.mxu0 0
      %3355 = vmatprep.subr.bf16.mxu0 0
      %3356 = vmatpush1.bf16.xpose.msra.mxu0 0
      %3357 = vmatprep.subr.bf16.mxu0 0
      %3358 = vmatpush1.bf16.xpose.msra.mxu0 0
      %3359 = vmatprep.subr.bf16.mxu0 0
      %3360 = vmatpush1.bf16.xpose.msra.mxu0 0
      %3361 = vmatprep.subr.bf16.mxu0 0
      %3362 = vmatpush1.bf16.xpose.msra.mxu0 0
      %3363 = vmatprep.subr.bf16.mxu0 0
      %3364 = vmatpush1.bf16.xpose.msra.mxu0 %v3347
      %3365 = vmatprep.subr.bf16.mxu0 0
      %3366 = vmatpush2.bf16.xpose.msra.mxu0 0
      %3367 = vmatprep.subr.bf16.mxu0 0
      %3368 = vmatpush2.bf16.xpose.msra.mxu0 0
      %3369 = vmatprep.subr.bf16.mxu0 0
      %3370 = vmatpush2.bf16.xpose.msra.mxu0 0
      %3371 = vmatprep.subr.bf16.mxu0 0
      %3372 = vmatpush2.bf16.xpose.msra.mxu0 0
      %3373 = vmatprep.subr.bf16.mxu0 0
      %3374 = vmatpush2.bf16.xpose.msra.mxu0 0
      %3375 = vmatprep.subr.bf16.mxu0 0
      %3376 = vmatpush2.bf16.xpose.msra.mxu0 0
      %3377 = vmatprep.subr.bf16.mxu0 0
      %3378 = vmatpush2.bf16.xpose.msra.mxu0 0
      %3379 = vmatprep.subr.bf16.mxu0 0
      %3380 = vmatpush2.bf16.xpose.msra.mxu0 0
      %3381 = vmatprep.mubr.bf16.mxu0 0
      %3382 = vmatmul.mubr.bf16.gmra.mxu0 %v3344
      %v3383 = vpop.f32.mrf.mxu0
      %v3384 = vadd.f32 0.0, %v3383
      %v3385 = vpop.f32.mrf.mxu0
      %v3386 = vpop.f32.mrf.mxu0
      %v3387 = vpop.f32.mrf.mxu0
      %3388 = vdwg.mxu0
      %3389 = vrot.lane.b32.xlu0 %v3240, 112
      %v3390 = vpop.permute.xlu0 %3389
      %3391 = vrot.lane.b32.xlu0 %v3240, 48
      %v3392 = vpop.permute.xlu0 %3391
      %v3394 = vsel %vm318, %v3390, 0
      %v3397 = vsel %vm318, %v3392, 0
      %3399 = vmatprep.subr.bf16.mxu0 0
      %3400 = vmatpush1.bf16.xpose.msra.mxu0 0
      %3401 = vmatprep.subr.bf16.mxu0 0
      %3402 = vmatpush1.bf16.xpose.msra.mxu0 0
      %3403 = vmatprep.subr.bf16.mxu0 0
      %3404 = vmatpush1.bf16.xpose.msra.mxu0 0
      %3405 = vmatprep.subr.bf16.mxu0 0
      %3406 = vmatpush1.bf16.xpose.msra.mxu0 0
      %3407 = vmatprep.subr.bf16.mxu0 0
      %3408 = vmatpush1.bf16.xpose.msra.mxu0 0
      %3409 = vmatprep.subr.bf16.mxu0 0
      %3410 = vmatpush1.bf16.xpose.msra.mxu0 0
      %3411 = vmatprep.subr.bf16.mxu0 0
      %3412 = vmatpush1.bf16.xpose.msra.mxu0 0
      %3413 = vmatprep.subr.bf16.mxu0 0
      %3414 = vmatpush1.bf16.xpose.msra.mxu0 %v3397
      %3415 = vmatprep.subr.bf16.mxu0 0
      %3416 = vmatpush2.bf16.xpose.msra.mxu0 0
      %3417 = vmatprep.subr.bf16.mxu0 0
      %3418 = vmatpush2.bf16.xpose.msra.mxu0 0
      %3419 = vmatprep.subr.bf16.mxu0 0
      %3420 = vmatpush2.bf16.xpose.msra.mxu0 0
      %3421 = vmatprep.subr.bf16.mxu0 0
      %3422 = vmatpush2.bf16.xpose.msra.mxu0 0
      %3423 = vmatprep.subr.bf16.mxu0 0
      %3424 = vmatpush2.bf16.xpose.msra.mxu0 0
      %3425 = vmatprep.subr.bf16.mxu0 0
      %3426 = vmatpush2.bf16.xpose.msra.mxu0 0
      %3427 = vmatprep.subr.bf16.mxu0 0
      %3428 = vmatpush2.bf16.xpose.msra.mxu0 0
      %3429 = vmatprep.subr.bf16.mxu0 0
      %3430 = vmatpush2.bf16.xpose.msra.mxu0 0
      %3431 = vmatprep.mubr.bf16.mxu0 0
      %3432 = vmatmul.mubr.bf16.gmra.mxu0 %v3394
      %v3433 = vpop.f32.mrf.mxu0
      %v3434 = vadd.f32 0.0, %v3433
      %v3435 = vpop.f32.mrf.mxu0
      %v3436 = vpop.f32.mrf.mxu0
      %v3437 = vpop.f32.mrf.mxu0
      %3438 = vdwg.mxu0
      %3439 = vrot.lane.b32.xlu0 %v3239, 96
      %v3440 = vpop.permute.xlu0 %3439
      %3441 = vrot.lane.b32.xlu0 %v3239, 32
      %v3442 = vpop.permute.xlu0 %3441
      %v3444 = vsel %vm318, %v3440, 0
      %v3447 = vsel %vm318, %v3442, 0
      %3449 = vmatprep.subr.bf16.mxu0 0
      %3450 = vmatpush1.bf16.xpose.msra.mxu0 0
      %3451 = vmatprep.subr.bf16.mxu0 0
      %3452 = vmatpush1.bf16.xpose.msra.mxu0 0
      %3453 = vmatprep.subr.bf16.mxu0 0
      %3454 = vmatpush1.bf16.xpose.msra.mxu0 0
      %3455 = vmatprep.subr.bf16.mxu0 0
      %3456 = vmatpush1.bf16.xpose.msra.mxu0 0
      %3457 = vmatprep.subr.bf16.mxu0 0
      %3458 = vmatpush1.bf16.xpose.msra.mxu0 0
      %3459 = vmatprep.subr.bf16.mxu0 0
      %3460 = vmatpush1.bf16.xpose.msra.mxu0 0
      %3461 = vmatprep.subr.bf16.mxu0 0
      %3462 = vmatpush1.bf16.xpose.msra.mxu0 0
      %3463 = vmatprep.subr.bf16.mxu0 0
      %3464 = vmatpush1.bf16.xpose.msra.mxu0 %v3447
      %3465 = vmatprep.subr.bf16.mxu0 0
      %3466 = vmatpush2.bf16.xpose.msra.mxu0 0
      %3467 = vmatprep.subr.bf16.mxu0 0
      %3468 = vmatpush2.bf16.xpose.msra.mxu0 0
      %3469 = vmatprep.subr.bf16.mxu0 0
      %3470 = vmatpush2.bf16.xpose.msra.mxu0 0
      %3471 = vmatprep.subr.bf16.mxu0 0
      %3472 = vmatpush2.bf16.xpose.msra.mxu0 0
      %3473 = vmatprep.subr.bf16.mxu0 0
      %3474 = vmatpush2.bf16.xpose.msra.mxu0 0
      %3475 = vmatprep.subr.bf16.mxu0 0
      %3476 = vmatpush2.bf16.xpose.msra.mxu0 0
      %3477 = vmatprep.subr.bf16.mxu0 0
      %3478 = vmatpush2.bf16.xpose.msra.mxu0 0
      %3479 = vmatprep.subr.bf16.mxu0 0
      %3480 = vmatpush2.bf16.xpose.msra.mxu0 0
      %3481 = vmatprep.mubr.bf16.mxu0 0
      %3482 = vmatmul.mubr.bf16.gmra.mxu0 %v3444
      %v3483 = vpop.f32.mrf.mxu0
      %v3484 = vadd.f32 0.0, %v3483
      %v3485 = vpop.f32.mrf.mxu0
      %v3486 = vpop.f32.mrf.mxu0
      %v3487 = vpop.f32.mrf.mxu0
      %3488 = vdwg.mxu0
      %3489 = vrot.lane.b32.xlu0 %v3240, 96
      %v3490 = vpop.permute.xlu0 %3489
      %3491 = vrot.lane.b32.xlu0 %v3240, 32
      %v3492 = vpop.permute.xlu0 %3491
      %v3494 = vsel %vm318, %v3490, 0
      %v3497 = vsel %vm318, %v3492, 0
      %3499 = vmatprep.subr.bf16.mxu0 0
      %3500 = vmatpush1.bf16.xpose.msra.mxu0 0
      %3501 = vmatprep.subr.bf16.mxu0 0
      %3502 = vmatpush1.bf16.xpose.msra.mxu0 0
      %3503 = vmatprep.subr.bf16.mxu0 0
      %3504 = vmatpush1.bf16.xpose.msra.mxu0 0
      %3505 = vmatprep.subr.bf16.mxu0 0
      %3506 = vmatpush1.bf16.xpose.msra.mxu0 0
      %3507 = vmatprep.subr.bf16.mxu0 0
      %3508 = vmatpush1.bf16.xpose.msra.mxu0 0
      %3509 = vmatprep.subr.bf16.mxu0 0
      %3510 = vmatpush1.bf16.xpose.msra.mxu0 0
      %3511 = vmatprep.subr.bf16.mxu0 0
      %3512 = vmatpush1.bf16.xpose.msra.mxu0 0
      %3513 = vmatprep.subr.bf16.mxu0 0
      %3514 = vmatpush1.bf16.xpose.msra.mxu0 %v3497
      %3515 = vmatprep.subr.bf16.mxu0 0
      %3516 = vmatpush2.bf16.xpose.msra.mxu0 0
      %3517 = vmatprep.subr.bf16.mxu0 0
      %3518 = vmatpush2.bf16.xpose.msra.mxu0 0
      %3519 = vmatprep.subr.bf16.mxu0 0
      %3520 = vmatpush2.bf16.xpose.msra.mxu0 0
      %3521 = vmatprep.subr.bf16.mxu0 0
      %3522 = vmatpush2.bf16.xpose.msra.mxu0 0
      %3523 = vmatprep.subr.bf16.mxu0 0
      %3524 = vmatpush2.bf16.xpose.msra.mxu0 0
      %3525 = vmatprep.subr.bf16.mxu0 0
      %3526 = vmatpush2.bf16.xpose.msra.mxu0 0
      %3527 = vmatprep.subr.bf16.mxu0 0
      %3528 = vmatpush2.bf16.xpose.msra.mxu0 0
      %3529 = vmatprep.subr.bf16.mxu0 0
      %3530 = vmatpush2.bf16.xpose.msra.mxu0 0
      %3531 = vmatprep.mubr.bf16.mxu0 0
      %3532 = vmatmul.mubr.bf16.gmra.mxu0 %v3494
      %v3533 = vpop.f32.mrf.mxu0
      %v3534 = vadd.f32 0.0, %v3533
      %v3535 = vpop.f32.mrf.mxu0
      %v3536 = vpop.f32.mrf.mxu0
      %v3537 = vpop.f32.mrf.mxu0
      %3538 = vdwg.mxu0
      %3539 = vrot.lane.b32.xlu0 %v3239, 80
      %v3540 = vpop.permute.xlu0 %3539
      %3541 = vrot.lane.b32.xlu0 %v3239, 16
      %v3542 = vpop.permute.xlu0 %3541
      %v3544 = vsel %vm318, %v3540, 0
      %v3547 = vsel %vm318, %v3542, 0
      %3549 = vmatprep.subr.bf16.mxu0 0
      %3550 = vmatpush1.bf16.xpose.msra.mxu0 0
      %3551 = vmatprep.subr.bf16.mxu0 0
      %3552 = vmatpush1.bf16.xpose.msra.mxu0 0
      %3553 = vmatprep.subr.bf16.mxu0 0
      %3554 = vmatpush1.bf16.xpose.msra.mxu0 0
      %3555 = vmatprep.subr.bf16.mxu0 0
      %3556 = vmatpush1.bf16.xpose.msra.mxu0 0
      %3557 = vmatprep.subr.bf16.mxu0 0
      %3558 = vmatpush1.bf16.xpose.msra.mxu0 0
      %3559 = vmatprep.subr.bf16.mxu0 0
      %3560 = vmatpush1.bf16.xpose.msra.mxu0 0
      %3561 = vmatprep.subr.bf16.mxu0 0
      %3562 = vmatpush1.bf16.xpose.msra.mxu0 0
      %3563 = vmatprep.subr.bf16.mxu0 0
      %3564 = vmatpush1.bf16.xpose.msra.mxu0 %v3547
      %3565 = vmatprep.subr.bf16.mxu0 0
      %3566 = vmatpush2.bf16.xpose.msra.mxu0 0
      %3567 = vmatprep.subr.bf16.mxu0 0
      %3568 = vmatpush2.bf16.xpose.msra.mxu0 0
      %3569 = vmatprep.subr.bf16.mxu0 0
      %3570 = vmatpush2.bf16.xpose.msra.mxu0 0
      %3571 = vmatprep.subr.bf16.mxu0 0
      %3572 = vmatpush2.bf16.xpose.msra.mxu0 0
      %3573 = vmatprep.subr.bf16.mxu0 0
      %3574 = vmatpush2.bf16.xpose.msra.mxu0 0
      %3575 = vmatprep.subr.bf16.mxu0 0
      %3576 = vmatpush2.bf16.xpose.msra.mxu0 0
      %3577 = vmatprep.subr.bf16.mxu0 0
      %3578 = vmatpush2.bf16.xpose.msra.mxu0 0
      %3579 = vmatprep.subr.bf16.mxu0 0
      %3580 = vmatpush2.bf16.xpose.msra.mxu0 0
      %3581 = vmatprep.mubr.bf16.mxu0 0
      %3582 = vmatmul.mubr.bf16.gmra.mxu0 %v3544
      %v3583 = vpop.f32.mrf.mxu0
      %v3584 = vadd.f32 0.0, %v3583
      %v3585 = vpop.f32.mrf.mxu0
      %v3586 = vpop.f32.mrf.mxu0
      %v3587 = vpop.f32.mrf.mxu0
      %3588 = vdwg.mxu0
      %3589 = vrot.lane.b32.xlu0 %v3240, 80
      %v3590 = vpop.permute.xlu0 %3589
      %3591 = vrot.lane.b32.xlu0 %v3240, 16
      %v3592 = vpop.permute.xlu0 %3591
      %v3594 = vsel %vm318, %v3590, 0
      %v3597 = vsel %vm318, %v3592, 0
      %3599 = vmatprep.subr.bf16.mxu0 0
      %3600 = vmatpush1.bf16.xpose.msra.mxu0 0
      %3601 = vmatprep.subr.bf16.mxu0 0
      %3602 = vmatpush1.bf16.xpose.msra.mxu0 0
      %3603 = vmatprep.subr.bf16.mxu0 0
      %3604 = vmatpush1.bf16.xpose.msra.mxu0 0
      %3605 = vmatprep.subr.bf16.mxu0 0
      %3606 = vmatpush1.bf16.xpose.msra.mxu0 0
      %3607 = vmatprep.subr.bf16.mxu0 0
      %3608 = vmatpush1.bf16.xpose.msra.mxu0 0
      %3609 = vmatprep.subr.bf16.mxu0 0
      %3610 = vmatpush1.bf16.xpose.msra.mxu0 0
      %3611 = vmatprep.subr.bf16.mxu0 0
      %3612 = vmatpush1.bf16.xpose.msra.mxu0 0
      %3613 = vmatprep.subr.bf16.mxu0 0
      %3614 = vmatpush1.bf16.xpose.msra.mxu0 %v3597
      %3615 = vmatprep.subr.bf16.mxu0 0
      %3616 = vmatpush2.bf16.xpose.msra.mxu0 0
      %3617 = vmatprep.subr.bf16.mxu0 0
      %3618 = vmatpush2.bf16.xpose.msra.mxu0 0
      %3619 = vmatprep.subr.bf16.mxu0 0
      %3620 = vmatpush2.bf16.xpose.msra.mxu0 0
      %3621 = vmatprep.subr.bf16.mxu0 0
      %3622 = vmatpush2.bf16.xpose.msra.mxu0 0
      %3623 = vmatprep.subr.bf16.mxu0 0
      %3624 = vmatpush2.bf16.xpose.msra.mxu0 0
      %3625 = vmatprep.subr.bf16.mxu0 0
      %3626 = vmatpush2.bf16.xpose.msra.mxu0 0
      %3627 = vmatprep.subr.bf16.mxu0 0
      %3628 = vmatpush2.bf16.xpose.msra.mxu0 0
      %3629 = vmatprep.subr.bf16.mxu0 0
      %3630 = vmatpush2.bf16.xpose.msra.mxu0 0
      %3631 = vmatprep.mubr.bf16.mxu0 0
      %3632 = vmatmul.mubr.bf16.gmra.mxu0 %v3594
      %v3633 = vpop.f32.mrf.mxu0
      %v3634 = vadd.f32 0.0, %v3633
      %v3635 = vpop.f32.mrf.mxu0
      %v3636 = vpop.f32.mrf.mxu0
      %v3637 = vpop.f32.mrf.mxu0
      %3638 = vdwg.mxu0
      %v3639 = vsel %vm888, %v3285, -inf
      %3640 = vmax.xlane.f32.xlu0 %v3639
      %v3641 = vpop.xlane.xlu0 %3640
      %v3642 = vsel %vm888, %v3384, -inf
      %3643 = vmax.xlane.f32.xlu0 %v3642
      %v3644 = vpop.xlane.xlu0 %3643
      %v3645 = vsel %vm888, %v3484, -inf
      %3646 = vmax.xlane.f32.xlu0 %v3645
      %v3647 = vpop.xlane.xlu0 %3646
      %v3648 = vsel %vm888, %v3584, -inf
      %3649 = vmax.xlane.f32.xlu0 %v3648
      %v3650 = vpop.xlane.xlu0 %3649
      %v3651 = vsel %vm888, %v3334, -inf
      %3652 = vmax.xlane.f32.xlu0 %v3651
      %v3653 = vpop.xlane.xlu0 %3652
      %v3654 = vsel %vm888, %v3434, -inf
      %3655 = vmax.xlane.f32.xlu0 %v3654
      %v3656 = vpop.xlane.xlu0 %3655
      %v3657 = vsel %vm888, %v3534, -inf
      %3658 = vmax.xlane.f32.xlu0 %v3657
      %v3659 = vpop.xlane.xlu0 %3658
      %v3660 = vsel %vm888, %v3634, -inf
      %3661 = vmax.xlane.f32.xlu0 %v3660
      %v3662 = vpop.xlane.xlu0 %3661
      %v3663 = vsub.f32 %v3285, %v3641
      %v3664 = vsub.f32 %v3384, %v3644
      %v3665 = vsub.f32 %v3484, %v3647
      %v3666 = vsub.f32 %v3584, %v3650
      %v3667 = vsub.f32 %v3334, %v3653
      %v3668 = vsub.f32 %v3434, %v3656
      %v3669 = vsub.f32 %v3534, %v3659
      %v3670 = vsub.f32 %v3634, %v3662
      %v3671 = vmul.f32 %v3663, 1.442695
      %v3672 = vpow.pop %v3671
      %v3673 = vmul.f32 %v3664, 1.442695
      %v3674 = vpow.pop %v3673
      %v3675 = vmul.f32 %v3665, 1.442695
      %v3676 = vpow.pop %v3675
      %v3677 = vmul.f32 %v3666, 1.442695
      %v3678 = vpow.pop %v3677
      %v3679 = vmul.f32 %v3667, 1.442695
      %v3680 = vpow.pop %v3679
      %v3681 = vmul.f32 %v3668, 1.442695
      %v3682 = vpow.pop %v3681
      %v3683 = vmul.f32 %v3669, 1.442695
      %v3684 = vpow.pop %v3683
      %v3685 = vmul.f32 %v3670, 1.442695
      %v3686 = vpow.pop %v3685
      %v3687 = vsel %vm888, %v3672, 0.0
      %3688 = vadd.xlane.f32.xlu0 %v3687
      %v3689 = vpop.xlane.xlu0 %3688
      %v3690 = vsel %vm888, %v3674, 0.0
      %3691 = vadd.xlane.f32.xlu0 %v3690
      %v3692 = vpop.xlane.xlu0 %3691
      %v3693 = vsel %vm888, %v3676, 0.0
      %3694 = vadd.xlane.f32.xlu0 %v3693
      %v3695 = vpop.xlane.xlu0 %3694
      %v3696 = vsel %vm888, %v3678, 0.0
      %3697 = vadd.xlane.f32.xlu0 %v3696
      %v3698 = vpop.xlane.xlu0 %3697
      %v3699 = vsel %vm888, %v3680, 0.0
      %3700 = vadd.xlane.f32.xlu0 %v3699
      %v3701 = vpop.xlane.xlu0 %3700
      %v3702 = vsel %vm888, %v3682, 0.0
      %3703 = vadd.xlane.f32.xlu0 %v3702
      %v3704 = vpop.xlane.xlu0 %3703
      %v3705 = vsel %vm888, %v3684, 0.0
      %3706 = vadd.xlane.f32.xlu0 %v3705
      %v3707 = vpop.xlane.xlu0 %3706
      %v3708 = vsel %vm888, %v3686, 0.0
      %3709 = vadd.xlane.f32.xlu0 %v3708
      %v3710 = vpop.xlane.xlu0 %3709
      %v3711 = vrcp.pop %v3689
      %v3712 = vrcp.pop %v3692
      %v3713 = vrcp.pop %v3695
      %v3714 = vrcp.pop %v3698
      %v3715 = vrcp.pop %v3701
      %v3716 = vrcp.pop %v3704
      %v3717 = vrcp.pop %v3707
      %v3718 = vrcp.pop %v3710
      %v3719 = vmul.f32 %v3672, %v3711
      %v3720 = vmul.f32 %v3674, %v3712
      %v3721 = vmul.f32 %v3676, %v3713
      %v3722 = vmul.f32 %v3678, %v3714
      %v3723 = vmul.f32 %v3680, %v3715
      %v3724 = vmul.f32 %v3682, %v3716
      %v3725 = vmul.f32 %v3684, %v3717
      %v3726 = vmul.f32 %v3686, %v3718
      %v3727 = vpack.c.bf16 %v3719, %v3719
      %v3728 = vpack.c.bf16 %v3723, %v3723
      %v3729 = vpack.c.bf16 %v3233, %v3233
      %v3730 = vpack.c.bf16 %v3237, %v3237
      %v3732 = vsel %vm888, %v3727, 0
      %v3735 = vsel %vm984, %v3729, 0
      %3737 = vmatprep.subr.bf16.mxu0 0
      %3738 = vmatpush1.bf16.msra.mxu0 0
      %3739 = vmatprep.subr.bf16.mxu0 0
      %3740 = vmatpush1.bf16.msra.mxu0 0
      %3741 = vmatprep.subr.bf16.mxu0 0
      %3742 = vmatpush1.bf16.msra.mxu0 0
      %3743 = vmatprep.subr.bf16.mxu0 0
      %3744 = vmatpush1.bf16.msra.mxu0 0
      %3745 = vmatprep.subr.bf16.mxu0 0
      %3746 = vmatpush1.bf16.msra.mxu0 0
      %3747 = vmatprep.subr.bf16.mxu0 0
      %3748 = vmatpush1.bf16.msra.mxu0 0
      %3749 = vmatprep.subr.bf16.mxu0 0
      %3750 = vmatpush1.bf16.msra.mxu0 0
      %3751 = vmatprep.subr.bf16.mxu0 0
      %3752 = vmatpush1.bf16.msra.mxu0 %v3735
      %3753 = vmatprep.subr.bf16.mxu0 0
      %3754 = vmatpush2.bf16.msra.mxu0 0
      %3755 = vmatprep.subr.bf16.mxu0 0
      %3756 = vmatpush2.bf16.msra.mxu0 0
      %3757 = vmatprep.subr.bf16.mxu0 0
      %3758 = vmatpush2.bf16.msra.mxu0 0
      %3759 = vmatprep.subr.bf16.mxu0 0
      %3760 = vmatpush2.bf16.msra.mxu0 0
      %3761 = vmatprep.subr.bf16.mxu0 0
      %3762 = vmatpush2.bf16.msra.mxu0 0
      %3763 = vmatprep.subr.bf16.mxu0 0
      %3764 = vmatpush2.bf16.msra.mxu0 0
      %3765 = vmatprep.subr.bf16.mxu0 0
      %3766 = vmatpush2.bf16.msra.mxu0 0
      %3767 = vmatprep.subr.bf16.mxu0 0
      %3768 = vmatpush2.bf16.msra.mxu0 0
      %3769 = vmatprep.mubr.bf16.mxu0 0
      %3770 = vmatmul.mubr.bf16.gmra.mxu0 %v3732
      %v3771 = vpop.f32.mrf.mxu0
      %v3772 = vadd.f32 0.0, %v3771
      %v3773 = vpop.f32.mrf.mxu0
      %v3774 = vpop.f32.mrf.mxu0
      %v3775 = vpop.f32.mrf.mxu0
      %3776 = vdwg.mxu0
      %v3778 = vsel %vm888, %v3728, 0
      %v3781 = vsel %vm984, %v3730, 0
      %3783 = vmatprep.subr.bf16.mxu0 0
      %3784 = vmatpush1.bf16.msra.mxu0 0
      %3785 = vmatprep.subr.bf16.mxu0 0
      %3786 = vmatpush1.bf16.msra.mxu0 0
      %3787 = vmatprep.subr.bf16.mxu0 0
      %3788 = vmatpush1.bf16.msra.mxu0 0
      %3789 = vmatprep.subr.bf16.mxu0 0
      %3790 = vmatpush1.bf16.msra.mxu0 0
      %3791 = vmatprep.subr.bf16.mxu0 0
      %3792 = vmatpush1.bf16.msra.mxu0 0
      %3793 = vmatprep.subr.bf16.mxu0 0
      %3794 = vmatpush1.bf16.msra.mxu0 0
      %3795 = vmatprep.subr.bf16.mxu0 0
      %3796 = vmatpush1.bf16.msra.mxu0 0
      %3797 = vmatprep.subr.bf16.mxu0 0
      %3798 = vmatpush1.bf16.msra.mxu0 %v3781
      %3799 = vmatprep.subr.bf16.mxu0 0
      %3800 = vmatpush2.bf16.msra.mxu0 0
      %3801 = vmatprep.subr.bf16.mxu0 0
      %3802 = vmatpush2.bf16.msra.mxu0 0
      %3803 = vmatprep.subr.bf16.mxu0 0
      %3804 = vmatpush2.bf16.msra.mxu0 0
      %3805 = vmatprep.subr.bf16.mxu0 0
      %3806 = vmatpush2.bf16.msra.mxu0 0
      %3807 = vmatprep.subr.bf16.mxu0 0
      %3808 = vmatpush2.bf16.msra.mxu0 0
      %3809 = vmatprep.subr.bf16.mxu0 0
      %3810 = vmatpush2.bf16.msra.mxu0 0
      %3811 = vmatprep.subr.bf16.mxu0 0
      %3812 = vmatpush2.bf16.msra.mxu0 0
      %3813 = vmatprep.subr.bf16.mxu0 0
      %3814 = vmatpush2.bf16.msra.mxu0 0
      %3815 = vmatprep.mubr.bf16.mxu0 0
      %3816 = vmatmul.mubr.bf16.gmra.mxu0 %v3778
      %v3817 = vpop.f32.mrf.mxu0
      %v3818 = vadd.f32 0.0, %v3817
      %v3819 = vpop.f32.mrf.mxu0
      %v3820 = vpop.f32.mrf.mxu0
      %v3821 = vpop.f32.mrf.mxu0
      %3822 = vdwg.mxu0
      %v3823 = vpack.c.bf16 %v3720, %v3720
      %v3824 = vpack.c.bf16 %v3724, %v3724
      %3826 = vrot.lane.b32.xlu0 %v3729, 112
      %v3827 = vpop.permute.xlu0 %3826
      %v3829 = vsel %vm888, %v3823, 0
      %v3832 = vsel %vm984, %v3827, 0
      %3834 = vmatprep.subr.bf16.mxu0 0
      %3835 = vmatpush1.bf16.msra.mxu0 0
      %3836 = vmatprep.subr.bf16.mxu0 0
      %3837 = vmatpush1.bf16.msra.mxu0 0
      %3838 = vmatprep.subr.bf16.mxu0 0
      %3839 = vmatpush1.bf16.msra.mxu0 0
      %3840 = vmatprep.subr.bf16.mxu0 0
      %3841 = vmatpush1.bf16.msra.mxu0 0
      %3842 = vmatprep.subr.bf16.mxu0 0
      %3843 = vmatpush1.bf16.msra.mxu0 0
      %3844 = vmatprep.subr.bf16.mxu0 0
      %3845 = vmatpush1.bf16.msra.mxu0 0
      %3846 = vmatprep.subr.bf16.mxu0 0
      %3847 = vmatpush1.bf16.msra.mxu0 0
      %3848 = vmatprep.subr.bf16.mxu0 0
      %3849 = vmatpush1.bf16.msra.mxu0 %v3832
      %3850 = vmatprep.subr.bf16.mxu0 0
      %3851 = vmatpush2.bf16.msra.mxu0 0
      %3852 = vmatprep.subr.bf16.mxu0 0
      %3853 = vmatpush2.bf16.msra.mxu0 0
      %3854 = vmatprep.subr.bf16.mxu0 0
      %3855 = vmatpush2.bf16.msra.mxu0 0
      %3856 = vmatprep.subr.bf16.mxu0 0
      %3857 = vmatpush2.bf16.msra.mxu0 0
      %3858 = vmatprep.subr.bf16.mxu0 0
      %3859 = vmatpush2.bf16.msra.mxu0 0
      %3860 = vmatprep.subr.bf16.mxu0 0
      %3861 = vmatpush2.bf16.msra.mxu0 0
      %3862 = vmatprep.subr.bf16.mxu0 0
      %3863 = vmatpush2.bf16.msra.mxu0 0
      %3864 = vmatprep.subr.bf16.mxu0 0
      %3865 = vmatpush2.bf16.msra.mxu0 0
      %3866 = vmatprep.mubr.bf16.mxu0 0
      %3867 = vmatmul.mubr.bf16.gmra.mxu0 %v3829
      %v3868 = vpop.f32.mrf.mxu0
      %v3869 = vadd.f32 0.0, %v3868
      %v3870 = vpop.f32.mrf.mxu0
      %v3871 = vpop.f32.mrf.mxu0
      %v3872 = vpop.f32.mrf.mxu0
      %3873 = vdwg.mxu0
      %3875 = vrot.lane.b32.xlu0 %v3730, 112
      %v3876 = vpop.permute.xlu0 %3875
      %v3878 = vsel %vm888, %v3824, 0
      %v3881 = vsel %vm984, %v3876, 0
      %3883 = vmatprep.subr.bf16.mxu0 0
      %3884 = vmatpush1.bf16.msra.mxu0 0
      %3885 = vmatprep.subr.bf16.mxu0 0
      %3886 = vmatpush1.bf16.msra.mxu0 0
      %3887 = vmatprep.subr.bf16.mxu0 0
      %3888 = vmatpush1.bf16.msra.mxu0 0
      %3889 = vmatprep.subr.bf16.mxu0 0
      %3890 = vmatpush1.bf16.msra.mxu0 0
      %3891 = vmatprep.subr.bf16.mxu0 0
      %3892 = vmatpush1.bf16.msra.mxu0 0
      %3893 = vmatprep.subr.bf16.mxu0 0
      %3894 = vmatpush1.bf16.msra.mxu0 0
      %3895 = vmatprep.subr.bf16.mxu0 0
      %3896 = vmatpush1.bf16.msra.mxu0 0
      %3897 = vmatprep.subr.bf16.mxu0 0
      %3898 = vmatpush1.bf16.msra.mxu0 %v3881
      %3899 = vmatprep.subr.bf16.mxu0 0
      %3900 = vmatpush2.bf16.msra.mxu0 0
      %3901 = vmatprep.subr.bf16.mxu0 0
      %3902 = vmatpush2.bf16.msra.mxu0 0
      %3903 = vmatprep.subr.bf16.mxu0 0
      %3904 = vmatpush2.bf16.msra.mxu0 0
      %3905 = vmatprep.subr.bf16.mxu0 0
      %3906 = vmatpush2.bf16.msra.mxu0 0
      %3907 = vmatprep.subr.bf16.mxu0 0
      %3908 = vmatpush2.bf16.msra.mxu0 0
      %3909 = vmatprep.subr.bf16.mxu0 0
      %3910 = vmatpush2.bf16.msra.mxu0 0
      %3911 = vmatprep.subr.bf16.mxu0 0
      %3912 = vmatpush2.bf16.msra.mxu0 0
      %3913 = vmatprep.subr.bf16.mxu0 0
      %3914 = vmatpush2.bf16.msra.mxu0 0
      %3915 = vmatprep.mubr.bf16.mxu0 0
      %3916 = vmatmul.mubr.bf16.gmra.mxu0 %v3878
      %v3917 = vpop.f32.mrf.mxu0
      %v3918 = vadd.f32 0.0, %v3917
      %v3919 = vpop.f32.mrf.mxu0
      %v3920 = vpop.f32.mrf.mxu0
      %v3921 = vpop.f32.mrf.mxu0
      %3922 = vdwg.mxu0
      %v3923 = vpack.c.bf16 %v3721, %v3721
      %v3924 = vpack.c.bf16 %v3725, %v3725
      %3925 = vrot.lane.b32.xlu0 %v3729, 96
      %v3926 = vpop.permute.xlu0 %3925
      %v3928 = vsel %vm888, %v3923, 0
      %v3931 = vsel %vm984, %v3926, 0
      %3933 = vmatprep.subr.bf16.mxu0 0
      %3934 = vmatpush1.bf16.msra.mxu0 0
      %3935 = vmatprep.subr.bf16.mxu0 0
      %3936 = vmatpush1.bf16.msra.mxu0 0
      %3937 = vmatprep.subr.bf16.mxu0 0
      %3938 = vmatpush1.bf16.msra.mxu0 0
      %3939 = vmatprep.subr.bf16.mxu0 0
      %3940 = vmatpush1.bf16.msra.mxu0 0
      %3941 = vmatprep.subr.bf16.mxu0 0
      %3942 = vmatpush1.bf16.msra.mxu0 0
      %3943 = vmatprep.subr.bf16.mxu0 0
      %3944 = vmatpush1.bf16.msra.mxu0 0
      %3945 = vmatprep.subr.bf16.mxu0 0
      %3946 = vmatpush1.bf16.msra.mxu0 0
      %3947 = vmatprep.subr.bf16.mxu0 0
      %3948 = vmatpush1.bf16.msra.mxu0 %v3931
      %3949 = vmatprep.subr.bf16.mxu0 0
      %3950 = vmatpush2.bf16.msra.mxu0 0
      %3951 = vmatprep.subr.bf16.mxu0 0
      %3952 = vmatpush2.bf16.msra.mxu0 0
      %3953 = vmatprep.subr.bf16.mxu0 0
      %3954 = vmatpush2.bf16.msra.mxu0 0
      %3955 = vmatprep.subr.bf16.mxu0 0
      %3956 = vmatpush2.bf16.msra.mxu0 0
      %3957 = vmatprep.subr.bf16.mxu0 0
      %3958 = vmatpush2.bf16.msra.mxu0 0
      %3959 = vmatprep.subr.bf16.mxu0 0
      %3960 = vmatpush2.bf16.msra.mxu0 0
      %3961 = vmatprep.subr.bf16.mxu0 0
      %3962 = vmatpush2.bf16.msra.mxu0 0
      %3963 = vmatprep.subr.bf16.mxu0 0
      %3964 = vmatpush2.bf16.msra.mxu0 0
      %3965 = vmatprep.mubr.bf16.mxu0 0
      %3966 = vmatmul.mubr.bf16.gmra.mxu0 %v3928
      %v3967 = vpop.f32.mrf.mxu0
      %v3968 = vadd.f32 0.0, %v3967
      %v3969 = vpop.f32.mrf.mxu0
      %v3970 = vpop.f32.mrf.mxu0
      %v3971 = vpop.f32.mrf.mxu0
      %3972 = vdwg.mxu0
      %3973 = vrot.lane.b32.xlu0 %v3730, 96
      %v3974 = vpop.permute.xlu0 %3973
      %v3976 = vsel %vm888, %v3924, 0
      %v3979 = vsel %vm984, %v3974, 0
      %3981 = vmatprep.subr.bf16.mxu0 0
      %3982 = vmatpush1.bf16.msra.mxu0 0
      %3983 = vmatprep.subr.bf16.mxu0 0
      %3984 = vmatpush1.bf16.msra.mxu0 0
      %3985 = vmatprep.subr.bf16.mxu0 0
      %3986 = vmatpush1.bf16.msra.mxu0 0
      %3987 = vmatprep.subr.bf16.mxu0 0
      %3988 = vmatpush1.bf16.msra.mxu0 0
      %3989 = vmatprep.subr.bf16.mxu0 0
      %3990 = vmatpush1.bf16.msra.mxu0 0
      %3991 = vmatprep.subr.bf16.mxu0 0
      %3992 = vmatpush1.bf16.msra.mxu0 0
      %3993 = vmatprep.subr.bf16.mxu0 0
      %3994 = vmatpush1.bf16.msra.mxu0 0
      %3995 = vmatprep.subr.bf16.mxu0 0
      %3996 = vmatpush1.bf16.msra.mxu0 %v3979
      %3997 = vmatprep.subr.bf16.mxu0 0
      %3998 = vmatpush2.bf16.msra.mxu0 0
      %3999 = vmatprep.subr.bf16.mxu0 0
      %4000 = vmatpush2.bf16.msra.mxu0 0
      %4001 = vmatprep.subr.bf16.mxu0 0
      %4002 = vmatpush2.bf16.msra.mxu0 0
      %4003 = vmatprep.subr.bf16.mxu0 0
      %4004 = vmatpush2.bf16.msra.mxu0 0
      %4005 = vmatprep.subr.bf16.mxu0 0
      %4006 = vmatpush2.bf16.msra.mxu0 0
      %4007 = vmatprep.subr.bf16.mxu0 0
      %4008 = vmatpush2.bf16.msra.mxu0 0
      %4009 = vmatprep.subr.bf16.mxu0 0
      %4010 = vmatpush2.bf16.msra.mxu0 0
      %4011 = vmatprep.subr.bf16.mxu0 0
      %4012 = vmatpush2.bf16.msra.mxu0 0
      %4013 = vmatprep.mubr.bf16.mxu0 0
      %4014 = vmatmul.mubr.bf16.gmra.mxu0 %v3976
      %v4015 = vpop.f32.mrf.mxu0
      %v4016 = vadd.f32 0.0, %v4015
      %v4017 = vpop.f32.mrf.mxu0
      %v4018 = vpop.f32.mrf.mxu0
      %v4019 = vpop.f32.mrf.mxu0
      %4020 = vdwg.mxu0
      %v4021 = vpack.c.bf16 %v3722, %v3722
      %v4022 = vpack.c.bf16 %v3726, %v3726
      %4023 = vrot.lane.b32.xlu0 %v3729, 80
      %v4024 = vpop.permute.xlu0 %4023
      %v4026 = vsel %vm888, %v4021, 0
      %v4029 = vsel %vm984, %v4024, 0
      %4031 = vmatprep.subr.bf16.mxu0 0
      %4032 = vmatpush1.bf16.msra.mxu0 0
      %4033 = vmatprep.subr.bf16.mxu0 0
      %4034 = vmatpush1.bf16.msra.mxu0 0
      %4035 = vmatprep.subr.bf16.mxu0 0
      %4036 = vmatpush1.bf16.msra.mxu0 0
      %4037 = vmatprep.subr.bf16.mxu0 0
      %4038 = vmatpush1.bf16.msra.mxu0 0
      %4039 = vmatprep.subr.bf16.mxu0 0
      %4040 = vmatpush1.bf16.msra.mxu0 0
      %4041 = vmatprep.subr.bf16.mxu0 0
      %4042 = vmatpush1.bf16.msra.mxu0 0
      %4043 = vmatprep.subr.bf16.mxu0 0
      %4044 = vmatpush1.bf16.msra.mxu0 0
      %4045 = vmatprep.subr.bf16.mxu0 0
      %4046 = vmatpush1.bf16.msra.mxu0 %v4029
      %4047 = vmatprep.subr.bf16.mxu0 0
      %4048 = vmatpush2.bf16.msra.mxu0 0
      %4049 = vmatprep.subr.bf16.mxu0 0
      %4050 = vmatpush2.bf16.msra.mxu0 0
      %4051 = vmatprep.subr.bf16.mxu0 0
      %4052 = vmatpush2.bf16.msra.mxu0 0
      %4053 = vmatprep.subr.bf16.mxu0 0
      %4054 = vmatpush2.bf16.msra.mxu0 0
      %4055 = vmatprep.subr.bf16.mxu0 0
      %4056 = vmatpush2.bf16.msra.mxu0 0
      %4057 = vmatprep.subr.bf16.mxu0 0
      %4058 = vmatpush2.bf16.msra.mxu0 0
      %4059 = vmatprep.subr.bf16.mxu0 0
      %4060 = vmatpush2.bf16.msra.mxu0 0
      %4061 = vmatprep.subr.bf16.mxu0 0
      %4062 = vmatpush2.bf16.msra.mxu0 0
      %4063 = vmatprep.mubr.bf16.mxu0 0
      %4064 = vmatmul.mubr.bf16.gmra.mxu0 %v4026
      %v4065 = vpop.f32.mrf.mxu0
      %v4066 = vadd.f32 0.0, %v4065
      %v4067 = vpop.f32.mrf.mxu0
      %v4068 = vpop.f32.mrf.mxu0
      %v4069 = vpop.f32.mrf.mxu0
      %4070 = vdwg.mxu0
      %4071 = vrot.lane.b32.xlu0 %v3730, 80
      %v4072 = vpop.permute.xlu0 %4071
      %v4074 = vsel %vm888, %v4022, 0
      %v4077 = vsel %vm984, %v4072, 0
      %4079 = vmatprep.subr.bf16.mxu0 0
      %4080 = vmatpush1.bf16.msra.mxu0 0
      %4081 = vmatprep.subr.bf16.mxu0 0
      %4082 = vmatpush1.bf16.msra.mxu0 0
      %4083 = vmatprep.subr.bf16.mxu0 0
      %4084 = vmatpush1.bf16.msra.mxu0 0
      %4085 = vmatprep.subr.bf16.mxu0 0
      %4086 = vmatpush1.bf16.msra.mxu0 0
      %4087 = vmatprep.subr.bf16.mxu0 0
      %4088 = vmatpush1.bf16.msra.mxu0 0
      %4089 = vmatprep.subr.bf16.mxu0 0
      %4090 = vmatpush1.bf16.msra.mxu0 0
      %4091 = vmatprep.subr.bf16.mxu0 0
      %4092 = vmatpush1.bf16.msra.mxu0 0
      %4093 = vmatprep.subr.bf16.mxu0 0
      %4094 = vmatpush1.bf16.msra.mxu0 %v4077
      %4095 = vmatprep.subr.bf16.mxu0 0
      %4096 = vmatpush2.bf16.msra.mxu0 0
      %4097 = vmatprep.subr.bf16.mxu0 0
      %4098 = vmatpush2.bf16.msra.mxu0 0
      %4099 = vmatprep.subr.bf16.mxu0 0
      %4100 = vmatpush2.bf16.msra.mxu0 0
      %4101 = vmatprep.subr.bf16.mxu0 0
      %4102 = vmatpush2.bf16.msra.mxu0 0
      %4103 = vmatprep.subr.bf16.mxu0 0
      %4104 = vmatpush2.bf16.msra.mxu0 0
      %4105 = vmatprep.subr.bf16.mxu0 0
      %4106 = vmatpush2.bf16.msra.mxu0 0
      %4107 = vmatprep.subr.bf16.mxu0 0
      %4108 = vmatpush2.bf16.msra.mxu0 0
      %4109 = vmatprep.subr.bf16.mxu0 0
      %4110 = vmatpush2.bf16.msra.mxu0 0
      %4111 = vmatprep.mubr.bf16.mxu0 0
      %4112 = vmatmul.mubr.bf16.gmra.mxu0 %v4074
      %v4113 = vpop.f32.mrf.mxu0
      %v4114 = vadd.f32 0.0, %v4113
      %v4115 = vpop.f32.mrf.mxu0
      %v4116 = vpop.f32.mrf.mxu0
      %v4117 = vpop.f32.mrf.mxu0
      %4118 = vdwg.mxu0
      %4121 = vrot.lane.b32.xlu0 %v3869, 16
      %v4122 = vpop.permute.xlu0 %4121
      %4123 = vrot.lane.b32.xlu0 %v3918, 16
      %v4124 = vpop.permute.xlu0 %4123
      %4129 = vrot.lane.b32.xlu0 %v3968, 32
      %v4130 = vpop.permute.xlu0 %4129
      %4131 = vrot.lane.b32.xlu0 %v4016, 32
      %v4132 = vpop.permute.xlu0 %4131
      %4137 = vrot.lane.b32.xlu0 %v4066, 48
      %v4138 = vpop.permute.xlu0 %4137
      %4139 = vrot.lane.b32.xlu0 %v4114, 48
      %v4140 = vpop.permute.xlu0 %4139
      %v4143 = vsel %vm318, %v3772, %v4122
      %v4144 = vsel %vm318, %v3818, %v4124
      %v4145 = vsel %vm1396, %v4143, %v4130
      %v4146 = vsel %vm1396, %v4144, %v4132
      %v4147 = vsel %vm1399, %v4145, %v4138
      %v4148 = vsel %vm1399, %v4146, %v4140
      %v4149 = vpack.c.bf16 %v4148, %v4147
      %v4151 = vlaneseq
      %v4152 = vshrl.u32 %v4151, 7
      %v4153 = vsub.s32 0, %v4152
      %v4154 = vrot.slane %v3136, %v4153
      %v4164 = vunpack.c.l.b16 %v3125
      %v4165 = vunpack.c.l.b16 %v3126
      %v4166 = vunpack.c.l.b16 %v3127
      %v4167 = vunpack.c.l.b16 %v3128
      %v4168 = vunpack.c.l.b16 %v3129
      %v4169 = vunpack.c.l.b16 %v3130
      %v4170 = vunpack.c.l.b16 %v3131
      %v4171 = vunpack.c.l.b16 %v3132
      %v4172 = vpack.c.b16 %v4165, %v4164
      %v4173 = vpack.c.b16 %v4167, %v4166
      %v4174 = vpack.c.b16 %v4169, %v4168
      %v4175 = vpack.c.b16 %v4171, %v4170
      %v4181 = vsel %vm441, %v4149, 0
      %4183 = vmatprep.subr.bf16.mxu0 0
      %4184 = vmatpush1.bf16.msra.mxu0 0
      %4185 = vmatprep.subr.bf16.mxu0 0
      %4186 = vmatpush1.bf16.msra.mxu0 0
      %4187 = vmatprep.subr.bf16.mxu0 0
      %4188 = vmatpush1.bf16.msra.mxu0 0
      %4189 = vmatprep.subr.bf16.mxu0 0
      %4190 = vmatpush1.bf16.msra.mxu0 0
      %4191 = vmatprep.subr.bf16.mxu0 0
      %4192 = vmatpush1.bf16.msra.mxu0 %v4175
      %4193 = vmatprep.subr.bf16.mxu0 0
      %4194 = vmatpush1.bf16.msra.mxu0 %v4174
      %4195 = vmatprep.subr.bf16.mxu0 0
      %4196 = vmatpush1.bf16.msra.mxu0 %v4173
      %4197 = vmatprep.subr.bf16.mxu0 0
      %4198 = vmatpush1.bf16.msra.mxu0 %v4172
      %4199 = vmatprep.subr.bf16.mxu0 0
      %4200 = vmatpush2.bf16.msra.mxu0 0
      %4201 = vmatprep.subr.bf16.mxu0 0
      %4202 = vmatpush2.bf16.msra.mxu0 0
      %4203 = vmatprep.subr.bf16.mxu0 0
      %4204 = vmatpush2.bf16.msra.mxu0 0
      %4205 = vmatprep.subr.bf16.mxu0 0
      %4206 = vmatpush2.bf16.msra.mxu0 0
      %4207 = vmatprep.subr.bf16.mxu0 0
      %4208 = vmatpush2.bf16.msra.mxu0 0
      %4209 = vmatprep.subr.bf16.mxu0 0
      %4210 = vmatpush2.bf16.msra.mxu0 0
      %4211 = vmatprep.subr.bf16.mxu0 0
      %4212 = vmatpush2.bf16.msra.mxu0 0
      %4213 = vmatprep.subr.bf16.mxu0 0
      %4214 = vmatpush2.bf16.msra.mxu0 0
      %4215 = vmatprep.mubr.bf16.mxu0 0
      %4216 = vmatmul.mubr.bf16.gmra.mxu0 %v4181
      %v4217 = vpop.f32.mrf.mxu0
      %v4218 = vadd.f32 %v4154, %v4217
      %v4219 = vpop.f32.mrf.mxu0
      %v4220 = vpop.f32.mrf.mxu0
      %v4221 = vadd.f32 %v4154, %v4220
      %v4222 = vpop.f32.mrf.mxu0
      %4223 = vdwg.mxu0
      %v4224 = vadd.f32 %v3114, %v4218
      %v4225 = vadd.f32 %v3115, %v4221
      %v4226 = vsel %vm441, %v4224, 0.0
      %4227 = vadd.xlane.f32.xlu0 %v4226
      %v4228 = vpop.xlane.xlu0 %4227
      %v4229 = vsel %vm441, %v4225, 0.0
      %4230 = vadd.xlane.f32.xlu0 %v4229
      %v4231 = vpop.xlane.xlu0 %4230
      %v4232 = vmul.f32 %v4228, %v1485
      %v4233 = vmul.f32 %v4231, %v1485
      %v4234 = vsub.f32 %v4224, %v4232
      %v4235 = vsub.f32 %v4225, %v4233
      %v4236 = vmul.f32 %v4234, %v4234
      %v4237 = vmul.f32 %v4235, %v4235
      %v4238 = vsel %vm441, %v4236, 0.0
      %4239 = vadd.xlane.f32.xlu0 %v4238
      %v4240 = vpop.xlane.xlu0 %4239
      %v4241 = vsel %vm441, %v4237, 0.0
      %4242 = vadd.xlane.f32.xlu0 %v4241
      %v4243 = vpop.xlane.xlu0 %4242
      %v4244 = vmul.f32 %v4240, %v1485
      %v4245 = vmul.f32 %v4243, %v1485
      %v4246 = vadd.f32 %v4244, 1e-05
      %v4247 = vadd.f32 %v4245, 1e-05
      %v4248 = vrsqrt.pop %v4246
      %v4249 = vrsqrt.pop %v4247
      %v4250 = vmul.f32 %v4234, %v4248
      %v4251 = vmul.f32 %v4235, %v4249
      %v4253 = vlaneseq
      %v4254 = vshrl.u32 %v4253, 7
      %v4255 = vsub.s32 0, %v4254
      %v4256 = vrot.slane %v3138, %v4255
      %v4258 = vmul.f32 %v4250, %v4256
      %v4259 = vmul.f32 %v4251, %v4256
      %v4261 = vlaneseq
      %v4262 = vshrl.u32 %v4261, 7
      %v4263 = vsub.s32 0, %v4262
      %v4264 = vrot.slane %v3140, %v4263
      %v4266 = vadd.f32 %v4258, %v4264
      %v4267 = vadd.f32 %v4259, %v4264
      %v4268 = vpack.c.bf16 %v4266, %v4266
      %v4269 = vpack.c.bf16 %v4267, %v4267
      %v4272 = vunpack.c.l.b16 %v4268
      %v4273 = vunpack.c.l.b16 %v4269
      %v4274 = vrot.slane %v4272, 7
      %v4275 = vrot.slane %v4273, 6
      %vm4276 = vcmask 1041409
      %v4277 = vsel %vm4276, %v4275, %v4274
      %v4278 = vpack.c.b16 %v4277, %v4277
      %v4280 = vsel %vm441, %v4278, 0
      %4282 = vmatprep.subr.bf16.mxu0 0
      %4283 = vmatpush1.bf16.msra.mxu0 0
      %4284 = vmatprep.subr.bf16.mxu0 0
      %4285 = vmatpush1.bf16.msra.mxu0 0
      %4286 = vmatprep.subr.bf16.mxu0 0
      %4287 = vmatpush1.bf16.msra.mxu0 0
      %4288 = vmatprep.subr.bf16.mxu0 0
      %4289 = vmatpush1.bf16.msra.mxu0 0
      %4290 = vmatprep.subr.bf16.mxu0 0
      %4291 = vmatpush1.bf16.msra.mxu0 %v1548
      %4292 = vmatprep.subr.bf16.mxu0 0
      %4293 = vmatpush1.bf16.msra.mxu0 %v1547
      %4294 = vmatprep.subr.bf16.mxu0 0
      %4295 = vmatpush1.bf16.msra.mxu0 %v1546
      %4296 = vmatprep.subr.bf16.mxu0 0
      %4297 = vmatpush1.bf16.msra.mxu0 %v1545
      %4298 = vmatprep.subr.bf16.mxu0 0
      %4299 = vmatpush2.bf16.msra.mxu0 0
      %4300 = vmatprep.subr.bf16.mxu0 0
      %4301 = vmatpush2.bf16.msra.mxu0 0
      %4302 = vmatprep.subr.bf16.mxu0 0
      %4303 = vmatpush2.bf16.msra.mxu0 0
      %4304 = vmatprep.subr.bf16.mxu0 0
      %4305 = vmatpush2.bf16.msra.mxu0 0
      %4306 = vmatprep.subr.bf16.mxu0 0
      %4307 = vmatpush2.bf16.msra.mxu0 0
      %4308 = vmatprep.subr.bf16.mxu0 0
      %4309 = vmatpush2.bf16.msra.mxu0 0
      %4310 = vmatprep.subr.bf16.mxu0 0
      %4311 = vmatpush2.bf16.msra.mxu0 0
      %4312 = vmatprep.subr.bf16.mxu0 0
      %4313 = vmatpush2.bf16.msra.mxu0 0
      %4314 = vmatprep.mubr.bf16.mxu0 0
      %4315 = vmatmul.mubr.bf16.gmra.mxu0 %v4280
      %v4316 = vpop.f32.mrf.mxu0
      %v4317 = vadd.f32 %v1527, %v4316
      %v4318 = vpop.f32.mrf.mxu0
      %v4319 = vpop.f32.mrf.mxu0
      %v4320 = vpop.f32.mrf.mxu0
      %4321 = vdwg.mxu0
      %v4322 = vmul.f32 %v4317, 0.5
      %v4323 = vmul.f32 %v4317, 0.70710677
      %v4324 = vand.u32 2147483647, %v4323
      %v4325 = vmul.f32 %v4324, 0.3275911
      %v4326 = vadd.f32 %v4325, 1.0
      %v4327 = vrcp.pop %v4326
      %v4328 = vmul.f32 1.0, %v4327
      %v4329 = vmul.f32 %v4328, 1.0614054
      %v4330 = vadd.f32 %v4329, -1.4531521
      %v4331 = vmul.f32 %v4330, %v4328
      %v4332 = vadd.f32 %v4331, 1.4214138
      %v4333 = vmul.f32 %v4332, %v4328
      %v4334 = vadd.f32 %v4333, -0.28449672
      %v4335 = vmul.f32 %v4334, %v4328
      %v4336 = vadd.f32 %v4335, 0.2548296
      %v4337 = vmul.f32 %v4336, %v4328
      %v4338 = vsub.f32 0.0, %v4324
      %v4339 = vmul.f32 %v4338, %v4324
      %v4340 = vmul.f32 %v4339, 1.442695
      %v4341 = vpow.pop %v4340
      %v4342 = vmul.f32 %v4337, %v4341
      %v4343 = vsub.f32 1.0, %v4342
      %vm4344 = vcmp.ge.f32.partialorder %v4323, 0.0
      %v4345 = vsub.f32 0.0, %v4343
      %v4346 = vsel %vm4344, %v4343, %v4345
      %v4347 = vadd.f32 %v4346, 1.0
      %v4348 = vmul.f32 %v4322, %v4347
      %v4349 = vpack.c.bf16 %v4348, %v4348
      %4350 = vmatprep.subr.bf16.mxu0 0
      %4351 = vmatpush1.bf16.msra.mxu0 %v1697
      %4352 = vmatprep.subr.bf16.mxu0 0
      %4353 = vmatpush1.bf16.msra.mxu0 %v1696
      %4354 = vmatprep.subr.bf16.mxu0 0
      %4355 = vmatpush1.bf16.msra.mxu0 %v1695
      %4356 = vmatprep.subr.bf16.mxu0 0
      %4357 = vmatpush1.bf16.msra.mxu0 %v1694
      %4358 = vmatprep.subr.bf16.mxu0 0
      %4359 = vmatpush1.bf16.msra.mxu0 %v1693
      %4360 = vmatprep.subr.bf16.mxu0 0
      %4361 = vmatpush1.bf16.msra.mxu0 %v1692
      %4362 = vmatprep.subr.bf16.mxu0 0
      %4363 = vmatpush1.bf16.msra.mxu0 %v1691
      %4364 = vmatprep.subr.bf16.mxu0 0
      %4365 = vmatpush1.bf16.msra.mxu0 %v1690
      %4366 = vmatprep.subr.bf16.mxu0 0
      %4367 = vmatpush2.bf16.msra.mxu0 0
      %4368 = vmatprep.subr.bf16.mxu0 0
      %4369 = vmatpush2.bf16.msra.mxu0 0
      %4370 = vmatprep.subr.bf16.mxu0 0
      %4371 = vmatpush2.bf16.msra.mxu0 0
      %4372 = vmatprep.subr.bf16.mxu0 0
      %4373 = vmatpush2.bf16.msra.mxu0 0
      %4374 = vmatprep.subr.bf16.mxu0 0
      %4375 = vmatpush2.bf16.msra.mxu0 0
      %4376 = vmatprep.subr.bf16.mxu0 0
      %4377 = vmatpush2.bf16.msra.mxu0 0
      %4378 = vmatprep.subr.bf16.mxu0 0
      %4379 = vmatpush2.bf16.msra.mxu0 0
      %4380 = vmatprep.subr.bf16.mxu0 0
      %4381 = vmatpush2.bf16.msra.mxu0 0
      %4382 = vmatprep.mubr.bf16.mxu0 0
      %4383 = vmatmul.mubr.bf16.gmra.mxu0 %v4349
      %v4384 = vpop.f32.mrf.mxu0
      %v4385 = vadd.f32 %v1656, %v4384
      %v4386 = vpop.f32.mrf.mxu0
      %v4387 = vpop.f32.mrf.mxu0
      %v4388 = vpop.f32.mrf.mxu0
      %4389 = vdwg.mxu0
      %v4391 = vrot.slane %v4385, 1
      %v4392 = vrot.slane %v4385, 2
      %v4395 = vadd.f32 %v4266, %v4391
      %v4396 = vadd.f32 %v4267, %v4392
      %v4399 = vrot.slane %v4396, 7
      %vm4402 = vcmask 523271
      %v4403 = vsel %vm4402, %v4395, 0.0
      %4404 = vadd.xlane.f32.xlu0 %v4403
      %v4405 = vpop.xlane.xlu0 %4404
      %vm4406 = vcmask 516096
      %v4407 = vsel %vm4406, %v4399, 0.0
      %4408 = vadd.xlane.f32.xlu0 %v4407
      %v4409 = vpop.xlane.xlu0 %4408
      %v4410 = vmul.f32 %v4405, %v1485
      %v4411 = vmul.f32 %v4409, %v1485
      %v4414 = vrot.slane %v4411, 1
      %v4417 = vsub.f32 %v4395, %v4410
      %v4418 = vsub.f32 %v4396, %v4414
      %v4419 = vmul.f32 %v4417, %v4417
      %v4420 = vmul.f32 %v4418, %v4418
      %v4423 = vrot.slane %v4420, 7
      %v4426 = vsel %vm4402, %v4419, 0.0
      %4427 = vadd.xlane.f32.xlu0 %v4426
      %v4428 = vpop.xlane.xlu0 %4427
      %v4429 = vsel %vm4406, %v4423, 0.0
      %4430 = vadd.xlane.f32.xlu0 %v4429
      %v4431 = vpop.xlane.xlu0 %4430
      %v4432 = vmul.f32 %v4428, %v1485
      %v4433 = vmul.f32 %v4431, %v1485
      %v4434 = vadd.f32 %v4432, 1e-05
      %v4435 = vadd.f32 %v4433, 1e-05
      %v4436 = vrsqrt.pop %v4434
      %v4437 = vrsqrt.pop %v4435
      %v4440 = vrot.slane %v4437, 1
      %v4443 = vmul.f32 %v4417, %v4436
      %v4444 = vmul.f32 %v4418, %v4440
      %v4445 = vmul.f32 %v4443, %v1779
      %v4446 = vmul.f32 %v4444, %v1779
      %v4447 = vadd.f32 %v4445, %v1787
      %v4448 = vadd.f32 %v4446, %v1787
      %v4449 = vpack.c.bf16 %v4447, %v4447
      %v4450 = vpack.c.bf16 %v4448, %v4448
      %v4452 = vlaneseq
      %v4453 = vshrl.u32 %v4452, 7
      %v4454 = vsub.s32 0, %v4453
      %v4455 = vrot.slane %v298, %v4454
      %v4459 = vunpack.c.l.b16 %v4449
      %v4460 = vunpack.c.l.b16 %v4450
      %v4461 = vrot.slane %v4459, 7
      %v4462 = vrot.slane %v4460, 6
      %v4463 = vsel %vm4276, %v4462, %v4461
      %v4464 = vpack.c.b16 %v4463, %v4463
      %v4473 = vunpack.c.l.b16 %v281
      %v4474 = vunpack.c.l.b16 %v282
      %v4475 = vunpack.c.l.b16 %v283
      %v4476 = vunpack.c.l.b16 %v284
      %v4477 = vunpack.c.l.b16 %v285
      %v4478 = vunpack.c.l.b16 %v286
      %v4479 = vunpack.c.l.b16 %v287
      %v4480 = vunpack.c.l.b16 %v288
      %v4481 = vpack.c.b16 %v4474, %v4473
      %v4482 = vpack.c.b16 %v4476, %v4475
      %v4483 = vpack.c.b16 %v4478, %v4477
      %v4484 = vpack.c.b16 %v4480, %v4479
      %v4490 = vsel %vm441, %v4464, 0
      %4492 = vmatprep.subr.bf16.mxu0 0
      %4493 = vmatpush1.bf16.msra.mxu0 0
      %4494 = vmatprep.subr.bf16.mxu0 0
      %4495 = vmatpush1.bf16.msra.mxu0 0
      %4496 = vmatprep.subr.bf16.mxu0 0
      %4497 = vmatpush1.bf16.msra.mxu0 0
      %4498 = vmatprep.subr.bf16.mxu0 0
      %4499 = vmatpush1.bf16.msra.mxu0 0
      %4500 = vmatprep.subr.bf16.mxu0 0
      %4501 = vmatpush1.bf16.msra.mxu0 %v4484
      %4502 = vmatprep.subr.bf16.mxu0 0
      %4503 = vmatpush1.bf16.msra.mxu0 %v4483
      %4504 = vmatprep.subr.bf16.mxu0 0
      %4505 = vmatpush1.bf16.msra.mxu0 %v4482
      %4506 = vmatprep.subr.bf16.mxu0 0
      %4507 = vmatpush1.bf16.msra.mxu0 %v4481
      %4508 = vmatprep.subr.bf16.mxu0 0
      %4509 = vmatpush2.bf16.msra.mxu0 0
      %4510 = vmatprep.subr.bf16.mxu0 0
      %4511 = vmatpush2.bf16.msra.mxu0 0
      %4512 = vmatprep.subr.bf16.mxu0 0
      %4513 = vmatpush2.bf16.msra.mxu0 0
      %4514 = vmatprep.subr.bf16.mxu0 0
      %4515 = vmatpush2.bf16.msra.mxu0 0
      %4516 = vmatprep.subr.bf16.mxu0 0
      %4517 = vmatpush2.bf16.msra.mxu0 0
      %4518 = vmatprep.subr.bf16.mxu0 0
      %4519 = vmatpush2.bf16.msra.mxu0 0
      %4520 = vmatprep.subr.bf16.mxu0 0
      %4521 = vmatpush2.bf16.msra.mxu0 0
      %4522 = vmatprep.subr.bf16.mxu0 0
      %4523 = vmatpush2.bf16.msra.mxu0 0
      %4524 = vmatprep.mubr.bf16.mxu0 0
      %4525 = vmatmul.mubr.bf16.gmra.mxu0 %v4490
      %v4526 = vpop.f32.mrf.mxu0
      %v4527 = vadd.f32 %v4455, %v4526
      %v4528 = vpop.f32.mrf.mxu0
      %v4529 = vpop.f32.mrf.mxu0
      %v4530 = vpop.f32.mrf.mxu0
      %4531 = vdwg.mxu0
      %v4532 = vmul.f32 %v4527, 0.5
      %v4533 = vmul.f32 %v4527, 0.70710677
      %v4534 = vand.u32 2147483647, %v4533
      %v4535 = vmul.f32 %v4534, 0.3275911
      %v4536 = vadd.f32 %v4535, 1.0
      %v4537 = vrcp.pop %v4536
      %v4538 = vmul.f32 1.0, %v4537
      %v4539 = vmul.f32 %v4538, 1.0614054
      %v4540 = vadd.f32 %v4539, -1.4531521
      %v4541 = vmul.f32 %v4540, %v4538
      %v4542 = vadd.f32 %v4541, 1.4214138
      %v4543 = vmul.f32 %v4542, %v4538
      %v4544 = vadd.f32 %v4543, -0.28449672
      %v4545 = vmul.f32 %v4544, %v4538
      %v4546 = vadd.f32 %v4545, 0.2548296
      %v4547 = vmul.f32 %v4546, %v4538
      %v4548 = vsub.f32 0.0, %v4534
      %v4549 = vmul.f32 %v4548, %v4534
      %v4550 = vmul.f32 %v4549, 1.442695
      %v4551 = vpow.pop %v4550
      %v4552 = vmul.f32 %v4547, %v4551
      %v4553 = vsub.f32 1.0, %v4552
      %vm4554 = vcmp.ge.f32.partialorder %v4533, 0.0
      %v4555 = vsub.f32 0.0, %v4553
      %v4556 = vsel %vm4554, %v4553, %v4555
      %v4557 = vadd.f32 %v4556, 1.0
      %v4558 = vmul.f32 %v4532, %v4557
      %v4560 = vlaneseq
      %v4561 = vshrl.u32 %v4560, 7
      %v4562 = vsub.s32 0, %v4561
      %v4563 = vrot.slane %v300, %v4562
      %v4565 = vmul.f32 %v4558, %v4563
      %vm4566 = vcmask 254976
      %v4567 = vsel %vm4566, %v4565, 0.0
      %4568 = vadd.xlane.f32.xlu0 %v4567
      %v4569 = vpop.xlane.xlu0 %4568
      %v4571 = vlaneseq
      %v4572 = vshrl.u32 %v4571, 7
      %v4573 = vsub.s32 0, %v4572
      %v4574 = vrot.slane %v302, %v4573
      %v4576 = vadd.f32 %v4569, %v4574
      %vm4577 = vcmask 1024
      %4578 = vst.msk [vmem:[%s251] sm:$0x3] %vm4577, %v4576
      %p4579 = scmp.lt.s32.totalorder %s17, 1
      %s4580 = scalar_select %p4579, %s17, 1
      %s4581 = smul.addr %s4580, 2
      %s4582 = scalar_lea.vmem %s6, %s4581
      // Predicated region
      $region45: #{tpu_custom_call.1} parent=43 // pred_check
        %p4583 = pneg %p166
      $region46: #{tpu_custom_call.1} parent=43 // pred_check_branch
        %4585 = sbr.rel (%p4583) target = $region48
      $region47: #{tpu_custom_call.1} parent=43 // pred_region
        _
      $region48: #{tpu_custom_call.1} parent=43 // pred_fallthru
        _
    $region44: #{tpu_custom_call.1} parent=5 // pred_fallthru
      _
    %p4586 = scmp.le.s32.totalorder 2, %s12
    // Predicated region
    $region49: #{tpu_custom_call.1} parent=5 // pred_check
      %p4587 = pneg %p4586
    $region50: #{tpu_custom_call.1} parent=5 // pred_check_branch
      %4589 = sbr.rel (%p4587) target = $region52
    $region51: #{tpu_custom_call.1} parent=5 // pred_region
      %s4590 = ssub.s32 %s12, 2
      // Predicated region
      $region53: #{tpu_custom_call.1} parent=51 // pred_check
        %p4591 = pneg %p172
      $region54: #{tpu_custom_call.1} parent=51 // pred_check_branch
        %4593 = sbr.rel (%p4591) target = $region56
      $region55: #{tpu_custom_call.1} parent=51 // pred_region
        %p4594 = scmp.lt.s32.totalorder %s18, 1
        %s4595 = scalar_select %p4594, %s18, 1
        %s4596 = smul.addr %s4595, 2
        %s4597 = scalar_lea.vmem %s6, %s4596
      $region56: #{tpu_custom_call.1} parent=51 // pred_fallthru
        _
    $region52: #{tpu_custom_call.1} parent=5 // pred_fallthru
      _
  $region6: #{tpu_custom_call.1} parent=0 // loop_footer
    %s16 = sadd.s32 1, %s12
  $region7: #{tpu_custom_call.1} parent=0 // loop_footer_branch
    %11 = sbr.rel target = $region3
  $region8: #{tpu_custom_call.1} parent=0 // loop_exit
    _

</llo_original>
